<compile_context>
chip_gen: v6e
topology: v6e:2x2x1
jax: 0.10.0
libtpu: 0.0.40
codegen_flags: <defaults>
</compile_context>

<pallas_src>
import jax
import jax.numpy as jnp
from jax.experimental import pallas as pl
from jax.experimental.pallas import tpu as pltpu


def _split_kernel(x_ref, boxes_ref, scores_ref, lm_ref):
    """x_ref: (B, tn, C) native-layout tile; outputs written in final layouts."""
    x = x_ref[...]                                   # single full-tile load
    boxes_ref[...] = x[:, :, 0:4]                    # pure copy from resident tile
    lm_ref[...] = x[:, :, 5:15]                      # pure copy from resident tile
    scores_ref[...] = x[:, :, 15:] * x[:, :, 4:5]    # class scores * objectness (VPU)


def _round_up(v: int, m: int) -> int:
    return ((v + m - 1) // m) * m


def deepstream_output(x, *, tile_n: int = 1024):
    """Pallas implementation of DeepStreamOutput.forward.

    Args:
      x: [B, N, C] prediction tensor, C >= 16 (4 box + 1 obj + 10 lm + nc classes).
      tile_n: target anchors per grid step (clamped to VMEM budget / >= 2 steps).
    Returns:
      (boxes [B,N,4], scores [B,N,C-15], landmarks [B,N,10]), all x.dtype.
    """
    B, N, C = x.shape
    assert C >= 16, "expects 4 box + 1 obj + 10 landmarks + >=1 class channels"
    nc = C - 15

    # ---- anchor tiling ------------------------------------------------------
    # Block last dim = full C (legal regardless of the 128-lane rule), so only the
    # second-last (anchor) dim needs to be a multiple of 8 when tiled.
    if N <= 8:
        tn = N                                       # single full-extent block
    else:
        # >= 2 grid steps when possible so the "parallel" axis can shard across
        # both v7x TensorCores; otherwise honor the requested tile size.
        tn = min(tile_n, _round_up(pl.cdiv(N, 2), 8))
        tn = max(8, (tn // 8) * 8)

    # Clamp tile so the double-buffered, lane-padded VMEM footprint
    # (1 input + 3 output buffers) stays inside every generation's scoped default.
    itemsize = jnp.dtype(x.dtype).itemsize
    padded_lanes = (_round_up(C, 128) + _round_up(4, 128)
                    + _round_up(max(nc, 1), 128) + _round_up(10, 128))
    while tn > 8 and 2 * B * tn * padded_lanes * itemsize > (12 << 20):
        tn = max(8, ((tn // 2) // 8) * 8)

    grid_n = pl.cdiv(N, tn)                          # ragged last tile masked by Pallas

    boxes, scores, landmarks = pl.pallas_call(
        _split_kernel,
        grid=(grid_n,),
        in_specs=[pl.BlockSpec((B, tn, C), lambda i: (0, i, 0))],
        out_specs=(
            pl.BlockSpec((B, tn, 4), lambda i: (0, i, 0)),
            pl.BlockSpec((B, tn, nc), lambda i: (0, i, 0)),
            pl.BlockSpec((B, tn, 10), lambda i: (0, i, 0)),
        ),
        out_shape=(
            jax.ShapeDtypeStruct((B, N, 4), x.dtype),
            jax.ShapeDtypeStruct((B, N, nc), x.dtype),
            jax.ShapeDtypeStruct((B, N, 10), x.dtype),
        ),
        compiler_params=pltpu.CompilerParams(
            dimension_semantics=("parallel",)),
    )(x)
    return boxes, scores, landmarks


def _reference(x):
    boxes = x[:, :, :4]
    scores = x[:, :, 15:] * x[:, :, 4:5]
    landmarks = x[:, :, 5:15]
    return boxes, scores, landmarks


if __name__ == "__main__":
    # DeepStreamOutput has no learnable parameters; only the input tensor matters.
    key = jax.random.PRNGKey(0)

    def check(B, N, C, tile_n=1024):
        k = jax.random.fold_in(key, B * 100003 + N * 101 + C * 7 + tile_n)
        x = jax.random.uniform(k, (B, N, C), dtype=jnp.float32)
        boxes, scores, landmarks = jax.block_until_ready(
            deepstream_output(x, tile_n=tile_n))
        rb, rs, rl = _reference(x)
        assert boxes.shape == (B, N, 4) and boxes.dtype == x.dtype
        assert scores.shape == (B, N, C - 15) and scores.dtype == x.dtype
        assert landmarks.shape == (B, N, 10) and landmarks.dtype == x.dtype
        assert jnp.array_equal(boxes, rb)
        assert jnp.allclose(scores, rs, rtol=1e-6, atol=1e-6)
        assert jnp.array_equal(landmarks, rl)

    # Small shapes consistent with the module (B=2 images, modest anchor counts).
    check(B=2, N=1000, C=20)               # 2 grid steps (v7x megacore), ragged last tile
    check(B=2, N=1000, C=20, tile_n=256)   # 4-step grid
    check(B=2, N=384,  C=16)               # nc=1 (typical YOLOv5-face), exact tiles
    check(B=1, N=37,   C=20)               # tiny odd N, ragged last tile

    print("KERNEL_OK")
</pallas_src>

<mosaic_0001>
module attributes {stable_mosaic.version = 11 : i64} {
  func.func @_split_kernel(%arg0: i32, %arg1: memref<2x504x20xf32, #tpu.memory_space<vmem>>, %arg2: memref<2x504x4xf32, #tpu.memory_space<vmem>>, %arg3: memref<2x504x5xf32, #tpu.memory_space<vmem>>, %arg4: memref<2x504x10xf32, #tpu.memory_space<vmem>>) attributes {dimension_semantics = [#tpu.dimension_semantics<parallel>], iteration_bounds = array<i64: 2>, scalar_prefetch = 0 : i64, scratch_operands = 0 : i64, tpu.core_type = #tpu.core_type<tc>, window_params = [{transform_indices = @transform_0, window_bounds = array<i64: 2, 504, 20>}, {transform_indices = @transform_1, window_bounds = array<i64: 2, 504, 4>}, {transform_indices = @transform_2, window_bounds = array<i64: 2, 504, 5>}, {transform_indices = @transform_3, window_bounds = array<i64: 2, 504, 10>}]} {
    %c0 = arith.constant 0 : index
    %c0_0 = arith.constant 0 : index
    %c0_1 = arith.constant 0 : index
    %0 = vector.load %arg1[%c0, %c0_0, %c0_1] : memref<2x504x20xf32, #tpu.memory_space<vmem>>, vector<2x504x20xf32>
    %1 = vector.extract_strided_slice %0 {offsets = [0, 0, 0], sizes = [2, 504, 4], strides = [1, 1, 1]} : vector<2x504x20xf32> to vector<2x504x4xf32>
    %c0_2 = arith.constant 0 : index
    %c0_3 = arith.constant 0 : index
    %c0_4 = arith.constant 0 : index
    %2 = vector.load %arg2[%c0_2, %c0_3, %c0_4] : memref<2x504x4xf32, #tpu.memory_space<vmem>>, vector<2x504x4xf32>
    tpu.vector_store %arg2[%c0_2, %c0_3, %c0_4], %1 {strides = array<i32>} : memref<2x504x4xf32, #tpu.memory_space<vmem>>, vector<2x504x4xf32>,
    %3 = vector.extract_strided_slice %0 {offsets = [0, 0, 5], sizes = [2, 504, 10], strides = [1, 1, 1]} : vector<2x504x20xf32> to vector<2x504x10xf32>
    %c0_5 = arith.constant 0 : index
    %c0_6 = arith.constant 0 : index
    %c0_7 = arith.constant 0 : index
    %4 = vector.load %arg4[%c0_5, %c0_6, %c0_7] : memref<2x504x10xf32, #tpu.memory_space<vmem>>, vector<2x504x10xf32>
    tpu.vector_store %arg4[%c0_5, %c0_6, %c0_7], %3 {strides = array<i32>} : memref<2x504x10xf32, #tpu.memory_space<vmem>>, vector<2x504x10xf32>,
    %5 = vector.extract_strided_slice %0 {offsets = [0, 0, 15], sizes = [2, 504, 5], strides = [1, 1, 1]} : vector<2x504x20xf32> to vector<2x504x5xf32>
    %6 = vector.extract_strided_slice %0 {offsets = [0, 0, 4], sizes = [2, 504, 1], strides = [1, 1, 1]} : vector<2x504x20xf32> to vector<2x504x1xf32>
    %7 = vector.broadcast %6 : vector<2x504x1xf32> to vector<2x504x5xf32>
    %8 = arith.mulf %5, %7 : vector<2x504x5xf32>
    %c0_8 = arith.constant 0 : index
    %c0_9 = arith.constant 0 : index
    %c0_10 = arith.constant 0 : index
    %9 = vector.load %arg3[%c0_8, %c0_9, %c0_10] : memref<2x504x5xf32, #tpu.memory_space<vmem>>, vector<2x504x5xf32>
    tpu.vector_store %arg3[%c0_8, %c0_9, %c0_10], %8 {strides = array<i32>} : memref<2x504x5xf32, #tpu.memory_space<vmem>>, vector<2x504x5xf32>,
    return
  }
  func.func @transform_0(%arg0: i32) -> (i32, i32, i32) {
    %c0_i32 = arith.constant 0 : i32
    %c0_i32_0 = arith.constant 0 : i32
    %c0_i32_1 = arith.constant 0 : i32
    return %c0_i32, %arg0, %c0_i32_0 : i32, i32, i32
  }
  func.func @transform_1(%arg0: i32) -> (i32, i32, i32) {
    %c0_i32 = arith.constant 0 : i32
    %c0_i32_0 = arith.constant 0 : i32
    %c0_i32_1 = arith.constant 0 : i32
    return %c0_i32, %arg0, %c0_i32_0 : i32, i32, i32
  }
  func.func @transform_2(%arg0: i32) -> (i32, i32, i32) {
    %c0_i32 = arith.constant 0 : i32
    %c0_i32_0 = arith.constant 0 : i32
    %c0_i32_1 = arith.constant 0 : i32
    return %c0_i32, %arg0, %c0_i32_0 : i32, i32, i32
  }
  func.func @transform_3(%arg0: i32) -> (i32, i32, i32) {
    %c0_i32 = arith.constant 0 : i32
    %c0_i32_0 = arith.constant 0 : i32
    %c0_i32_1 = arith.constant 0 : i32
    return %c0_i32, %arg0, %c0_i32_0 : i32, i32, i32
  }
}

</mosaic_0001>

<llo_original>
// kernel: tpu_custom_call.1
$region0: #{tpu_custom_call.1}
  #allocation0 [shape = 'u32[]', space=smem, size = 0x4, offset = 0x4, fixed_abs, tag = 'smem constant byte address 0x4 - core index']
  #allocation1 [shape = 'u32[144,128]{1,0:T(1,128)}', space=vmem, size = 0x12000, scoped, tag = 'internal scratch']
  %s0 = inlined_call_operand.vmem [shape: f32[2,1000,20], index: 0, kind: input, shape index: {}]
  %s1 = inlined_call_operand.vmem [shape: f32[2,1000,4], index: 1, kind: output, shape index: {0}]
  %s2 = inlined_call_operand.vmem [shape: f32[2,1000,5], index: 2, kind: output, shape index: {1}]
  %s3 = inlined_call_operand.vmem [shape: f32[2,1000,10], index: 3, kind: output, shape index: {2}]
  %4 = xla_tuple %s1, %s2, %s3
  %s5 = sld [smem:[#allocation0]]
  $region249: #{tpu_custom_call.1} parent=0
    _
  %s7 = ssub.s32 1, %s5
  %s8 = scalar_select 0, %s7, %s5
  $region1: #{tpu_custom_call.1} parent=0
    #allocation2 [shape = 'u8[1032192]{0}', space=vmem, size = 0xfc000, scoped, tag = 'input window, operand 0']
    #allocation3 [shape = 'u8[1032192]{0}', space=vmem, size = 0xfc000, scoped, tag = 'output window, operand 0']
    #allocation4 [shape = 'u8[1032192]{0}', space=vmem, size = 0xfc000, scoped, tag = 'output window, operand 1']
    #allocation5 [shape = 'u8[1032192]{0}', space=vmem, size = 0xfc000, scoped, tag = 'output window, operand 2']
    loop: start=0, step=1, limit=4
    $region2: #{tpu_custom_call.1} parent=1 // loop_pre_header
      _
    $region3: #{tpu_custom_call.1} parent=1 // loop_header
      %s10 = sphi 0, %s14
      %p11 = scmp.ge.s32.totalorder %s10, 4
      %s20 = sphi 0, %s22
      %s23 = sphi 0, %s20
      %s24 = sphi 0, %s23
      %s40 = sphi 0, %s24
      %s46 = sphi 0, %s48
      %s49 = sphi 0, %s46
      %s50 = sphi 0, %s49
      %s66 = sphi 0, %s50
      %s72 = sphi 0, %s74
      %s75 = sphi 0, %s72
      %s76 = sphi 0, %s75
      %s92 = sphi 0, %s76
      %s98 = sphi 0, %s100
      %s101 = sphi 0, %s98
      %s102 = sphi 0, %s101
      %s118 = sphi 0, %s102
    $region4: #{tpu_custom_call.1} parent=1 // loop_header_branch
      %13 = sbr.rel (%p11) target = $region8
    $region5: #{tpu_custom_call.1} parent=1 // loop_body
      %s15 = ssub.s32 %s10, 1
      %s16 = ssub.s32 %s10, 2
      %s17 = sadd.s32 %s10, 1
      %s18 = ssub.s32 %s10, %s17
      %p19 = scmp.eq.s32.totalorder %s18, 0
      %s21 = sadd.s32 %s20, 1
      %s22 = scalar_select %p19, %s20, %s21
      %p25 = pneg %p19
      %p26 = scmp.eq.s32.totalorder %s10, 1
      %p27 = por %p25, %p26
      %p28 = scmp.ne.s32.totalorder %s20, %s23
      %p29 = scmp.eq.s32.totalorder %s10, 0
      %p30 = por %p28, %p29
      %p31 = scmp.ne.s32.totalorder %s20, %s23
      %p32 = scmp.eq.s32.totalorder %s15, 1
      %p33 = por %p31, %p32
      %p34 = scmp.ne.s32.totalorder %s23, %s24
      %p35 = scmp.eq.s32.totalorder %s15, 0
      %p36 = por %p34, %p35
      %p37 = scmp.ne.s32.totalorder %s23, %s24
      %p38 = scmp.eq.s32.totalorder %s16, 1
      %p39 = por %p37, %p38
      %p41 = scmp.ne.s32.totalorder %s24, %s40
      %p42 = scmp.eq.s32.totalorder %s16, 0
      %p43 = por %p41, %p42
      %s44 = ssub.s32 %s10, %s17
      %p45 = scmp.eq.s32.totalorder %s44, 0
      %s47 = sadd.s32 %s46, 1
      %s48 = scalar_select %p45, %s46, %s47
      %p51 = pneg %p45
      %p52 = scmp.eq.s32.totalorder %s10, 1
      %p53 = por %p51, %p52
      %p54 = scmp.ne.s32.totalorder %s46, %s49
      %p55 = scmp.eq.s32.totalorder %s10, 0
      %p56 = por %p54, %p55
      %p57 = scmp.ne.s32.totalorder %s46, %s49
      %p58 = scmp.eq.s32.totalorder %s15, 1
      %p59 = por %p57, %p58
      %p60 = scmp.ne.s32.totalorder %s49, %s50
      %p61 = scmp.eq.s32.totalorder %s15, 0
      %p62 = por %p60, %p61
      %p63 = scmp.ne.s32.totalorder %s49, %s50
      %p64 = scmp.eq.s32.totalorder %s16, 1
      %p65 = por %p63, %p64
      %p67 = scmp.ne.s32.totalorder %s50, %s66
      %p68 = scmp.eq.s32.totalorder %s16, 0
      %p69 = por %p67, %p68
      %s70 = ssub.s32 %s10, %s17
      %p71 = scmp.eq.s32.totalorder %s70, 0
      %s73 = sadd.s32 %s72, 1
      %s74 = scalar_select %p71, %s72, %s73
      %p77 = pneg %p71
      %p78 = scmp.eq.s32.totalorder %s10, 1
      %p79 = por %p77, %p78
      %p80 = scmp.ne.s32.totalorder %s72, %s75
      %p81 = scmp.eq.s32.totalorder %s10, 0
      %p82 = por %p80, %p81
      %p83 = scmp.ne.s32.totalorder %s72, %s75
      %p84 = scmp.eq.s32.totalorder %s15, 1
      %p85 = por %p83, %p84
      %p86 = scmp.ne.s32.totalorder %s75, %s76
      %p87 = scmp.eq.s32.totalorder %s15, 0
      %p88 = por %p86, %p87
      %p89 = scmp.ne.s32.totalorder %s75, %s76
      %p90 = scmp.eq.s32.totalorder %s16, 1
      %p91 = por %p89, %p90
      %p93 = scmp.ne.s32.totalorder %s76, %s92
      %p94 = scmp.eq.s32.totalorder %s16, 0
      %p95 = por %p93, %p94
      %s96 = ssub.s32 %s10, %s17
      %p97 = scmp.eq.s32.totalorder %s96, 0
      %s99 = sadd.s32 %s98, 1
      %s100 = scalar_select %p97, %s98, %s99
      %p103 = pneg %p97
      %p104 = scmp.eq.s32.totalorder %s10, 1
      %p105 = por %p103, %p104
      %p106 = scmp.ne.s32.totalorder %s98, %s101
      %p107 = scmp.eq.s32.totalorder %s10, 0
      %p108 = por %p106, %p107
      %p109 = scmp.ne.s32.totalorder %s98, %s101
      %p110 = scmp.eq.s32.totalorder %s15, 1
      %p111 = por %p109, %p110
      %p112 = scmp.ne.s32.totalorder %s101, %s102
      %p113 = scmp.eq.s32.totalorder %s15, 0
      %p114 = por %p112, %p113
      %p115 = scmp.ne.s32.totalorder %s101, %s102
      %p116 = scmp.eq.s32.totalorder %s16, 1
      %p117 = por %p115, %p116
      %p119 = scmp.ne.s32.totalorder %s102, %s118
      %p120 = scmp.eq.s32.totalorder %s16, 0
      %p121 = por %p119, %p120
      %p122 = scmp.le.s32.totalorder 1, %s10
      %p123 = scmp.lt.s32.totalorder %s10, 3
      %p124 = pnand %p122, %p123
      %p125 = pneg %p124
      // Predicated region
      $region9: #{tpu_custom_call.1} parent=5 // pred_check
        _
      $region10: #{tpu_custom_call.1} parent=5 // pred_check_branch
        %127 = sbr.rel (%p124) target = $region12
      $region11: #{tpu_custom_call.1} parent=5 // pred_region
        %s128 = ssub.s32 %s10, 1
      $region12: #{tpu_custom_call.1} parent=5 // pred_fallthru
        _
      %p129 = scmp.lt.s32.totalorder %s10, 2
      // Predicated region
      $region13: #{tpu_custom_call.1} parent=5 // pred_check
        %p130 = pneg %p129
      $region14: #{tpu_custom_call.1} parent=5 // pred_check_branch
        %132 = sbr.rel (%p130) target = $region16
      $region15: #{tpu_custom_call.1} parent=5 // pred_region
        // Predicated region
        $region17: #{tpu_custom_call.1} parent=15 // pred_check
          %p133 = pneg %p30
        $region18: #{tpu_custom_call.1} parent=15 // pred_check_branch
          %135 = sbr.rel (%p133) target = $region20
        $region19: #{tpu_custom_call.1} parent=15 // pred_region
          %s136 = sand.u32 %s20, 1
          %s137 = sand.u32 %s20, 1
          %s138 = smul.addr %s137, 1008
          %s139 = scalar_lea.vmem [#allocation2], %s138
          %s140 = smul.u32 63, %s10
          %s141 = ssub.s32 125, %s140
          %p142 = scmp.lt.s32.totalorder %s141, 63
          %s143 = scalar_select %p142, %s141, 63
          %s144 = smul.u32 256, %s143
          %p145 = scmp.ne.s32.totalorder 0, %s144
          %s146 = smul.addr %s140, 8
          %s147 = scalar_lea.vmem %s0, %s146
          // Predicated region
          $region21: #{tpu_custom_call.1} parent=19 // pred_check
            %p148 = pneg %p145
          $region22: #{tpu_custom_call.1} parent=19 // pred_check_branch
            %150 = sbr.rel (%p148) target = $region24
          $region23: #{tpu_custom_call.1} parent=19 // pred_region
            // Predicated region
            $region25: #{tpu_custom_call.1} parent=23 // pred_check
              _
            $region26: #{tpu_custom_call.1} parent=23 // pred_check_branch
              %152 = sbr.rel (0) target = $region28
            $region27: #{tpu_custom_call.1} parent=23 // pred_region
              // Predicated region
              $region47: #{tpu_custom_call.1} parent=27 // pred_check
                _
              $region48: #{tpu_custom_call.1} parent=27 // pred_check_branch
                %330 = sbr.rel (0) target = $region50
              $region49: #{tpu_custom_call.1} parent=27 // pred_region
                %s331 = sshrl.u32 %s143, 5
                // While loop
                $region51: #{tpu_custom_call.1} parent=49 // loop_pre_header
                  _
                $region52: #{tpu_custom_call.1} parent=49 // loop_header
                  %s333 = sphi 0, %s335
                  %p334 = scmp.ge.s32.totalorder %s333, %s331
                  %s338 = sphi 0, %s471
                  %s339 = sphi %s147, %s474
                  %s340 = sphi %s139, %s475
                $region53: #{tpu_custom_call.1} parent=49 // loop_header_branch
                  %337 = sbr.rel (%p334) target = $region57
                $region54: #{tpu_custom_call.1} parent=49 // loop_body
                  %v341 = vld [vmem:[%s339] sm:$0xff]
                  %342 = vst [vmem:[%s340] sm:$0xff] %v341
                  %v343 = vld [vmem:[%s339 + $0x8] sm:$0xff]
                  %344 = vst [vmem:[%s340 + $0x8] sm:$0xff] %v343
                  %v345 = vld [vmem:[%s339 + $0x10] sm:$0xff]
                  %346 = vst [vmem:[%s340 + $0x10] sm:$0xff] %v345
                  %v347 = vld [vmem:[%s339 + $0x18] sm:$0xff]
                  %348 = vst [vmem:[%s340 + $0x18] sm:$0xff] %v347
                  %v349 = vld [vmem:[%s339 + $0x20] sm:$0xff]
                  %350 = vst [vmem:[%s340 + $0x20] sm:$0xff] %v349
                  %v351 = vld [vmem:[%s339 + $0x28] sm:$0xff]
                  %352 = vst [vmem:[%s340 + $0x28] sm:$0xff] %v351
                  %v353 = vld [vmem:[%s339 + $0x30] sm:$0xff]
                  %354 = vst [vmem:[%s340 + $0x30] sm:$0xff] %v353
                  %v355 = vld [vmem:[%s339 + $0x38] sm:$0xff]
                  %356 = vst [vmem:[%s340 + $0x38] sm:$0xff] %v355
                  %v357 = vld [vmem:[%s339 + $0x40] sm:$0xff]
                  %358 = vst [vmem:[%s340 + $0x40] sm:$0xff] %v357
                  %v359 = vld [vmem:[%s339 + $0x48] sm:$0xff]
                  %360 = vst [vmem:[%s340 + $0x48] sm:$0xff] %v359
                  %v361 = vld [vmem:[%s339 + $0x50] sm:$0xff]
                  %362 = vst [vmem:[%s340 + $0x50] sm:$0xff] %v361
                  %v363 = vld [vmem:[%s339 + $0x58] sm:$0xff]
                  %364 = vst [vmem:[%s340 + $0x58] sm:$0xff] %v363
                  %v365 = vld [vmem:[%s339 + $0x60] sm:$0xff]
                  %366 = vst [vmem:[%s340 + $0x60] sm:$0xff] %v365
                  %v367 = vld [vmem:[%s339 + $0x68] sm:$0xff]
                  %368 = vst [vmem:[%s340 + $0x68] sm:$0xff] %v367
                  %v369 = vld [vmem:[%s339 + $0x70] sm:$0xff]
                  %370 = vst [vmem:[%s340 + $0x70] sm:$0xff] %v369
                  %v371 = vld [vmem:[%s339 + $0x78] sm:$0xff]
                  %372 = vst [vmem:[%s340 + $0x78] sm:$0xff] %v371
                  %v373 = vld [vmem:[%s339 + $0x80] sm:$0xff]
                  %374 = vst [vmem:[%s340 + $0x80] sm:$0xff] %v373
                  %v375 = vld [vmem:[%s339 + $0x88] sm:$0xff]
                  %376 = vst [vmem:[%s340 + $0x88] sm:$0xff] %v375
                  %v377 = vld [vmem:[%s339 + $0x90] sm:$0xff]
                  %378 = vst [vmem:[%s340 + $0x90] sm:$0xff] %v377
                  %v379 = vld [vmem:[%s339 + $0x98] sm:$0xff]
                  %380 = vst [vmem:[%s340 + $0x98] sm:$0xff] %v379
                  %v381 = vld [vmem:[%s339 + $0xa0] sm:$0xff]
                  %382 = vst [vmem:[%s340 + $0xa0] sm:$0xff] %v381
                  %v383 = vld [vmem:[%s339 + $0xa8] sm:$0xff]
                  %384 = vst [vmem:[%s340 + $0xa8] sm:$0xff] %v383
                  %v385 = vld [vmem:[%s339 + $0xb0] sm:$0xff]
                  %386 = vst [vmem:[%s340 + $0xb0] sm:$0xff] %v385
                  %v387 = vld [vmem:[%s339 + $0xb8] sm:$0xff]
                  %388 = vst [vmem:[%s340 + $0xb8] sm:$0xff] %v387
                  %v389 = vld [vmem:[%s339 + $0xc0] sm:$0xff]
                  %390 = vst [vmem:[%s340 + $0xc0] sm:$0xff] %v389
                  %v391 = vld [vmem:[%s339 + $0xc8] sm:$0xff]
                  %392 = vst [vmem:[%s340 + $0xc8] sm:$0xff] %v391
                  %v393 = vld [vmem:[%s339 + $0xd0] sm:$0xff]
                  %394 = vst [vmem:[%s340 + $0xd0] sm:$0xff] %v393
                  %v395 = vld [vmem:[%s339 + $0xd8] sm:$0xff]
                  %396 = vst [vmem:[%s340 + $0xd8] sm:$0xff] %v395
                  %v397 = vld [vmem:[%s339 + $0xe0] sm:$0xff]
                  %398 = vst [vmem:[%s340 + $0xe0] sm:$0xff] %v397
                  %v399 = vld [vmem:[%s339 + $0xe8] sm:$0xff]
                  %400 = vst [vmem:[%s340 + $0xe8] sm:$0xff] %v399
                  %v401 = vld [vmem:[%s339 + $0xf0] sm:$0xff]
                  %402 = vst [vmem:[%s340 + $0xf0] sm:$0xff] %v401
                  %v403 = vld [vmem:[%s339 + $0xf8] sm:$0xff]
                  %404 = vst [vmem:[%s340 + $0xf8] sm:$0xff] %v403
                  %v405 = vld [vmem:[%s339 + $0x3e8] sm:$0xff]
                  %406 = vst [vmem:[%s340 + $0x1f8] sm:$0xff] %v405
                  %v407 = vld [vmem:[%s339 + $0x3f0] sm:$0xff]
                  %408 = vst [vmem:[%s340 + $0x200] sm:$0xff] %v407
                  %v409 = vld [vmem:[%s339 + $0x3f8] sm:$0xff]
                  %410 = vst [vmem:[%s340 + $0x208] sm:$0xff] %v409
                  %v411 = vld [vmem:[%s339 + $0x400] sm:$0xff]
                  %412 = vst [vmem:[%s340 + $0x210] sm:$0xff] %v411
                  %v413 = vld [vmem:[%s339 + $0x408] sm:$0xff]
                  %414 = vst [vmem:[%s340 + $0x218] sm:$0xff] %v413
                  %v415 = vld [vmem:[%s339 + $0x410] sm:$0xff]
                  %416 = vst [vmem:[%s340 + $0x220] sm:$0xff] %v415
                  %v417 = vld [vmem:[%s339 + $0x418] sm:$0xff]
                  %418 = vst [vmem:[%s340 + $0x228] sm:$0xff] %v417
                  %v419 = vld [vmem:[%s339 + $0x420] sm:$0xff]
                  %420 = vst [vmem:[%s340 + $0x230] sm:$0xff] %v419
                  %v421 = vld [vmem:[%s339 + $0x428] sm:$0xff]
                  %422 = vst [vmem:[%s340 + $0x238] sm:$0xff] %v421
                  %v423 = vld [vmem:[%s339 + $0x430] sm:$0xff]
                  %424 = vst [vmem:[%s340 + $0x240] sm:$0xff] %v423
                  %v425 = vld [vmem:[%s339 + $0x438] sm:$0xff]
                  %426 = vst [vmem:[%s340 + $0x248] sm:$0xff] %v425
                  %v427 = vld [vmem:[%s339 + $0x440] sm:$0xff]
                  %428 = vst [vmem:[%s340 + $0x250] sm:$0xff] %v427
                  %v429 = vld [vmem:[%s339 + $0x448] sm:$0xff]
                  %430 = vst [vmem:[%s340 + $0x258] sm:$0xff] %v429
                  %v431 = vld [vmem:[%s339 + $0x450] sm:$0xff]
                  %432 = vst [vmem:[%s340 + $0x260] sm:$0xff] %v431
                  %v433 = vld [vmem:[%s339 + $0x458] sm:$0xff]
                  %434 = vst [vmem:[%s340 + $0x268] sm:$0xff] %v433
                  %v435 = vld [vmem:[%s339 + $0x460] sm:$0xff]
                  %436 = vst [vmem:[%s340 + $0x270] sm:$0xff] %v435
                  %v437 = vld [vmem:[%s339 + $0x468] sm:$0xff]
                  %438 = vst [vmem:[%s340 + $0x278] sm:$0xff] %v437
                  %v439 = vld [vmem:[%s339 + $0x470] sm:$0xff]
                  %440 = vst [vmem:[%s340 + $0x280] sm:$0xff] %v439
                  %v441 = vld [vmem:[%s339 + $0x478] sm:$0xff]
                  %442 = vst [vmem:[%s340 + $0x288] sm:$0xff] %v441
                  %v443 = vld [vmem:[%s339 + $0x480] sm:$0xff]
                  %444 = vst [vmem:[%s340 + $0x290] sm:$0xff] %v443
                  %v445 = vld [vmem:[%s339 + $0x488] sm:$0xff]
                  %446 = vst [vmem:[%s340 + $0x298] sm:$0xff] %v445
                  %v447 = vld [vmem:[%s339 + $0x490] sm:$0xff]
                  %448 = vst [vmem:[%s340 + $0x2a0] sm:$0xff] %v447
                  %v449 = vld [vmem:[%s339 + $0x498] sm:$0xff]
                  %450 = vst [vmem:[%s340 + $0x2a8] sm:$0xff] %v449
                  %v451 = vld [vmem:[%s339 + $0x4a0] sm:$0xff]
                  %452 = vst [vmem:[%s340 + $0x2b0] sm:$0xff] %v451
                  %v453 = vld [vmem:[%s339 + $0x4a8] sm:$0xff]
                  %454 = vst [vmem:[%s340 + $0x2b8] sm:$0xff] %v453
                  %v455 = vld [vmem:[%s339 + $0x4b0] sm:$0xff]
                  %456 = vst [vmem:[%s340 + $0x2c0] sm:$0xff] %v455
                  %v457 = vld [vmem:[%s339 + $0x4b8] sm:$0xff]
                  %458 = vst [vmem:[%s340 + $0x2c8] sm:$0xff] %v457
                  %v459 = vld [vmem:[%s339 + $0x4c0] sm:$0xff]
                  %460 = vst [vmem:[%s340 + $0x2d0] sm:$0xff] %v459
                  %v461 = vld [vmem:[%s339 + $0x4c8] sm:$0xff]
                  %462 = vst [vmem:[%s340 + $0x2d8] sm:$0xff] %v461
                  %v463 = vld [vmem:[%s339 + $0x4d0] sm:$0xff]
                  %464 = vst [vmem:[%s340 + $0x2e0] sm:$0xff] %v463
                  %v465 = vld [vmem:[%s339 + $0x4d8] sm:$0xff]
                  %466 = vst [vmem:[%s340 + $0x2e8] sm:$0xff] %v465
                  %v467 = vld [vmem:[%s339 + $0x4e0] sm:$0xff]
                  %468 = vst [vmem:[%s340 + $0x2f0] sm:$0xff] %v467
                  %s469 = sadd.s32 1, %s338
                  %p470 = scmp.ge.s32.totalorder %s469, %s331
                  %s471 = scalar_select %p470, 0, %s469
                  %s472 = smul.u32 %s471, 256
                  %s473 = smul.u32 %s471, 256
                  %s474 = scalar_lea.vmem %s147, %s472
                  %s475 = scalar_lea.vmem %s139, %s473 [#allocation2]
                $region55: #{tpu_custom_call.1} parent=49 // loop_footer
                  %s335 = sadd.s32 %s333, 1
                $region56: #{tpu_custom_call.1} parent=49 // loop_footer_branch
                  %332 = sbr.rel target = $region52
                $region57: #{tpu_custom_call.1} parent=49 // loop_exit
                  _
                %s476 = sshrl.u32 %s143, 5
                %s477 = sand.u32 %s143, 31
                %s478 = smul.u32 %s476, 32
                %s479 = smul.u32 8, %s478
                %s480 = scalar_lea.vmem %s147, %s479
                %s481 = smul.u32 8, %s478
                %s482 = scalar_lea.vmem %s139, %s481 [#allocation2]
                // While loop
                $region58: #{tpu_custom_call.1} parent=49 // loop_pre_header
                  _
                $region59: #{tpu_custom_call.1} parent=49 // loop_header
                  %s484 = sphi 0, %s486
                  %p485 = scmp.ge.s32.totalorder %s484, %s477
                  %s489 = sphi 0, %s498
                  %s490 = sphi %s480, %s501
                  %s491 = sphi %s482, %s502
                $region60: #{tpu_custom_call.1} parent=49 // loop_header_branch
                  %488 = sbr.rel (%p485) target = $region64
                $region61: #{tpu_custom_call.1} parent=49 // loop_body
                  %v492 = vld [vmem:[%s490] sm:$0xff]
                  %493 = vst [vmem:[%s491] sm:$0xff] %v492
                  %v494 = vld [vmem:[%s490 + $0x3e8] sm:$0xff]
                  %495 = vst [vmem:[%s491 + $0x1f8] sm:$0xff] %v494
                  %s496 = sadd.s32 1, %s489
                  %p497 = scmp.ge.s32.totalorder %s496, %s477
                  %s498 = scalar_select %p497, 0, %s496
                  %s499 = smul.u32 %s498, 8
                  %s500 = smul.u32 %s498, 8
                  %s501 = scalar_lea.vmem %s480, %s499
                  %s502 = scalar_lea.vmem %s482, %s500 [#allocation2]
                $region62: #{tpu_custom_call.1} parent=49 // loop_footer
                  %s486 = sadd.s32 %s484, 1
                $region63: #{tpu_custom_call.1} parent=49 // loop_footer_branch
                  %483 = sbr.rel target = $region59
                $region64: #{tpu_custom_call.1} parent=49 // loop_exit
                  _
              $region50: #{tpu_custom_call.1} parent=27 // pred_fallthru
                _
              // Predicated region
              $region65: #{tpu_custom_call.1} parent=27 // pred_check
                _
              $region66: #{tpu_custom_call.1} parent=27 // pred_check_branch
                %504 = sbr.rel target = $region68
              $region67: #{tpu_custom_call.1} parent=27 // pred_region
                _
              $region68: #{tpu_custom_call.1} parent=27 // pred_fallthru
                _
            $region28: #{tpu_custom_call.1} parent=23 // pred_fallthru
              _
            // Predicated region
            $region29: #{tpu_custom_call.1} parent=23 // pred_check
              _
            $region30: #{tpu_custom_call.1} parent=23 // pred_check_branch
              %154 = sbr.rel target = $region32
            $region31: #{tpu_custom_call.1} parent=23 // pred_region
              %s156 = ssub.s32 256, 1
              %s157 = sshrl.u32 %s143, 5
              // While loop
              $region33: #{tpu_custom_call.1} parent=31 // loop_pre_header
                _
              $region34: #{tpu_custom_call.1} parent=31 // loop_header
                %s159 = sphi 0, %s161
                %p160 = scmp.ge.s32.totalorder %s159, %s157
                %s164 = sphi 0, %s297
                %s165 = sphi %s147, %s300
                %s166 = sphi %s139, %s301
              $region35: #{tpu_custom_call.1} parent=31 // loop_header_branch
                %163 = sbr.rel (%p160) target = $region39
              $region36: #{tpu_custom_call.1} parent=31 // loop_body
                %v167 = vld [vmem:[%s165] sm:%s156]
                %168 = vst [vmem:[%s166] sm:%s156] %v167
                %v169 = vld [vmem:[%s165 + $0x8] sm:%s156]
                %170 = vst [vmem:[%s166 + $0x8] sm:%s156] %v169
                %v171 = vld [vmem:[%s165 + $0x10] sm:%s156]
                %172 = vst [vmem:[%s166 + $0x10] sm:%s156] %v171
                %v173 = vld [vmem:[%s165 + $0x18] sm:%s156]
                %174 = vst [vmem:[%s166 + $0x18] sm:%s156] %v173
                %v175 = vld [vmem:[%s165 + $0x20] sm:%s156]
                %176 = vst [vmem:[%s166 + $0x20] sm:%s156] %v175
                %v177 = vld [vmem:[%s165 + $0x28] sm:%s156]
                %178 = vst [vmem:[%s166 + $0x28] sm:%s156] %v177
                %v179 = vld [vmem:[%s165 + $0x30] sm:%s156]
                %180 = vst [vmem:[%s166 + $0x30] sm:%s156] %v179
                %v181 = vld [vmem:[%s165 + $0x38] sm:%s156]
                %182 = vst [vmem:[%s166 + $0x38] sm:%s156] %v181
                %v183 = vld [vmem:[%s165 + $0x40] sm:%s156]
                %184 = vst [vmem:[%s166 + $0x40] sm:%s156] %v183
                %v185 = vld [vmem:[%s165 + $0x48] sm:%s156]
                %186 = vst [vmem:[%s166 + $0x48] sm:%s156] %v185
                %v187 = vld [vmem:[%s165 + $0x50] sm:%s156]
                %188 = vst [vmem:[%s166 + $0x50] sm:%s156] %v187
                %v189 = vld [vmem:[%s165 + $0x58] sm:%s156]
                %190 = vst [vmem:[%s166 + $0x58] sm:%s156] %v189
                %v191 = vld [vmem:[%s165 + $0x60] sm:%s156]
                %192 = vst [vmem:[%s166 + $0x60] sm:%s156] %v191
                %v193 = vld [vmem:[%s165 + $0x68] sm:%s156]
                %194 = vst [vmem:[%s166 + $0x68] sm:%s156] %v193
                %v195 = vld [vmem:[%s165 + $0x70] sm:%s156]
                %196 = vst [vmem:[%s166 + $0x70] sm:%s156] %v195
                %v197 = vld [vmem:[%s165 + $0x78] sm:%s156]
                %198 = vst [vmem:[%s166 + $0x78] sm:%s156] %v197
                %v199 = vld [vmem:[%s165 + $0x80] sm:%s156]
                %200 = vst [vmem:[%s166 + $0x80] sm:%s156] %v199
                %v201 = vld [vmem:[%s165 + $0x88] sm:%s156]
                %202 = vst [vmem:[%s166 + $0x88] sm:%s156] %v201
                %v203 = vld [vmem:[%s165 + $0x90] sm:%s156]
                %204 = vst [vmem:[%s166 + $0x90] sm:%s156] %v203
                %v205 = vld [vmem:[%s165 + $0x98] sm:%s156]
                %206 = vst [vmem:[%s166 + $0x98] sm:%s156] %v205
                %v207 = vld [vmem:[%s165 + $0xa0] sm:%s156]
                %208 = vst [vmem:[%s166 + $0xa0] sm:%s156] %v207
                %v209 = vld [vmem:[%s165 + $0xa8] sm:%s156]
                %210 = vst [vmem:[%s166 + $0xa8] sm:%s156] %v209
                %v211 = vld [vmem:[%s165 + $0xb0] sm:%s156]
                %212 = vst [vmem:[%s166 + $0xb0] sm:%s156] %v211
                %v213 = vld [vmem:[%s165 + $0xb8] sm:%s156]
                %214 = vst [vmem:[%s166 + $0xb8] sm:%s156] %v213
                %v215 = vld [vmem:[%s165 + $0xc0] sm:%s156]
                %216 = vst [vmem:[%s166 + $0xc0] sm:%s156] %v215
                %v217 = vld [vmem:[%s165 + $0xc8] sm:%s156]
                %218 = vst [vmem:[%s166 + $0xc8] sm:%s156] %v217
                %v219 = vld [vmem:[%s165 + $0xd0] sm:%s156]
                %220 = vst [vmem:[%s166 + $0xd0] sm:%s156] %v219
                %v221 = vld [vmem:[%s165 + $0xd8] sm:%s156]
                %222 = vst [vmem:[%s166 + $0xd8] sm:%s156] %v221
                %v223 = vld [vmem:[%s165 + $0xe0] sm:%s156]
                %224 = vst [vmem:[%s166 + $0xe0] sm:%s156] %v223
                %v225 = vld [vmem:[%s165 + $0xe8] sm:%s156]
                %226 = vst [vmem:[%s166 + $0xe8] sm:%s156] %v225
                %v227 = vld [vmem:[%s165 + $0xf0] sm:%s156]
                %228 = vst [vmem:[%s166 + $0xf0] sm:%s156] %v227
                %v229 = vld [vmem:[%s165 + $0xf8] sm:%s156]
                %230 = vst [vmem:[%s166 + $0xf8] sm:%s156] %v229
                %v231 = vld [vmem:[%s165 + $0x3e8] sm:%s156]
                %232 = vst [vmem:[%s166 + $0x1f8] sm:%s156] %v231
                %v233 = vld [vmem:[%s165 + $0x3f0] sm:%s156]
                %234 = vst [vmem:[%s166 + $0x200] sm:%s156] %v233
                %v235 = vld [vmem:[%s165 + $0x3f8] sm:%s156]
                %236 = vst [vmem:[%s166 + $0x208] sm:%s156] %v235
                %v237 = vld [vmem:[%s165 + $0x400] sm:%s156]
                %238 = vst [vmem:[%s166 + $0x210] sm:%s156] %v237
                %v239 = vld [vmem:[%s165 + $0x408] sm:%s156]
                %240 = vst [vmem:[%s166 + $0x218] sm:%s156] %v239
                %v241 = vld [vmem:[%s165 + $0x410] sm:%s156]
                %242 = vst [vmem:[%s166 + $0x220] sm:%s156] %v241
                %v243 = vld [vmem:[%s165 + $0x418] sm:%s156]
                %244 = vst [vmem:[%s166 + $0x228] sm:%s156] %v243
                %v245 = vld [vmem:[%s165 + $0x420] sm:%s156]
                %246 = vst [vmem:[%s166 + $0x230] sm:%s156] %v245
                %v247 = vld [vmem:[%s165 + $0x428] sm:%s156]
                %248 = vst [vmem:[%s166 + $0x238] sm:%s156] %v247
                %v249 = vld [vmem:[%s165 + $0x430] sm:%s156]
                %250 = vst [vmem:[%s166 + $0x240] sm:%s156] %v249
                %v251 = vld [vmem:[%s165 + $0x438] sm:%s156]
                %252 = vst [vmem:[%s166 + $0x248] sm:%s156] %v251
                %v253 = vld [vmem:[%s165 + $0x440] sm:%s156]
                %254 = vst [vmem:[%s166 + $0x250] sm:%s156] %v253
                %v255 = vld [vmem:[%s165 + $0x448] sm:%s156]
                %256 = vst [vmem:[%s166 + $0x258] sm:%s156] %v255
                %v257 = vld [vmem:[%s165 + $0x450] sm:%s156]
                %258 = vst [vmem:[%s166 + $0x260] sm:%s156] %v257
                %v259 = vld [vmem:[%s165 + $0x458] sm:%s156]
                %260 = vst [vmem:[%s166 + $0x268] sm:%s156] %v259
                %v261 = vld [vmem:[%s165 + $0x460] sm:%s156]
                %262 = vst [vmem:[%s166 + $0x270] sm:%s156] %v261
                %v263 = vld [vmem:[%s165 + $0x468] sm:%s156]
                %264 = vst [vmem:[%s166 + $0x278] sm:%s156] %v263
                %v265 = vld [vmem:[%s165 + $0x470] sm:%s156]
                %266 = vst [vmem:[%s166 + $0x280] sm:%s156] %v265
                %v267 = vld [vmem:[%s165 + $0x478] sm:%s156]
                %268 = vst [vmem:[%s166 + $0x288] sm:%s156] %v267
                %v269 = vld [vmem:[%s165 + $0x480] sm:%s156]
                %270 = vst [vmem:[%s166 + $0x290] sm:%s156] %v269
                %v271 = vld [vmem:[%s165 + $0x488] sm:%s156]
                %272 = vst [vmem:[%s166 + $0x298] sm:%s156] %v271
                %v273 = vld [vmem:[%s165 + $0x490] sm:%s156]
                %274 = vst [vmem:[%s166 + $0x2a0] sm:%s156] %v273
                %v275 = vld [vmem:[%s165 + $0x498] sm:%s156]
                %276 = vst [vmem:[%s166 + $0x2a8] sm:%s156] %v275
                %v277 = vld [vmem:[%s165 + $0x4a0] sm:%s156]
                %278 = vst [vmem:[%s166 + $0x2b0] sm:%s156] %v277
                %v279 = vld [vmem:[%s165 + $0x4a8] sm:%s156]
                %280 = vst [vmem:[%s166 + $0x2b8] sm:%s156] %v279
                %v281 = vld [vmem:[%s165 + $0x4b0] sm:%s156]
                %282 = vst [vmem:[%s166 + $0x2c0] sm:%s156] %v281
                %v283 = vld [vmem:[%s165 + $0x4b8] sm:%s156]
                %284 = vst [vmem:[%s166 + $0x2c8] sm:%s156] %v283
                %v285 = vld [vmem:[%s165 + $0x4c0] sm:%s156]
                %286 = vst [vmem:[%s166 + $0x2d0] sm:%s156] %v285
                %v287 = vld [vmem:[%s165 + $0x4c8] sm:%s156]
                %288 = vst [vmem:[%s166 + $0x2d8] sm:%s156] %v287
                %v289 = vld [vmem:[%s165 + $0x4d0] sm:%s156]
                %290 = vst [vmem:[%s166 + $0x2e0] sm:%s156] %v289
                %v291 = vld [vmem:[%s165 + $0x4d8] sm:%s156]
                %292 = vst [vmem:[%s166 + $0x2e8] sm:%s156] %v291
                %v293 = vld [vmem:[%s165 + $0x4e0] sm:%s156]
                %294 = vst [vmem:[%s166 + $0x2f0] sm:%s156] %v293
                %s295 = sadd.s32 1, %s164
                %p296 = scmp.ge.s32.totalorder %s295, %s157
                %s297 = scalar_select %p296, 0, %s295
                %s298 = smul.u32 %s297, 256
                %s299 = smul.u32 %s297, 256
                %s300 = scalar_lea.vmem %s147, %s298
                %s301 = scalar_lea.vmem %s139, %s299 [#allocation2]
              $region37: #{tpu_custom_call.1} parent=31 // loop_footer
                %s161 = sadd.s32 %s159, 1
              $region38: #{tpu_custom_call.1} parent=31 // loop_footer_branch
                %158 = sbr.rel target = $region34
              $region39: #{tpu_custom_call.1} parent=31 // loop_exit
                _
              %s302 = sshrl.u32 %s143, 5
              %s303 = sand.u32 %s143, 31
              %s304 = smul.u32 %s302, 32
              %s305 = smul.u32 8, %s304
              %s306 = scalar_lea.vmem %s147, %s305
              %s307 = smul.u32 8, %s304
              %s308 = scalar_lea.vmem %s139, %s307 [#allocation2]
              // While loop
              $region40: #{tpu_custom_call.1} parent=31 // loop_pre_header
                _
              $region41: #{tpu_custom_call.1} parent=31 // loop_header
                %s310 = sphi 0, %s312
                %p311 = scmp.ge.s32.totalorder %s310, %s303
                %s315 = sphi 0, %s324
                %s316 = sphi %s306, %s327
                %s317 = sphi %s308, %s328
              $region42: #{tpu_custom_call.1} parent=31 // loop_header_branch
                %314 = sbr.rel (%p311) target = $region46
              $region43: #{tpu_custom_call.1} parent=31 // loop_body
                %v318 = vld [vmem:[%s316] sm:%s156]
                %319 = vst [vmem:[%s317] sm:%s156] %v318
                %v320 = vld [vmem:[%s316 + $0x3e8] sm:%s156]
                %321 = vst [vmem:[%s317 + $0x1f8] sm:%s156] %v320
                %s322 = sadd.s32 1, %s315
                %p323 = scmp.ge.s32.totalorder %s322, %s303
                %s324 = scalar_select %p323, 0, %s322
                %s325 = smul.u32 %s324, 8
                %s326 = smul.u32 %s324, 8
                %s327 = scalar_lea.vmem %s306, %s325
                %s328 = scalar_lea.vmem %s308, %s326 [#allocation2]
              $region44: #{tpu_custom_call.1} parent=31 // loop_footer
                %s312 = sadd.s32 %s310, 1
              $region45: #{tpu_custom_call.1} parent=31 // loop_footer_branch
                %309 = sbr.rel target = $region41
              $region46: #{tpu_custom_call.1} parent=31 // loop_exit
                _
            $region32: #{tpu_custom_call.1} parent=23 // pred_fallthru
              _
          $region24: #{tpu_custom_call.1} parent=19 // pred_fallthru
            _
          %505 = vnop
        $region20: #{tpu_custom_call.1} parent=15 // pred_fallthru
          _
      $region16: #{tpu_custom_call.1} parent=5 // pred_fallthru
        _
      %p506 = scmp.le.s32.totalorder 1, %s10
      %p507 = scmp.lt.s32.totalorder %s10, 3
      %p508 = pnand %p506, %p507
      %p509 = pneg %p508
      // Predicated region
      $region69: #{tpu_custom_call.1} parent=5 // pred_check
        _
      $region70: #{tpu_custom_call.1} parent=5 // pred_check_branch
        %511 = sbr.rel (%p508) target = $region72
      $region71: #{tpu_custom_call.1} parent=5 // pred_region
        %s512 = ssub.s32 %s10, 1
        %s513 = sand.u32 %s23, 1
        %s514 = sand.u32 %s23, 1
        %s515 = smul.addr %s514, 1008
        %s516 = scalar_lea.vmem [#allocation2], %s515
        // Predicated region
        $region73: #{tpu_custom_call.1} parent=71 // pred_check
          %p517 = pneg %p36
        $region74: #{tpu_custom_call.1} parent=71 // pred_check_branch
          %519 = sbr.rel (%p517) target = $region76
        $region75: #{tpu_custom_call.1} parent=71 // pred_region
          _
        $region76: #{tpu_custom_call.1} parent=71 // pred_fallthru
          _
        %s520 = sand.u32 %s23, 1
        %s521 = sand.u32 %s23, 1
        %s522 = smul.addr %s521, 1008
        %s523 = scalar_lea.vmem [#allocation2], %s522
        %p524 = pneg %p36
        %p525 = pneg %p33
        %p526 = pneg %p62
        %p527 = pneg %p59
        %s528 = sand.u32 %s49, 1
        %s529 = sand.u32 %s49, 1
        %s530 = smul.addr %s529, 1008
        %s531 = scalar_lea.vmem [#allocation3], %s530
        %p532 = pneg %p88
        %p533 = pneg %p85
        %s534 = sand.u32 %s75, 1
        %s535 = sand.u32 %s75, 1
        %s536 = smul.addr %s535, 1008
        %s537 = scalar_lea.vmem [#allocation4], %s536
        %p538 = pneg %p114
        %p539 = pneg %p111
        %s540 = sand.u32 %s101, 1
        %s541 = sand.u32 %s101, 1
        %s542 = smul.addr %s541, 1008
        %s543 = scalar_lea.vmem [#allocation5], %s542
        %s544 = smul.u32 63, %s15
        %s545 = ssub.s32 125, %s544
        %p546 = scmp.lt.s32.totalorder %s545, 63
        %s547 = scalar_select %p546, %s545, 63
        %s548 = smul.u32 256, %s547
        %s549 = smul.u32 63, %s15
        %s550 = ssub.s32 125, %s549
        %p551 = scmp.lt.s32.totalorder %s550, 63
        %s552 = scalar_select %p551, %s550, 63
        %s553 = smul.u32 256, %s552
        %s554 = smul.u32 63, %s15
        %s555 = ssub.s32 125, %s554
        %p556 = scmp.lt.s32.totalorder %s555, 63
        %s557 = scalar_select %p556, %s555, 63
        %s558 = smul.u32 256, %s557
        %s559 = smul.u32 63, %s15
        %s560 = ssub.s32 125, %s559
        %p561 = scmp.lt.s32.totalorder %s560, 63
        %s562 = scalar_select %p561, %s560, 63
        %s563 = smul.u32 256, %s562
        %v564 = vld [vmem:[%s516] sm:$0xff]
        %v565 = vld [vmem:[%s516 + $0x8] sm:$0xff]
        %v566 = vld [vmem:[%s516 + $0x10] sm:$0xff]
        %v567 = vld [vmem:[%s516 + $0x18] sm:$0xff]
        %v568 = vld [vmem:[%s516 + $0x20] sm:$0xff]
        %v569 = vld [vmem:[%s516 + $0x28] sm:$0xff]
        %v570 = vld [vmem:[%s516 + $0x30] sm:$0xff]
        %v571 = vld [vmem:[%s516 + $0x38] sm:$0xff]
        %v572 = vld [vmem:[%s516 + $0x40] sm:$0xff]
        %v573 = vld [vmem:[%s516 + $0x48] sm:$0xff]
        %v574 = vld [vmem:[%s516 + $0x50] sm:$0xff]
        %v575 = vld [vmem:[%s516 + $0x58] sm:$0xff]
        %v576 = vld [vmem:[%s516 + $0x60] sm:$0xff]
        %v577 = vld [vmem:[%s516 + $0x68] sm:$0xff]
        %v578 = vld [vmem:[%s516 + $0x70] sm:$0xff]
        %v579 = vld [vmem:[%s516 + $0x78] sm:$0xff]
        %v580 = vld [vmem:[%s516 + $0x80] sm:$0xff]
        %v581 = vld [vmem:[%s516 + $0x88] sm:$0xff]
        %v582 = vld [vmem:[%s516 + $0x90] sm:$0xff]
        %v583 = vld [vmem:[%s516 + $0x98] sm:$0xff]
        %v584 = vld [vmem:[%s516 + $0xa0] sm:$0xff]
        %v585 = vld [vmem:[%s516 + $0xa8] sm:$0xff]
        %v586 = vld [vmem:[%s516 + $0xb0] sm:$0xff]
        %v587 = vld [vmem:[%s516 + $0xb8] sm:$0xff]
        %v588 = vld [vmem:[%s516 + $0xc0] sm:$0xff]
        %v589 = vld [vmem:[%s516 + $0xc8] sm:$0xff]
        %v590 = vld [vmem:[%s516 + $0xd0] sm:$0xff]
        %v591 = vld [vmem:[%s516 + $0xd8] sm:$0xff]
        %v592 = vld [vmem:[%s516 + $0xe0] sm:$0xff]
        %v593 = vld [vmem:[%s516 + $0xe8] sm:$0xff]
        %v594 = vld [vmem:[%s516 + $0xf0] sm:$0xff]
        %v595 = vld [vmem:[%s516 + $0xf8] sm:$0xff]
        %v596 = vld [vmem:[%s516 + $0x100] sm:$0xff]
        %v597 = vld [vmem:[%s516 + $0x108] sm:$0xff]
        %v598 = vld [vmem:[%s516 + $0x110] sm:$0xff]
        %v599 = vld [vmem:[%s516 + $0x118] sm:$0xff]
        %v600 = vld [vmem:[%s516 + $0x120] sm:$0xff]
        %v601 = vld [vmem:[%s516 + $0x128] sm:$0xff]
        %v602 = vld [vmem:[%s516 + $0x130] sm:$0xff]
        %v603 = vld [vmem:[%s516 + $0x138] sm:$0xff]
        %v604 = vld [vmem:[%s516 + $0x140] sm:$0xff]
        %v605 = vld [vmem:[%s516 + $0x148] sm:$0xff]
        %v606 = vld [vmem:[%s516 + $0x150] sm:$0xff]
        %v607 = vld [vmem:[%s516 + $0x158] sm:$0xff]
        %v608 = vld [vmem:[%s516 + $0x160] sm:$0xff]
        %v609 = vld [vmem:[%s516 + $0x168] sm:$0xff]
        %v610 = vld [vmem:[%s516 + $0x170] sm:$0xff]
        %v611 = vld [vmem:[%s516 + $0x178] sm:$0xff]
        %v612 = vld [vmem:[%s516 + $0x180] sm:$0xff]
        %v613 = vld [vmem:[%s516 + $0x188] sm:$0xff]
        %v614 = vld [vmem:[%s516 + $0x190] sm:$0xff]
        %v615 = vld [vmem:[%s516 + $0x198] sm:$0xff]
        %v616 = vld [vmem:[%s516 + $0x1a0] sm:$0xff]
        %v617 = vld [vmem:[%s516 + $0x1a8] sm:$0xff]
        %v618 = vld [vmem:[%s516 + $0x1b0] sm:$0xff]
        %v619 = vld [vmem:[%s516 + $0x1b8] sm:$0xff]
        %v620 = vld [vmem:[%s516 + $0x1c0] sm:$0xff]
        %v621 = vld [vmem:[%s516 + $0x1c8] sm:$0xff]
        %v622 = vld [vmem:[%s516 + $0x1d0] sm:$0xff]
        %v623 = vld [vmem:[%s516 + $0x1d8] sm:$0xff]
        %v624 = vld [vmem:[%s516 + $0x1e0] sm:$0xff]
        %v625 = vld [vmem:[%s516 + $0x1e8] sm:$0xff]
        %v626 = vld [vmem:[%s516 + $0x1f0] sm:$0xff]
        %v627 = vld [vmem:[%s516 + $0x1f8] sm:$0xff]
        %v628 = vld [vmem:[%s516 + $0x200] sm:$0xff]
        %v629 = vld [vmem:[%s516 + $0x208] sm:$0xff]
        %v630 = vld [vmem:[%s516 + $0x210] sm:$0xff]
        %v631 = vld [vmem:[%s516 + $0x218] sm:$0xff]
        %v632 = vld [vmem:[%s516 + $0x220] sm:$0xff]
        %v633 = vld [vmem:[%s516 + $0x228] sm:$0xff]
        %v634 = vld [vmem:[%s516 + $0x230] sm:$0xff]
        %v635 = vld [vmem:[%s516 + $0x238] sm:$0xff]
        %v636 = vld [vmem:[%s516 + $0x240] sm:$0xff]
        %v637 = vld [vmem:[%s516 + $0x248] sm:$0xff]
        %v638 = vld [vmem:[%s516 + $0x250] sm:$0xff]
        %v639 = vld [vmem:[%s516 + $0x258] sm:$0xff]
        %v640 = vld [vmem:[%s516 + $0x260] sm:$0xff]
        %v641 = vld [vmem:[%s516 + $0x268] sm:$0xff]
        %v642 = vld [vmem:[%s516 + $0x270] sm:$0xff]
        %v643 = vld [vmem:[%s516 + $0x278] sm:$0xff]
        %v644 = vld [vmem:[%s516 + $0x280] sm:$0xff]
        %v645 = vld [vmem:[%s516 + $0x288] sm:$0xff]
        %v646 = vld [vmem:[%s516 + $0x290] sm:$0xff]
        %v647 = vld [vmem:[%s516 + $0x298] sm:$0xff]
        %v648 = vld [vmem:[%s516 + $0x2a0] sm:$0xff]
        %v649 = vld [vmem:[%s516 + $0x2a8] sm:$0xff]
        %v650 = vld [vmem:[%s516 + $0x2b0] sm:$0xff]
        %v651 = vld [vmem:[%s516 + $0x2b8] sm:$0xff]
        %v652 = vld [vmem:[%s516 + $0x2c0] sm:$0xff]
        %v653 = vld [vmem:[%s516 + $0x2c8] sm:$0xff]
        %v654 = vld [vmem:[%s516 + $0x2d0] sm:$0xff]
        %v655 = vld [vmem:[%s516 + $0x2d8] sm:$0xff]
        %v656 = vld [vmem:[%s516 + $0x2e0] sm:$0xff]
        %v657 = vld [vmem:[%s516 + $0x2e8] sm:$0xff]
        %v658 = vld [vmem:[%s516 + $0x2f0] sm:$0xff]
        %v659 = vld [vmem:[%s516 + $0x2f8] sm:$0xff]
        %v660 = vld [vmem:[%s516 + $0x300] sm:$0xff]
        %v661 = vld [vmem:[%s516 + $0x308] sm:$0xff]
        %v662 = vld [vmem:[%s516 + $0x310] sm:$0xff]
        %v663 = vld [vmem:[%s516 + $0x318] sm:$0xff]
        %v664 = vld [vmem:[%s516 + $0x320] sm:$0xff]
        %v665 = vld [vmem:[%s516 + $0x328] sm:$0xff]
        %v666 = vld [vmem:[%s516 + $0x330] sm:$0xff]
        %v667 = vld [vmem:[%s516 + $0x338] sm:$0xff]
        %v668 = vld [vmem:[%s516 + $0x340] sm:$0xff]
        %v669 = vld [vmem:[%s516 + $0x348] sm:$0xff]
        %v670 = vld [vmem:[%s516 + $0x350] sm:$0xff]
        %v671 = vld [vmem:[%s516 + $0x358] sm:$0xff]
        %v672 = vld [vmem:[%s516 + $0x360] sm:$0xff]
        %v673 = vld [vmem:[%s516 + $0x368] sm:$0xff]
        %v674 = vld [vmem:[%s516 + $0x370] sm:$0xff]
        %v675 = vld [vmem:[%s516 + $0x378] sm:$0xff]
        %v676 = vld [vmem:[%s516 + $0x380] sm:$0xff]
        %v677 = vld [vmem:[%s516 + $0x388] sm:$0xff]
        %v678 = vld [vmem:[%s516 + $0x390] sm:$0xff]
        %v679 = vld [vmem:[%s516 + $0x398] sm:$0xff]
        %v680 = vld [vmem:[%s516 + $0x3a0] sm:$0xff]
        %v681 = vld [vmem:[%s516 + $0x3a8] sm:$0xff]
        %v682 = vld [vmem:[%s516 + $0x3b0] sm:$0xff]
        %v683 = vld [vmem:[%s516 + $0x3b8] sm:$0xff]
        %v684 = vld [vmem:[%s516 + $0x3c0] sm:$0xff]
        %v685 = vld [vmem:[%s516 + $0x3c8] sm:$0xff]
        %v686 = vld [vmem:[%s516 + $0x3d0] sm:$0xff]
        %v687 = vld [vmem:[%s516 + $0x3d8] sm:$0xff]
        %v688 = vld [vmem:[%s516 + $0x3e0] sm:$0xff]
        %v689 = vld [vmem:[%s516 + $0x3e8] sm:$0xff]
        %vm690 = vcmask 31744
        %691 = vst.msk [vmem:[%s531] sm:$0xff] %vm690, %v564
        %692 = vst.msk [vmem:[%s531 + $0x8] sm:$0xff] %vm690, %v565
        %693 = vst.msk [vmem:[%s531 + $0x10] sm:$0xff] %vm690, %v566
        %694 = vst.msk [vmem:[%s531 + $0x18] sm:$0xff] %vm690, %v567
        %695 = vst.msk [vmem:[%s531 + $0x20] sm:$0xff] %vm690, %v568
        %696 = vst.msk [vmem:[%s531 + $0x28] sm:$0xff] %vm690, %v569
        %697 = vst.msk [vmem:[%s531 + $0x30] sm:$0xff] %vm690, %v570
        %698 = vst.msk [vmem:[%s531 + $0x38] sm:$0xff] %vm690, %v571
        %699 = vst.msk [vmem:[%s531 + $0x40] sm:$0xff] %vm690, %v572
        %700 = vst.msk [vmem:[%s531 + $0x48] sm:$0xff] %vm690, %v573
        %701 = vst.msk [vmem:[%s531 + $0x50] sm:$0xff] %vm690, %v574
        %702 = vst.msk [vmem:[%s531 + $0x58] sm:$0xff] %vm690, %v575
        %703 = vst.msk [vmem:[%s531 + $0x60] sm:$0xff] %vm690, %v576
        %704 = vst.msk [vmem:[%s531 + $0x68] sm:$0xff] %vm690, %v577
        %705 = vst.msk [vmem:[%s531 + $0x70] sm:$0xff] %vm690, %v578
        %706 = vst.msk [vmem:[%s531 + $0x78] sm:$0xff] %vm690, %v579
        %707 = vst.msk [vmem:[%s531 + $0x80] sm:$0xff] %vm690, %v580
        %708 = vst.msk [vmem:[%s531 + $0x88] sm:$0xff] %vm690, %v581
        %709 = vst.msk [vmem:[%s531 + $0x90] sm:$0xff] %vm690, %v582
        %710 = vst.msk [vmem:[%s531 + $0x98] sm:$0xff] %vm690, %v583
        %711 = vst.msk [vmem:[%s531 + $0xa0] sm:$0xff] %vm690, %v584
        %712 = vst.msk [vmem:[%s531 + $0xa8] sm:$0xff] %vm690, %v585
        %713 = vst.msk [vmem:[%s531 + $0xb0] sm:$0xff] %vm690, %v586
        %714 = vst.msk [vmem:[%s531 + $0xb8] sm:$0xff] %vm690, %v587
        %715 = vst.msk [vmem:[%s531 + $0xc0] sm:$0xff] %vm690, %v588
        %716 = vst.msk [vmem:[%s531 + $0xc8] sm:$0xff] %vm690, %v589
        %717 = vst.msk [vmem:[%s531 + $0xd0] sm:$0xff] %vm690, %v590
        %718 = vst.msk [vmem:[%s531 + $0xd8] sm:$0xff] %vm690, %v591
        %719 = vst.msk [vmem:[%s531 + $0xe0] sm:$0xff] %vm690, %v592
        %720 = vst.msk [vmem:[%s531 + $0xe8] sm:$0xff] %vm690, %v593
        %721 = vst.msk [vmem:[%s531 + $0xf0] sm:$0xff] %vm690, %v594
        %722 = vst.msk [vmem:[%s531 + $0xf8] sm:$0xff] %vm690, %v595
        %723 = vst.msk [vmem:[%s531 + $0x100] sm:$0xff] %vm690, %v596
        %724 = vst.msk [vmem:[%s531 + $0x108] sm:$0xff] %vm690, %v597
        %725 = vst.msk [vmem:[%s531 + $0x110] sm:$0xff] %vm690, %v598
        %726 = vst.msk [vmem:[%s531 + $0x118] sm:$0xff] %vm690, %v599
        %727 = vst.msk [vmem:[%s531 + $0x120] sm:$0xff] %vm690, %v600
        %728 = vst.msk [vmem:[%s531 + $0x128] sm:$0xff] %vm690, %v601
        %729 = vst.msk [vmem:[%s531 + $0x130] sm:$0xff] %vm690, %v602
        %730 = vst.msk [vmem:[%s531 + $0x138] sm:$0xff] %vm690, %v603
        %731 = vst.msk [vmem:[%s531 + $0x140] sm:$0xff] %vm690, %v604
        %732 = vst.msk [vmem:[%s531 + $0x148] sm:$0xff] %vm690, %v605
        %733 = vst.msk [vmem:[%s531 + $0x150] sm:$0xff] %vm690, %v606
        %734 = vst.msk [vmem:[%s531 + $0x158] sm:$0xff] %vm690, %v607
        %735 = vst.msk [vmem:[%s531 + $0x160] sm:$0xff] %vm690, %v608
        %736 = vst.msk [vmem:[%s531 + $0x168] sm:$0xff] %vm690, %v609
        %737 = vst.msk [vmem:[%s531 + $0x170] sm:$0xff] %vm690, %v610
        %738 = vst.msk [vmem:[%s531 + $0x178] sm:$0xff] %vm690, %v611
        %739 = vst.msk [vmem:[%s531 + $0x180] sm:$0xff] %vm690, %v612
        %740 = vst.msk [vmem:[%s531 + $0x188] sm:$0xff] %vm690, %v613
        %741 = vst.msk [vmem:[%s531 + $0x190] sm:$0xff] %vm690, %v614
        %742 = vst.msk [vmem:[%s531 + $0x198] sm:$0xff] %vm690, %v615
        %743 = vst.msk [vmem:[%s531 + $0x1a0] sm:$0xff] %vm690, %v616
        %744 = vst.msk [vmem:[%s531 + $0x1a8] sm:$0xff] %vm690, %v617
        %745 = vst.msk [vmem:[%s531 + $0x1b0] sm:$0xff] %vm690, %v618
        %746 = vst.msk [vmem:[%s531 + $0x1b8] sm:$0xff] %vm690, %v619
        %747 = vst.msk [vmem:[%s531 + $0x1c0] sm:$0xff] %vm690, %v620
        %748 = vst.msk [vmem:[%s531 + $0x1c8] sm:$0xff] %vm690, %v621
        %749 = vst.msk [vmem:[%s531 + $0x1d0] sm:$0xff] %vm690, %v622
        %750 = vst.msk [vmem:[%s531 + $0x1d8] sm:$0xff] %vm690, %v623
        %751 = vst.msk [vmem:[%s531 + $0x1e0] sm:$0xff] %vm690, %v624
        %752 = vst.msk [vmem:[%s531 + $0x1e8] sm:$0xff] %vm690, %v625
        %753 = vst.msk [vmem:[%s531 + $0x1f0] sm:$0xff] %vm690, %v626
        %754 = vst.msk [vmem:[%s531 + $0x1f8] sm:$0xff] %vm690, %v627
        %755 = vst.msk [vmem:[%s531 + $0x200] sm:$0xff] %vm690, %v628
        %756 = vst.msk [vmem:[%s531 + $0x208] sm:$0xff] %vm690, %v629
        %757 = vst.msk [vmem:[%s531 + $0x210] sm:$0xff] %vm690, %v630
        %758 = vst.msk [vmem:[%s531 + $0x218] sm:$0xff] %vm690, %v631
        %759 = vst.msk [vmem:[%s531 + $0x220] sm:$0xff] %vm690, %v632
        %760 = vst.msk [vmem:[%s531 + $0x228] sm:$0xff] %vm690, %v633
        %761 = vst.msk [vmem:[%s531 + $0x230] sm:$0xff] %vm690, %v634
        %762 = vst.msk [vmem:[%s531 + $0x238] sm:$0xff] %vm690, %v635
        %763 = vst.msk [vmem:[%s531 + $0x240] sm:$0xff] %vm690, %v636
        %764 = vst.msk [vmem:[%s531 + $0x248] sm:$0xff] %vm690, %v637
        %765 = vst.msk [vmem:[%s531 + $0x250] sm:$0xff] %vm690, %v638
        %766 = vst.msk [vmem:[%s531 + $0x258] sm:$0xff] %vm690, %v639
        %767 = vst.msk [vmem:[%s531 + $0x260] sm:$0xff] %vm690, %v640
        %768 = vst.msk [vmem:[%s531 + $0x268] sm:$0xff] %vm690, %v641
        %769 = vst.msk [vmem:[%s531 + $0x270] sm:$0xff] %vm690, %v642
        %770 = vst.msk [vmem:[%s531 + $0x278] sm:$0xff] %vm690, %v643
        %771 = vst.msk [vmem:[%s531 + $0x280] sm:$0xff] %vm690, %v644
        %772 = vst.msk [vmem:[%s531 + $0x288] sm:$0xff] %vm690, %v645
        %773 = vst.msk [vmem:[%s531 + $0x290] sm:$0xff] %vm690, %v646
        %774 = vst.msk [vmem:[%s531 + $0x298] sm:$0xff] %vm690, %v647
        %775 = vst.msk [vmem:[%s531 + $0x2a0] sm:$0xff] %vm690, %v648
        %776 = vst.msk [vmem:[%s531 + $0x2a8] sm:$0xff] %vm690, %v649
        %777 = vst.msk [vmem:[%s531 + $0x2b0] sm:$0xff] %vm690, %v650
        %778 = vst.msk [vmem:[%s531 + $0x2b8] sm:$0xff] %vm690, %v651
        %779 = vst.msk [vmem:[%s531 + $0x2c0] sm:$0xff] %vm690, %v652
        %780 = vst.msk [vmem:[%s531 + $0x2c8] sm:$0xff] %vm690, %v653
        %781 = vst.msk [vmem:[%s531 + $0x2d0] sm:$0xff] %vm690, %v654
        %782 = vst.msk [vmem:[%s531 + $0x2d8] sm:$0xff] %vm690, %v655
        %783 = vst.msk [vmem:[%s531 + $0x2e0] sm:$0xff] %vm690, %v656
        %784 = vst.msk [vmem:[%s531 + $0x2e8] sm:$0xff] %vm690, %v657
        %785 = vst.msk [vmem:[%s531 + $0x2f0] sm:$0xff] %vm690, %v658
        %786 = vst.msk [vmem:[%s531 + $0x2f8] sm:$0xff] %vm690, %v659
        %787 = vst.msk [vmem:[%s531 + $0x300] sm:$0xff] %vm690, %v660
        %788 = vst.msk [vmem:[%s531 + $0x308] sm:$0xff] %vm690, %v661
        %789 = vst.msk [vmem:[%s531 + $0x310] sm:$0xff] %vm690, %v662
        %790 = vst.msk [vmem:[%s531 + $0x318] sm:$0xff] %vm690, %v663
        %791 = vst.msk [vmem:[%s531 + $0x320] sm:$0xff] %vm690, %v664
        %792 = vst.msk [vmem:[%s531 + $0x328] sm:$0xff] %vm690, %v665
        %793 = vst.msk [vmem:[%s531 + $0x330] sm:$0xff] %vm690, %v666
        %794 = vst.msk [vmem:[%s531 + $0x338] sm:$0xff] %vm690, %v667
        %795 = vst.msk [vmem:[%s531 + $0x340] sm:$0xff] %vm690, %v668
        %796 = vst.msk [vmem:[%s531 + $0x348] sm:$0xff] %vm690, %v669
        %797 = vst.msk [vmem:[%s531 + $0x350] sm:$0xff] %vm690, %v670
        %798 = vst.msk [vmem:[%s531 + $0x358] sm:$0xff] %vm690, %v671
        %799 = vst.msk [vmem:[%s531 + $0x360] sm:$0xff] %vm690, %v672
        %800 = vst.msk [vmem:[%s531 + $0x368] sm:$0xff] %vm690, %v673
        %801 = vst.msk [vmem:[%s531 + $0x370] sm:$0xff] %vm690, %v674
        %802 = vst.msk [vmem:[%s531 + $0x378] sm:$0xff] %vm690, %v675
        %803 = vst.msk [vmem:[%s531 + $0x380] sm:$0xff] %vm690, %v676
        %804 = vst.msk [vmem:[%s531 + $0x388] sm:$0xff] %vm690, %v677
        %805 = vst.msk [vmem:[%s531 + $0x390] sm:$0xff] %vm690, %v678
        %806 = vst.msk [vmem:[%s531 + $0x398] sm:$0xff] %vm690, %v679
        %807 = vst.msk [vmem:[%s531 + $0x3a0] sm:$0xff] %vm690, %v680
        %808 = vst.msk [vmem:[%s531 + $0x3a8] sm:$0xff] %vm690, %v681
        %809 = vst.msk [vmem:[%s531 + $0x3b0] sm:$0xff] %vm690, %v682
        %810 = vst.msk [vmem:[%s531 + $0x3b8] sm:$0xff] %vm690, %v683
        %811 = vst.msk [vmem:[%s531 + $0x3c0] sm:$0xff] %vm690, %v684
        %812 = vst.msk [vmem:[%s531 + $0x3c8] sm:$0xff] %vm690, %v685
        %813 = vst.msk [vmem:[%s531 + $0x3d0] sm:$0xff] %vm690, %v686
        %814 = vst.msk [vmem:[%s531 + $0x3d8] sm:$0xff] %vm690, %v687
        %815 = vst.msk [vmem:[%s531 + $0x3e0] sm:$0xff] %vm690, %v688
        %816 = vst.msk [vmem:[%s531 + $0x3e8] sm:$0xff] %vm690, %v689
        %943 = vrot.lane.b32.xlu0 %v564, 123
        %v944 = vpop.permute.xlu0 %943
        %945 = vrot.lane.b32.xlu0 %v565, 123
        %v946 = vpop.permute.xlu0 %945
        %947 = vrot.lane.b32.xlu0 %v566, 123
        %v948 = vpop.permute.xlu0 %947
        %949 = vrot.lane.b32.xlu0 %v567, 123
        %v950 = vpop.permute.xlu0 %949
        %951 = vrot.lane.b32.xlu0 %v568, 123
        %v952 = vpop.permute.xlu0 %951
        %953 = vrot.lane.b32.xlu0 %v569, 123
        %v954 = vpop.permute.xlu0 %953
        %955 = vrot.lane.b32.xlu0 %v570, 123
        %v956 = vpop.permute.xlu0 %955
        %957 = vrot.lane.b32.xlu0 %v571, 123
        %v958 = vpop.permute.xlu0 %957
        %959 = vrot.lane.b32.xlu0 %v572, 123
        %v960 = vpop.permute.xlu0 %959
        %961 = vrot.lane.b32.xlu0 %v573, 123
        %v962 = vpop.permute.xlu0 %961
        %963 = vrot.lane.b32.xlu0 %v574, 123
        %v964 = vpop.permute.xlu0 %963
        %965 = vrot.lane.b32.xlu0 %v575, 123
        %v966 = vpop.permute.xlu0 %965
        %967 = vrot.lane.b32.xlu0 %v576, 123
        %v968 = vpop.permute.xlu0 %967
        %969 = vrot.lane.b32.xlu0 %v577, 123
        %v970 = vpop.permute.xlu0 %969
        %971 = vrot.lane.b32.xlu0 %v578, 123
        %v972 = vpop.permute.xlu0 %971
        %973 = vrot.lane.b32.xlu0 %v579, 123
        %v974 = vpop.permute.xlu0 %973
        %975 = vrot.lane.b32.xlu0 %v580, 123
        %v976 = vpop.permute.xlu0 %975
        %977 = vrot.lane.b32.xlu0 %v581, 123
        %v978 = vpop.permute.xlu0 %977
        %979 = vrot.lane.b32.xlu0 %v582, 123
        %v980 = vpop.permute.xlu0 %979
        %981 = vrot.lane.b32.xlu0 %v583, 123
        %v982 = vpop.permute.xlu0 %981
        %983 = vrot.lane.b32.xlu0 %v584, 123
        %v984 = vpop.permute.xlu0 %983
        %985 = vrot.lane.b32.xlu0 %v585, 123
        %v986 = vpop.permute.xlu0 %985
        %987 = vrot.lane.b32.xlu0 %v586, 123
        %v988 = vpop.permute.xlu0 %987
        %989 = vrot.lane.b32.xlu0 %v587, 123
        %v990 = vpop.permute.xlu0 %989
        %991 = vrot.lane.b32.xlu0 %v588, 123
        %v992 = vpop.permute.xlu0 %991
        %993 = vrot.lane.b32.xlu0 %v589, 123
        %v994 = vpop.permute.xlu0 %993
        %995 = vrot.lane.b32.xlu0 %v590, 123
        %v996 = vpop.permute.xlu0 %995
        %997 = vrot.lane.b32.xlu0 %v591, 123
        %v998 = vpop.permute.xlu0 %997
        %999 = vrot.lane.b32.xlu0 %v592, 123
        %v1000 = vpop.permute.xlu0 %999
        %1001 = vrot.lane.b32.xlu0 %v593, 123
        %v1002 = vpop.permute.xlu0 %1001
        %1003 = vrot.lane.b32.xlu0 %v594, 123
        %v1004 = vpop.permute.xlu0 %1003
        %1005 = vrot.lane.b32.xlu0 %v595, 123
        %v1006 = vpop.permute.xlu0 %1005
        %1007 = vrot.lane.b32.xlu0 %v596, 123
        %v1008 = vpop.permute.xlu0 %1007
        %1009 = vrot.lane.b32.xlu0 %v597, 123
        %v1010 = vpop.permute.xlu0 %1009
        %1011 = vrot.lane.b32.xlu0 %v598, 123
        %v1012 = vpop.permute.xlu0 %1011
        %1013 = vrot.lane.b32.xlu0 %v599, 123
        %v1014 = vpop.permute.xlu0 %1013
        %1015 = vrot.lane.b32.xlu0 %v600, 123
        %v1016 = vpop.permute.xlu0 %1015
        %1017 = vrot.lane.b32.xlu0 %v601, 123
        %v1018 = vpop.permute.xlu0 %1017
        %1019 = vrot.lane.b32.xlu0 %v602, 123
        %v1020 = vpop.permute.xlu0 %1019
        %1021 = vrot.lane.b32.xlu0 %v603, 123
        %v1022 = vpop.permute.xlu0 %1021
        %1023 = vrot.lane.b32.xlu0 %v604, 123
        %v1024 = vpop.permute.xlu0 %1023
        %1025 = vrot.lane.b32.xlu0 %v605, 123
        %v1026 = vpop.permute.xlu0 %1025
        %1027 = vrot.lane.b32.xlu0 %v606, 123
        %v1028 = vpop.permute.xlu0 %1027
        %1029 = vrot.lane.b32.xlu0 %v607, 123
        %v1030 = vpop.permute.xlu0 %1029
        %1031 = vrot.lane.b32.xlu0 %v608, 123
        %v1032 = vpop.permute.xlu0 %1031
        %1033 = vrot.lane.b32.xlu0 %v609, 123
        %v1034 = vpop.permute.xlu0 %1033
        %1035 = vrot.lane.b32.xlu0 %v610, 123
        %v1036 = vpop.permute.xlu0 %1035
        %1037 = vrot.lane.b32.xlu0 %v611, 123
        %v1038 = vpop.permute.xlu0 %1037
        %1039 = vrot.lane.b32.xlu0 %v612, 123
        %v1040 = vpop.permute.xlu0 %1039
        %1041 = vrot.lane.b32.xlu0 %v613, 123
        %v1042 = vpop.permute.xlu0 %1041
        %1043 = vrot.lane.b32.xlu0 %v614, 123
        %v1044 = vpop.permute.xlu0 %1043
        %1045 = vrot.lane.b32.xlu0 %v615, 123
        %v1046 = vpop.permute.xlu0 %1045
        %1047 = vrot.lane.b32.xlu0 %v616, 123
        %v1048 = vpop.permute.xlu0 %1047
        %1049 = vrot.lane.b32.xlu0 %v617, 123
        %v1050 = vpop.permute.xlu0 %1049
        %1051 = vrot.lane.b32.xlu0 %v618, 123
        %v1052 = vpop.permute.xlu0 %1051
        %1053 = vrot.lane.b32.xlu0 %v619, 123
        %v1054 = vpop.permute.xlu0 %1053
        %1055 = vrot.lane.b32.xlu0 %v620, 123
        %v1056 = vpop.permute.xlu0 %1055
        %1057 = vrot.lane.b32.xlu0 %v621, 123
        %v1058 = vpop.permute.xlu0 %1057
        %1059 = vrot.lane.b32.xlu0 %v622, 123
        %v1060 = vpop.permute.xlu0 %1059
        %1061 = vrot.lane.b32.xlu0 %v623, 123
        %v1062 = vpop.permute.xlu0 %1061
        %1063 = vrot.lane.b32.xlu0 %v624, 123
        %v1064 = vpop.permute.xlu0 %1063
        %1065 = vrot.lane.b32.xlu0 %v625, 123
        %v1066 = vpop.permute.xlu0 %1065
        %1067 = vrot.lane.b32.xlu0 %v626, 123
        %v1068 = vpop.permute.xlu0 %1067
        %1069 = vrot.lane.b32.xlu0 %v627, 123
        %v1070 = vpop.permute.xlu0 %1069
        %1071 = vrot.lane.b32.xlu0 %v628, 123
        %v1072 = vpop.permute.xlu0 %1071
        %1073 = vrot.lane.b32.xlu0 %v629, 123
        %v1074 = vpop.permute.xlu0 %1073
        %1075 = vrot.lane.b32.xlu0 %v630, 123
        %v1076 = vpop.permute.xlu0 %1075
        %1077 = vrot.lane.b32.xlu0 %v631, 123
        %v1078 = vpop.permute.xlu0 %1077
        %1079 = vrot.lane.b32.xlu0 %v632, 123
        %v1080 = vpop.permute.xlu0 %1079
        %1081 = vrot.lane.b32.xlu0 %v633, 123
        %v1082 = vpop.permute.xlu0 %1081
        %1083 = vrot.lane.b32.xlu0 %v634, 123
        %v1084 = vpop.permute.xlu0 %1083
        %1085 = vrot.lane.b32.xlu0 %v635, 123
        %v1086 = vpop.permute.xlu0 %1085
        %1087 = vrot.lane.b32.xlu0 %v636, 123
        %v1088 = vpop.permute.xlu0 %1087
        %1089 = vrot.lane.b32.xlu0 %v637, 123
        %v1090 = vpop.permute.xlu0 %1089
        %1091 = vrot.lane.b32.xlu0 %v638, 123
        %v1092 = vpop.permute.xlu0 %1091
        %1093 = vrot.lane.b32.xlu0 %v639, 123
        %v1094 = vpop.permute.xlu0 %1093
        %1095 = vrot.lane.b32.xlu0 %v640, 123
        %v1096 = vpop.permute.xlu0 %1095
        %1097 = vrot.lane.b32.xlu0 %v641, 123
        %v1098 = vpop.permute.xlu0 %1097
        %1099 = vrot.lane.b32.xlu0 %v642, 123
        %v1100 = vpop.permute.xlu0 %1099
        %1101 = vrot.lane.b32.xlu0 %v643, 123
        %v1102 = vpop.permute.xlu0 %1101
        %1103 = vrot.lane.b32.xlu0 %v644, 123
        %v1104 = vpop.permute.xlu0 %1103
        %1105 = vrot.lane.b32.xlu0 %v645, 123
        %v1106 = vpop.permute.xlu0 %1105
        %1107 = vrot.lane.b32.xlu0 %v646, 123
        %v1108 = vpop.permute.xlu0 %1107
        %1109 = vrot.lane.b32.xlu0 %v647, 123
        %v1110 = vpop.permute.xlu0 %1109
        %1111 = vrot.lane.b32.xlu0 %v648, 123
        %v1112 = vpop.permute.xlu0 %1111
        %1113 = vrot.lane.b32.xlu0 %v649, 123
        %v1114 = vpop.permute.xlu0 %1113
        %1115 = vrot.lane.b32.xlu0 %v650, 123
        %v1116 = vpop.permute.xlu0 %1115
        %1117 = vrot.lane.b32.xlu0 %v651, 123
        %v1118 = vpop.permute.xlu0 %1117
        %1119 = vrot.lane.b32.xlu0 %v652, 123
        %v1120 = vpop.permute.xlu0 %1119
        %1121 = vrot.lane.b32.xlu0 %v653, 123
        %v1122 = vpop.permute.xlu0 %1121
        %1123 = vrot.lane.b32.xlu0 %v654, 123
        %v1124 = vpop.permute.xlu0 %1123
        %1125 = vrot.lane.b32.xlu0 %v655, 123
        %v1126 = vpop.permute.xlu0 %1125
        %1127 = vrot.lane.b32.xlu0 %v656, 123
        %v1128 = vpop.permute.xlu0 %1127
        %1129 = vrot.lane.b32.xlu0 %v657, 123
        %v1130 = vpop.permute.xlu0 %1129
        %1131 = vrot.lane.b32.xlu0 %v658, 123
        %v1132 = vpop.permute.xlu0 %1131
        %1133 = vrot.lane.b32.xlu0 %v659, 123
        %v1134 = vpop.permute.xlu0 %1133
        %1135 = vrot.lane.b32.xlu0 %v660, 123
        %v1136 = vpop.permute.xlu0 %1135
        %1137 = vrot.lane.b32.xlu0 %v661, 123
        %v1138 = vpop.permute.xlu0 %1137
        %1139 = vrot.lane.b32.xlu0 %v662, 123
        %v1140 = vpop.permute.xlu0 %1139
        %1141 = vrot.lane.b32.xlu0 %v663, 123
        %v1142 = vpop.permute.xlu0 %1141
        %1143 = vrot.lane.b32.xlu0 %v664, 123
        %v1144 = vpop.permute.xlu0 %1143
        %1145 = vrot.lane.b32.xlu0 %v665, 123
        %v1146 = vpop.permute.xlu0 %1145
        %1147 = vrot.lane.b32.xlu0 %v666, 123
        %v1148 = vpop.permute.xlu0 %1147
        %1149 = vrot.lane.b32.xlu0 %v667, 123
        %v1150 = vpop.permute.xlu0 %1149
        %1151 = vrot.lane.b32.xlu0 %v668, 123
        %v1152 = vpop.permute.xlu0 %1151
        %1153 = vrot.lane.b32.xlu0 %v669, 123
        %v1154 = vpop.permute.xlu0 %1153
        %1155 = vrot.lane.b32.xlu0 %v670, 123
        %v1156 = vpop.permute.xlu0 %1155
        %1157 = vrot.lane.b32.xlu0 %v671, 123
        %v1158 = vpop.permute.xlu0 %1157
        %1159 = vrot.lane.b32.xlu0 %v672, 123
        %v1160 = vpop.permute.xlu0 %1159
        %1161 = vrot.lane.b32.xlu0 %v673, 123
        %v1162 = vpop.permute.xlu0 %1161
        %1163 = vrot.lane.b32.xlu0 %v674, 123
        %v1164 = vpop.permute.xlu0 %1163
        %1165 = vrot.lane.b32.xlu0 %v675, 123
        %v1166 = vpop.permute.xlu0 %1165
        %1167 = vrot.lane.b32.xlu0 %v676, 123
        %v1168 = vpop.permute.xlu0 %1167
        %1169 = vrot.lane.b32.xlu0 %v677, 123
        %v1170 = vpop.permute.xlu0 %1169
        %1171 = vrot.lane.b32.xlu0 %v678, 123
        %v1172 = vpop.permute.xlu0 %1171
        %1173 = vrot.lane.b32.xlu0 %v679, 123
        %v1174 = vpop.permute.xlu0 %1173
        %1175 = vrot.lane.b32.xlu0 %v680, 123
        %v1176 = vpop.permute.xlu0 %1175
        %1177 = vrot.lane.b32.xlu0 %v681, 123
        %v1178 = vpop.permute.xlu0 %1177
        %1179 = vrot.lane.b32.xlu0 %v682, 123
        %v1180 = vpop.permute.xlu0 %1179
        %1181 = vrot.lane.b32.xlu0 %v683, 123
        %v1182 = vpop.permute.xlu0 %1181
        %1183 = vrot.lane.b32.xlu0 %v684, 123
        %v1184 = vpop.permute.xlu0 %1183
        %1185 = vrot.lane.b32.xlu0 %v685, 123
        %v1186 = vpop.permute.xlu0 %1185
        %1187 = vrot.lane.b32.xlu0 %v686, 123
        %v1188 = vpop.permute.xlu0 %1187
        %1189 = vrot.lane.b32.xlu0 %v687, 123
        %v1190 = vpop.permute.xlu0 %1189
        %1191 = vrot.lane.b32.xlu0 %v688, 123
        %v1192 = vpop.permute.xlu0 %1191
        %1193 = vrot.lane.b32.xlu0 %v689, 123
        %v1194 = vpop.permute.xlu0 %1193
        %vm1321 = vcmask 80896
        %1322 = vst.msk [vmem:[%s543] sm:$0xff] %vm1321, %v944
        %1323 = vst.msk [vmem:[%s543 + $0x8] sm:$0xff] %vm1321, %v946
        %1324 = vst.msk [vmem:[%s543 + $0x10] sm:$0xff] %vm1321, %v948
        %1325 = vst.msk [vmem:[%s543 + $0x18] sm:$0xff] %vm1321, %v950
        %1326 = vst.msk [vmem:[%s543 + $0x20] sm:$0xff] %vm1321, %v952
        %1327 = vst.msk [vmem:[%s543 + $0x28] sm:$0xff] %vm1321, %v954
        %1328 = vst.msk [vmem:[%s543 + $0x30] sm:$0xff] %vm1321, %v956
        %1329 = vst.msk [vmem:[%s543 + $0x38] sm:$0xff] %vm1321, %v958
        %1330 = vst.msk [vmem:[%s543 + $0x40] sm:$0xff] %vm1321, %v960
        %1331 = vst.msk [vmem:[%s543 + $0x48] sm:$0xff] %vm1321, %v962
        %1332 = vst.msk [vmem:[%s543 + $0x50] sm:$0xff] %vm1321, %v964
        %1333 = vst.msk [vmem:[%s543 + $0x58] sm:$0xff] %vm1321, %v966
        %1334 = vst.msk [vmem:[%s543 + $0x60] sm:$0xff] %vm1321, %v968
        %1335 = vst.msk [vmem:[%s543 + $0x68] sm:$0xff] %vm1321, %v970
        %1336 = vst.msk [vmem:[%s543 + $0x70] sm:$0xff] %vm1321, %v972
        %1337 = vst.msk [vmem:[%s543 + $0x78] sm:$0xff] %vm1321, %v974
        %1338 = vst.msk [vmem:[%s543 + $0x80] sm:$0xff] %vm1321, %v976
        %1339 = vst.msk [vmem:[%s543 + $0x88] sm:$0xff] %vm1321, %v978
        %1340 = vst.msk [vmem:[%s543 + $0x90] sm:$0xff] %vm1321, %v980
        %1341 = vst.msk [vmem:[%s543 + $0x98] sm:$0xff] %vm1321, %v982
        %1342 = vst.msk [vmem:[%s543 + $0xa0] sm:$0xff] %vm1321, %v984
        %1343 = vst.msk [vmem:[%s543 + $0xa8] sm:$0xff] %vm1321, %v986
        %1344 = vst.msk [vmem:[%s543 + $0xb0] sm:$0xff] %vm1321, %v988
        %1345 = vst.msk [vmem:[%s543 + $0xb8] sm:$0xff] %vm1321, %v990
        %1346 = vst.msk [vmem:[%s543 + $0xc0] sm:$0xff] %vm1321, %v992
        %1347 = vst.msk [vmem:[%s543 + $0xc8] sm:$0xff] %vm1321, %v994
        %1348 = vst.msk [vmem:[%s543 + $0xd0] sm:$0xff] %vm1321, %v996
        %1349 = vst.msk [vmem:[%s543 + $0xd8] sm:$0xff] %vm1321, %v998
        %1350 = vst.msk [vmem:[%s543 + $0xe0] sm:$0xff] %vm1321, %v1000
        %1351 = vst.msk [vmem:[%s543 + $0xe8] sm:$0xff] %vm1321, %v1002
        %1352 = vst.msk [vmem:[%s543 + $0xf0] sm:$0xff] %vm1321, %v1004
        %1353 = vst.msk [vmem:[%s543 + $0xf8] sm:$0xff] %vm1321, %v1006
        %1354 = vst.msk [vmem:[%s543 + $0x100] sm:$0xff] %vm1321, %v1008
        %1355 = vst.msk [vmem:[%s543 + $0x108] sm:$0xff] %vm1321, %v1010
        %1356 = vst.msk [vmem:[%s543 + $0x110] sm:$0xff] %vm1321, %v1012
        %1357 = vst.msk [vmem:[%s543 + $0x118] sm:$0xff] %vm1321, %v1014
        %1358 = vst.msk [vmem:[%s543 + $0x120] sm:$0xff] %vm1321, %v1016
        %1359 = vst.msk [vmem:[%s543 + $0x128] sm:$0xff] %vm1321, %v1018
        %1360 = vst.msk [vmem:[%s543 + $0x130] sm:$0xff] %vm1321, %v1020
        %1361 = vst.msk [vmem:[%s543 + $0x138] sm:$0xff] %vm1321, %v1022
        %1362 = vst.msk [vmem:[%s543 + $0x140] sm:$0xff] %vm1321, %v1024
        %1363 = vst.msk [vmem:[%s543 + $0x148] sm:$0xff] %vm1321, %v1026
        %1364 = vst.msk [vmem:[%s543 + $0x150] sm:$0xff] %vm1321, %v1028
        %1365 = vst.msk [vmem:[%s543 + $0x158] sm:$0xff] %vm1321, %v1030
        %1366 = vst.msk [vmem:[%s543 + $0x160] sm:$0xff] %vm1321, %v1032
        %1367 = vst.msk [vmem:[%s543 + $0x168] sm:$0xff] %vm1321, %v1034
        %1368 = vst.msk [vmem:[%s543 + $0x170] sm:$0xff] %vm1321, %v1036
        %1369 = vst.msk [vmem:[%s543 + $0x178] sm:$0xff] %vm1321, %v1038
        %1370 = vst.msk [vmem:[%s543 + $0x180] sm:$0xff] %vm1321, %v1040
        %1371 = vst.msk [vmem:[%s543 + $0x188] sm:$0xff] %vm1321, %v1042
        %1372 = vst.msk [vmem:[%s543 + $0x190] sm:$0xff] %vm1321, %v1044
        %1373 = vst.msk [vmem:[%s543 + $0x198] sm:$0xff] %vm1321, %v1046
        %1374 = vst.msk [vmem:[%s543 + $0x1a0] sm:$0xff] %vm1321, %v1048
        %1375 = vst.msk [vmem:[%s543 + $0x1a8] sm:$0xff] %vm1321, %v1050
        %1376 = vst.msk [vmem:[%s543 + $0x1b0] sm:$0xff] %vm1321, %v1052
        %1377 = vst.msk [vmem:[%s543 + $0x1b8] sm:$0xff] %vm1321, %v1054
        %1378 = vst.msk [vmem:[%s543 + $0x1c0] sm:$0xff] %vm1321, %v1056
        %1379 = vst.msk [vmem:[%s543 + $0x1c8] sm:$0xff] %vm1321, %v1058
        %1380 = vst.msk [vmem:[%s543 + $0x1d0] sm:$0xff] %vm1321, %v1060
        %1381 = vst.msk [vmem:[%s543 + $0x1d8] sm:$0xff] %vm1321, %v1062
        %1382 = vst.msk [vmem:[%s543 + $0x1e0] sm:$0xff] %vm1321, %v1064
        %1383 = vst.msk [vmem:[%s543 + $0x1e8] sm:$0xff] %vm1321, %v1066
        %1384 = vst.msk [vmem:[%s543 + $0x1f0] sm:$0xff] %vm1321, %v1068
        %1385 = vst.msk [vmem:[%s543 + $0x1f8] sm:$0xff] %vm1321, %v1070
        %1386 = vst.msk [vmem:[%s543 + $0x200] sm:$0xff] %vm1321, %v1072
        %1387 = vst.msk [vmem:[%s543 + $0x208] sm:$0xff] %vm1321, %v1074
        %1388 = vst.msk [vmem:[%s543 + $0x210] sm:$0xff] %vm1321, %v1076
        %1389 = vst.msk [vmem:[%s543 + $0x218] sm:$0xff] %vm1321, %v1078
        %1390 = vst.msk [vmem:[%s543 + $0x220] sm:$0xff] %vm1321, %v1080
        %1391 = vst.msk [vmem:[%s543 + $0x228] sm:$0xff] %vm1321, %v1082
        %1392 = vst.msk [vmem:[%s543 + $0x230] sm:$0xff] %vm1321, %v1084
        %1393 = vst.msk [vmem:[%s543 + $0x238] sm:$0xff] %vm1321, %v1086
        %1394 = vst.msk [vmem:[%s543 + $0x240] sm:$0xff] %vm1321, %v1088
        %1395 = vst.msk [vmem:[%s543 + $0x248] sm:$0xff] %vm1321, %v1090
        %1396 = vst.msk [vmem:[%s543 + $0x250] sm:$0xff] %vm1321, %v1092
        %1397 = vst.msk [vmem:[%s543 + $0x258] sm:$0xff] %vm1321, %v1094
        %1398 = vst.msk [vmem:[%s543 + $0x260] sm:$0xff] %vm1321, %v1096
        %1399 = vst.msk [vmem:[%s543 + $0x268] sm:$0xff] %vm1321, %v1098
        %1400 = vst.msk [vmem:[%s543 + $0x270] sm:$0xff] %vm1321, %v1100
        %1401 = vst.msk [vmem:[%s543 + $0x278] sm:$0xff] %vm1321, %v1102
        %1402 = vst.msk [vmem:[%s543 + $0x280] sm:$0xff] %vm1321, %v1104
        %1403 = vst.msk [vmem:[%s543 + $0x288] sm:$0xff] %vm1321, %v1106
        %1404 = vst.msk [vmem:[%s543 + $0x290] sm:$0xff] %vm1321, %v1108
        %1405 = vst.msk [vmem:[%s543 + $0x298] sm:$0xff] %vm1321, %v1110
        %1406 = vst.msk [vmem:[%s543 + $0x2a0] sm:$0xff] %vm1321, %v1112
        %1407 = vst.msk [vmem:[%s543 + $0x2a8] sm:$0xff] %vm1321, %v1114
        %1408 = vst.msk [vmem:[%s543 + $0x2b0] sm:$0xff] %vm1321, %v1116
        %1409 = vst.msk [vmem:[%s543 + $0x2b8] sm:$0xff] %vm1321, %v1118
        %1410 = vst.msk [vmem:[%s543 + $0x2c0] sm:$0xff] %vm1321, %v1120
        %1411 = vst.msk [vmem:[%s543 + $0x2c8] sm:$0xff] %vm1321, %v1122
        %1412 = vst.msk [vmem:[%s543 + $0x2d0] sm:$0xff] %vm1321, %v1124
        %1413 = vst.msk [vmem:[%s543 + $0x2d8] sm:$0xff] %vm1321, %v1126
        %1414 = vst.msk [vmem:[%s543 + $0x2e0] sm:$0xff] %vm1321, %v1128
        %1415 = vst.msk [vmem:[%s543 + $0x2e8] sm:$0xff] %vm1321, %v1130
        %1416 = vst.msk [vmem:[%s543 + $0x2f0] sm:$0xff] %vm1321, %v1132
        %1417 = vst.msk [vmem:[%s543 + $0x2f8] sm:$0xff] %vm1321, %v1134
        %1418 = vst.msk [vmem:[%s543 + $0x300] sm:$0xff] %vm1321, %v1136
        %1419 = vst.msk [vmem:[%s543 + $0x308] sm:$0xff] %vm1321, %v1138
        %1420 = vst.msk [vmem:[%s543 + $0x310] sm:$0xff] %vm1321, %v1140
        %1421 = vst.msk [vmem:[%s543 + $0x318] sm:$0xff] %vm1321, %v1142
        %1422 = vst.msk [vmem:[%s543 + $0x320] sm:$0xff] %vm1321, %v1144
        %1423 = vst.msk [vmem:[%s543 + $0x328] sm:$0xff] %vm1321, %v1146
        %1424 = vst.msk [vmem:[%s543 + $0x330] sm:$0xff] %vm1321, %v1148
        %1425 = vst.msk [vmem:[%s543 + $0x338] sm:$0xff] %vm1321, %v1150
        %1426 = vst.msk [vmem:[%s543 + $0x340] sm:$0xff] %vm1321, %v1152
        %1427 = vst.msk [vmem:[%s543 + $0x348] sm:$0xff] %vm1321, %v1154
        %1428 = vst.msk [vmem:[%s543 + $0x350] sm:$0xff] %vm1321, %v1156
        %1429 = vst.msk [vmem:[%s543 + $0x358] sm:$0xff] %vm1321, %v1158
        %1430 = vst.msk [vmem:[%s543 + $0x360] sm:$0xff] %vm1321, %v1160
        %1431 = vst.msk [vmem:[%s543 + $0x368] sm:$0xff] %vm1321, %v1162
        %1432 = vst.msk [vmem:[%s543 + $0x370] sm:$0xff] %vm1321, %v1164
        %1433 = vst.msk [vmem:[%s543 + $0x378] sm:$0xff] %vm1321, %v1166
        %1434 = vst.msk [vmem:[%s543 + $0x380] sm:$0xff] %vm1321, %v1168
        %1435 = vst.msk [vmem:[%s543 + $0x388] sm:$0xff] %vm1321, %v1170
        %1436 = vst.msk [vmem:[%s543 + $0x390] sm:$0xff] %vm1321, %v1172
        %1437 = vst.msk [vmem:[%s543 + $0x398] sm:$0xff] %vm1321, %v1174
        %1438 = vst.msk [vmem:[%s543 + $0x3a0] sm:$0xff] %vm1321, %v1176
        %1439 = vst.msk [vmem:[%s543 + $0x3a8] sm:$0xff] %vm1321, %v1178
        %1440 = vst.msk [vmem:[%s543 + $0x3b0] sm:$0xff] %vm1321, %v1180
        %1441 = vst.msk [vmem:[%s543 + $0x3b8] sm:$0xff] %vm1321, %v1182
        %1442 = vst.msk [vmem:[%s543 + $0x3c0] sm:$0xff] %vm1321, %v1184
        %1443 = vst.msk [vmem:[%s543 + $0x3c8] sm:$0xff] %vm1321, %v1186
        %1444 = vst.msk [vmem:[%s543 + $0x3d0] sm:$0xff] %vm1321, %v1188
        %1445 = vst.msk [vmem:[%s543 + $0x3d8] sm:$0xff] %vm1321, %v1190
        %1446 = vst.msk [vmem:[%s543 + $0x3e0] sm:$0xff] %vm1321, %v1192
        %1447 = vst.msk [vmem:[%s543 + $0x3e8] sm:$0xff] %vm1321, %v1194
        %1448 = vset.pattern.permute.xlu0 4
        %1449 = vperm.xlu0 %1448, %v564
        %v1450 = vpop.permute.xlu0 %1449
        %1452 = vset.pattern.permute.xlu0 4
        %1453 = vperm.xlu0 %1452, %v565
        %v1454 = vpop.permute.xlu0 %1453
        %1456 = vset.pattern.permute.xlu0 4
        %1457 = vperm.xlu0 %1456, %v566
        %v1458 = vpop.permute.xlu0 %1457
        %1460 = vset.pattern.permute.xlu0 4
        %1461 = vperm.xlu0 %1460, %v567
        %v1462 = vpop.permute.xlu0 %1461
        %1464 = vset.pattern.permute.xlu0 4
        %1465 = vperm.xlu0 %1464, %v568
        %v1466 = vpop.permute.xlu0 %1465
        %1468 = vset.pattern.permute.xlu0 4
        %1469 = vperm.xlu0 %1468, %v569
        %v1470 = vpop.permute.xlu0 %1469
        %1472 = vset.pattern.permute.xlu0 4
        %1473 = vperm.xlu0 %1472, %v570
        %v1474 = vpop.permute.xlu0 %1473
        %1476 = vset.pattern.permute.xlu0 4
        %1477 = vperm.xlu0 %1476, %v571
        %v1478 = vpop.permute.xlu0 %1477
        %1480 = vset.pattern.permute.xlu0 4
        %1481 = vperm.xlu0 %1480, %v572
        %v1482 = vpop.permute.xlu0 %1481
        %1484 = vset.pattern.permute.xlu0 4
        %1485 = vperm.xlu0 %1484, %v573
        %v1486 = vpop.permute.xlu0 %1485
        %1488 = vset.pattern.permute.xlu0 4
        %1489 = vperm.xlu0 %1488, %v574
        %v1490 = vpop.permute.xlu0 %1489
        %1492 = vset.pattern.permute.xlu0 4
        %1493 = vperm.xlu0 %1492, %v575
        %v1494 = vpop.permute.xlu0 %1493
        %1496 = vset.pattern.permute.xlu0 4
        %1497 = vperm.xlu0 %1496, %v576
        %v1498 = vpop.permute.xlu0 %1497
        %1500 = vset.pattern.permute.xlu0 4
        %1501 = vperm.xlu0 %1500, %v577
        %v1502 = vpop.permute.xlu0 %1501
        %1504 = vset.pattern.permute.xlu0 4
        %1505 = vperm.xlu0 %1504, %v578
        %v1506 = vpop.permute.xlu0 %1505
        %1508 = vset.pattern.permute.xlu0 4
        %1509 = vperm.xlu0 %1508, %v579
        %v1510 = vpop.permute.xlu0 %1509
        %1512 = vset.pattern.permute.xlu0 4
        %1513 = vperm.xlu0 %1512, %v580
        %v1514 = vpop.permute.xlu0 %1513
        %1516 = vset.pattern.permute.xlu0 4
        %1517 = vperm.xlu0 %1516, %v581
        %v1518 = vpop.permute.xlu0 %1517
        %1520 = vset.pattern.permute.xlu0 4
        %1521 = vperm.xlu0 %1520, %v582
        %v1522 = vpop.permute.xlu0 %1521
        %1524 = vset.pattern.permute.xlu0 4
        %1525 = vperm.xlu0 %1524, %v583
        %v1526 = vpop.permute.xlu0 %1525
        %1528 = vset.pattern.permute.xlu0 4
        %1529 = vperm.xlu0 %1528, %v584
        %v1530 = vpop.permute.xlu0 %1529
        %1532 = vset.pattern.permute.xlu0 4
        %1533 = vperm.xlu0 %1532, %v585
        %v1534 = vpop.permute.xlu0 %1533
        %1536 = vset.pattern.permute.xlu0 4
        %1537 = vperm.xlu0 %1536, %v586
        %v1538 = vpop.permute.xlu0 %1537
        %1540 = vset.pattern.permute.xlu0 4
        %1541 = vperm.xlu0 %1540, %v587
        %v1542 = vpop.permute.xlu0 %1541
        %1544 = vset.pattern.permute.xlu0 4
        %1545 = vperm.xlu0 %1544, %v588
        %v1546 = vpop.permute.xlu0 %1545
        %1548 = vset.pattern.permute.xlu0 4
        %1549 = vperm.xlu0 %1548, %v589
        %v1550 = vpop.permute.xlu0 %1549
        %1552 = vset.pattern.permute.xlu0 4
        %1553 = vperm.xlu0 %1552, %v590
        %v1554 = vpop.permute.xlu0 %1553
        %1556 = vset.pattern.permute.xlu0 4
        %1557 = vperm.xlu0 %1556, %v591
        %v1558 = vpop.permute.xlu0 %1557
        %1560 = vset.pattern.permute.xlu0 4
        %1561 = vperm.xlu0 %1560, %v592
        %v1562 = vpop.permute.xlu0 %1561
        %1564 = vset.pattern.permute.xlu0 4
        %1565 = vperm.xlu0 %1564, %v593
        %v1566 = vpop.permute.xlu0 %1565
        %1568 = vset.pattern.permute.xlu0 4
        %1569 = vperm.xlu0 %1568, %v594
        %v1570 = vpop.permute.xlu0 %1569
        %1572 = vset.pattern.permute.xlu0 4
        %1573 = vperm.xlu0 %1572, %v595
        %v1574 = vpop.permute.xlu0 %1573
        %1576 = vset.pattern.permute.xlu0 4
        %1577 = vperm.xlu0 %1576, %v596
        %v1578 = vpop.permute.xlu0 %1577
        %1580 = vset.pattern.permute.xlu0 4
        %1581 = vperm.xlu0 %1580, %v597
        %v1582 = vpop.permute.xlu0 %1581
        %1584 = vset.pattern.permute.xlu0 4
        %1585 = vperm.xlu0 %1584, %v598
        %v1586 = vpop.permute.xlu0 %1585
        %1588 = vset.pattern.permute.xlu0 4
        %1589 = vperm.xlu0 %1588, %v599
        %v1590 = vpop.permute.xlu0 %1589
        %1592 = vset.pattern.permute.xlu0 4
        %1593 = vperm.xlu0 %1592, %v600
        %v1594 = vpop.permute.xlu0 %1593
        %1596 = vset.pattern.permute.xlu0 4
        %1597 = vperm.xlu0 %1596, %v601
        %v1598 = vpop.permute.xlu0 %1597
        %1600 = vset.pattern.permute.xlu0 4
        %1601 = vperm.xlu0 %1600, %v602
        %v1602 = vpop.permute.xlu0 %1601
        %1604 = vset.pattern.permute.xlu0 4
        %1605 = vperm.xlu0 %1604, %v603
        %v1606 = vpop.permute.xlu0 %1605
        %1608 = vset.pattern.permute.xlu0 4
        %1609 = vperm.xlu0 %1608, %v604
        %v1610 = vpop.permute.xlu0 %1609
        %1612 = vset.pattern.permute.xlu0 4
        %1613 = vperm.xlu0 %1612, %v605
        %v1614 = vpop.permute.xlu0 %1613
        %1616 = vset.pattern.permute.xlu0 4
        %1617 = vperm.xlu0 %1616, %v606
        %v1618 = vpop.permute.xlu0 %1617
        %1620 = vset.pattern.permute.xlu0 4
        %1621 = vperm.xlu0 %1620, %v607
        %v1622 = vpop.permute.xlu0 %1621
        %1624 = vset.pattern.permute.xlu0 4
        %1625 = vperm.xlu0 %1624, %v608
        %v1626 = vpop.permute.xlu0 %1625
        %1628 = vset.pattern.permute.xlu0 4
        %1629 = vperm.xlu0 %1628, %v609
        %v1630 = vpop.permute.xlu0 %1629
        %1632 = vset.pattern.permute.xlu0 4
        %1633 = vperm.xlu0 %1632, %v610
        %v1634 = vpop.permute.xlu0 %1633
        %1636 = vset.pattern.permute.xlu0 4
        %1637 = vperm.xlu0 %1636, %v611
        %v1638 = vpop.permute.xlu0 %1637
        %1640 = vset.pattern.permute.xlu0 4
        %1641 = vperm.xlu0 %1640, %v612
        %v1642 = vpop.permute.xlu0 %1641
        %1644 = vset.pattern.permute.xlu0 4
        %1645 = vperm.xlu0 %1644, %v613
        %v1646 = vpop.permute.xlu0 %1645
        %1648 = vset.pattern.permute.xlu0 4
        %1649 = vperm.xlu0 %1648, %v614
        %v1650 = vpop.permute.xlu0 %1649
        %1652 = vset.pattern.permute.xlu0 4
        %1653 = vperm.xlu0 %1652, %v615
        %v1654 = vpop.permute.xlu0 %1653
        %1656 = vset.pattern.permute.xlu0 4
        %1657 = vperm.xlu0 %1656, %v616
        %v1658 = vpop.permute.xlu0 %1657
        %1660 = vset.pattern.permute.xlu0 4
        %1661 = vperm.xlu0 %1660, %v617
        %v1662 = vpop.permute.xlu0 %1661
        %1664 = vset.pattern.permute.xlu0 4
        %1665 = vperm.xlu0 %1664, %v618
        %v1666 = vpop.permute.xlu0 %1665
        %1668 = vset.pattern.permute.xlu0 4
        %1669 = vperm.xlu0 %1668, %v619
        %v1670 = vpop.permute.xlu0 %1669
        %1672 = vset.pattern.permute.xlu0 4
        %1673 = vperm.xlu0 %1672, %v620
        %v1674 = vpop.permute.xlu0 %1673
        %1676 = vset.pattern.permute.xlu0 4
        %1677 = vperm.xlu0 %1676, %v621
        %v1678 = vpop.permute.xlu0 %1677
        %1680 = vset.pattern.permute.xlu0 4
        %1681 = vperm.xlu0 %1680, %v622
        %v1682 = vpop.permute.xlu0 %1681
        %1684 = vset.pattern.permute.xlu0 4
        %1685 = vperm.xlu0 %1684, %v623
        %v1686 = vpop.permute.xlu0 %1685
        %1688 = vset.pattern.permute.xlu0 4
        %1689 = vperm.xlu0 %1688, %v624
        %v1690 = vpop.permute.xlu0 %1689
        %1692 = vset.pattern.permute.xlu0 4
        %1693 = vperm.xlu0 %1692, %v625
        %v1694 = vpop.permute.xlu0 %1693
        %1696 = vset.pattern.permute.xlu0 4
        %1697 = vperm.xlu0 %1696, %v626
        %v1698 = vpop.permute.xlu0 %1697
        %1700 = vset.pattern.permute.xlu0 4
        %1701 = vperm.xlu0 %1700, %v627
        %v1702 = vpop.permute.xlu0 %1701
        %1704 = vset.pattern.permute.xlu0 4
        %1705 = vperm.xlu0 %1704, %v628
        %v1706 = vpop.permute.xlu0 %1705
        %1708 = vset.pattern.permute.xlu0 4
        %1709 = vperm.xlu0 %1708, %v629
        %v1710 = vpop.permute.xlu0 %1709
        %1712 = vset.pattern.permute.xlu0 4
        %1713 = vperm.xlu0 %1712, %v630
        %v1714 = vpop.permute.xlu0 %1713
        %1716 = vset.pattern.permute.xlu0 4
        %1717 = vperm.xlu0 %1716, %v631
        %v1718 = vpop.permute.xlu0 %1717
        %1720 = vset.pattern.permute.xlu0 4
        %1721 = vperm.xlu0 %1720, %v632
        %v1722 = vpop.permute.xlu0 %1721
        %1724 = vset.pattern.permute.xlu0 4
        %1725 = vperm.xlu0 %1724, %v633
        %v1726 = vpop.permute.xlu0 %1725
        %1728 = vset.pattern.permute.xlu0 4
        %1729 = vperm.xlu0 %1728, %v634
        %v1730 = vpop.permute.xlu0 %1729
        %1732 = vset.pattern.permute.xlu0 4
        %1733 = vperm.xlu0 %1732, %v635
        %v1734 = vpop.permute.xlu0 %1733
        %1736 = vset.pattern.permute.xlu0 4
        %1737 = vperm.xlu0 %1736, %v636
        %v1738 = vpop.permute.xlu0 %1737
        %1740 = vset.pattern.permute.xlu0 4
        %1741 = vperm.xlu0 %1740, %v637
        %v1742 = vpop.permute.xlu0 %1741
        %1744 = vset.pattern.permute.xlu0 4
        %1745 = vperm.xlu0 %1744, %v638
        %v1746 = vpop.permute.xlu0 %1745
        %1748 = vset.pattern.permute.xlu0 4
        %1749 = vperm.xlu0 %1748, %v639
        %v1750 = vpop.permute.xlu0 %1749
        %1752 = vset.pattern.permute.xlu0 4
        %1753 = vperm.xlu0 %1752, %v640
        %v1754 = vpop.permute.xlu0 %1753
        %1756 = vset.pattern.permute.xlu0 4
        %1757 = vperm.xlu0 %1756, %v641
        %v1758 = vpop.permute.xlu0 %1757
        %1760 = vset.pattern.permute.xlu0 4
        %1761 = vperm.xlu0 %1760, %v642
        %v1762 = vpop.permute.xlu0 %1761
        %1764 = vset.pattern.permute.xlu0 4
        %1765 = vperm.xlu0 %1764, %v643
        %v1766 = vpop.permute.xlu0 %1765
        %1768 = vset.pattern.permute.xlu0 4
        %1769 = vperm.xlu0 %1768, %v644
        %v1770 = vpop.permute.xlu0 %1769
        %1772 = vset.pattern.permute.xlu0 4
        %1773 = vperm.xlu0 %1772, %v645
        %v1774 = vpop.permute.xlu0 %1773
        %1776 = vset.pattern.permute.xlu0 4
        %1777 = vperm.xlu0 %1776, %v646
        %v1778 = vpop.permute.xlu0 %1777
        %1780 = vset.pattern.permute.xlu0 4
        %1781 = vperm.xlu0 %1780, %v647
        %v1782 = vpop.permute.xlu0 %1781
        %1784 = vset.pattern.permute.xlu0 4
        %1785 = vperm.xlu0 %1784, %v648
        %v1786 = vpop.permute.xlu0 %1785
        %1788 = vset.pattern.permute.xlu0 4
        %1789 = vperm.xlu0 %1788, %v649
        %v1790 = vpop.permute.xlu0 %1789
        %1792 = vset.pattern.permute.xlu0 4
        %1793 = vperm.xlu0 %1792, %v650
        %v1794 = vpop.permute.xlu0 %1793
        %1796 = vset.pattern.permute.xlu0 4
        %1797 = vperm.xlu0 %1796, %v651
        %v1798 = vpop.permute.xlu0 %1797
        %1800 = vset.pattern.permute.xlu0 4
        %1801 = vperm.xlu0 %1800, %v652
        %v1802 = vpop.permute.xlu0 %1801
        %1804 = vset.pattern.permute.xlu0 4
        %1805 = vperm.xlu0 %1804, %v653
        %v1806 = vpop.permute.xlu0 %1805
        %1808 = vset.pattern.permute.xlu0 4
        %1809 = vperm.xlu0 %1808, %v654
        %v1810 = vpop.permute.xlu0 %1809
        %1812 = vset.pattern.permute.xlu0 4
        %1813 = vperm.xlu0 %1812, %v655
        %v1814 = vpop.permute.xlu0 %1813
        %1816 = vset.pattern.permute.xlu0 4
        %1817 = vperm.xlu0 %1816, %v656
        %v1818 = vpop.permute.xlu0 %1817
        %1820 = vset.pattern.permute.xlu0 4
        %1821 = vperm.xlu0 %1820, %v657
        %v1822 = vpop.permute.xlu0 %1821
        %1824 = vset.pattern.permute.xlu0 4
        %1825 = vperm.xlu0 %1824, %v658
        %v1826 = vpop.permute.xlu0 %1825
        %1828 = vset.pattern.permute.xlu0 4
        %1829 = vperm.xlu0 %1828, %v659
        %v1830 = vpop.permute.xlu0 %1829
        %1832 = vset.pattern.permute.xlu0 4
        %1833 = vperm.xlu0 %1832, %v660
        %v1834 = vpop.permute.xlu0 %1833
        %1836 = vset.pattern.permute.xlu0 4
        %1837 = vperm.xlu0 %1836, %v661
        %v1838 = vpop.permute.xlu0 %1837
        %1840 = vset.pattern.permute.xlu0 4
        %1841 = vperm.xlu0 %1840, %v662
        %v1842 = vpop.permute.xlu0 %1841
        %1844 = vset.pattern.permute.xlu0 4
        %1845 = vperm.xlu0 %1844, %v663
        %v1846 = vpop.permute.xlu0 %1845
        %1848 = vset.pattern.permute.xlu0 4
        %1849 = vperm.xlu0 %1848, %v664
        %v1850 = vpop.permute.xlu0 %1849
        %1852 = vset.pattern.permute.xlu0 4
        %1853 = vperm.xlu0 %1852, %v665
        %v1854 = vpop.permute.xlu0 %1853
        %1856 = vset.pattern.permute.xlu0 4
        %1857 = vperm.xlu0 %1856, %v666
        %v1858 = vpop.permute.xlu0 %1857
        %1860 = vset.pattern.permute.xlu0 4
        %1861 = vperm.xlu0 %1860, %v667
        %v1862 = vpop.permute.xlu0 %1861
        %1864 = vset.pattern.permute.xlu0 4
        %1865 = vperm.xlu0 %1864, %v668
        %v1866 = vpop.permute.xlu0 %1865
        %1868 = vset.pattern.permute.xlu0 4
        %1869 = vperm.xlu0 %1868, %v669
        %v1870 = vpop.permute.xlu0 %1869
        %1872 = vset.pattern.permute.xlu0 4
        %1873 = vperm.xlu0 %1872, %v670
        %v1874 = vpop.permute.xlu0 %1873
        %1876 = vset.pattern.permute.xlu0 4
        %1877 = vperm.xlu0 %1876, %v671
        %v1878 = vpop.permute.xlu0 %1877
        %1880 = vset.pattern.permute.xlu0 4
        %1881 = vperm.xlu0 %1880, %v672
        %v1882 = vpop.permute.xlu0 %1881
        %1884 = vset.pattern.permute.xlu0 4
        %1885 = vperm.xlu0 %1884, %v673
        %v1886 = vpop.permute.xlu0 %1885
        %1888 = vset.pattern.permute.xlu0 4
        %1889 = vperm.xlu0 %1888, %v674
        %v1890 = vpop.permute.xlu0 %1889
        %1892 = vset.pattern.permute.xlu0 4
        %1893 = vperm.xlu0 %1892, %v675
        %v1894 = vpop.permute.xlu0 %1893
        %1896 = vset.pattern.permute.xlu0 4
        %1897 = vperm.xlu0 %1896, %v676
        %v1898 = vpop.permute.xlu0 %1897
        %1900 = vset.pattern.permute.xlu0 4
        %1901 = vperm.xlu0 %1900, %v677
        %v1902 = vpop.permute.xlu0 %1901
        %1904 = vset.pattern.permute.xlu0 4
        %1905 = vperm.xlu0 %1904, %v678
        %v1906 = vpop.permute.xlu0 %1905
        %1908 = vset.pattern.permute.xlu0 4
        %1909 = vperm.xlu0 %1908, %v679
        %v1910 = vpop.permute.xlu0 %1909
        %1912 = vset.pattern.permute.xlu0 4
        %1913 = vperm.xlu0 %1912, %v680
        %v1914 = vpop.permute.xlu0 %1913
        %1916 = vset.pattern.permute.xlu0 4
        %1917 = vperm.xlu0 %1916, %v681
        %v1918 = vpop.permute.xlu0 %1917
        %1920 = vset.pattern.permute.xlu0 4
        %1921 = vperm.xlu0 %1920, %v682
        %v1922 = vpop.permute.xlu0 %1921
        %1924 = vset.pattern.permute.xlu0 4
        %1925 = vperm.xlu0 %1924, %v683
        %v1926 = vpop.permute.xlu0 %1925
        %1928 = vset.pattern.permute.xlu0 4
        %1929 = vperm.xlu0 %1928, %v684
        %v1930 = vpop.permute.xlu0 %1929
        %1932 = vset.pattern.permute.xlu0 4
        %1933 = vperm.xlu0 %1932, %v685
        %v1934 = vpop.permute.xlu0 %1933
        %1936 = vset.pattern.permute.xlu0 4
        %1937 = vperm.xlu0 %1936, %v686
        %v1938 = vpop.permute.xlu0 %1937
        %1940 = vset.pattern.permute.xlu0 4
        %1941 = vperm.xlu0 %1940, %v687
        %v1942 = vpop.permute.xlu0 %1941
        %1944 = vset.pattern.permute.xlu0 4
        %1945 = vperm.xlu0 %1944, %v688
        %v1946 = vpop.permute.xlu0 %1945
        %1948 = vset.pattern.permute.xlu0 4
        %1949 = vperm.xlu0 %1948, %v689
        %v1950 = vpop.permute.xlu0 %1949
        %v1952 = vmul.f32 %v564, %v1450
        %v1953 = vmul.f32 %v565, %v1454
        %v1954 = vmul.f32 %v566, %v1458
        %v1955 = vmul.f32 %v567, %v1462
        %v1956 = vmul.f32 %v568, %v1466
        %v1957 = vmul.f32 %v569, %v1470
        %v1958 = vmul.f32 %v570, %v1474
        %v1959 = vmul.f32 %v571, %v1478
        %v1960 = vmul.f32 %v572, %v1482
        %v1961 = vmul.f32 %v573, %v1486
        %v1962 = vmul.f32 %v574, %v1490
        %v1963 = vmul.f32 %v575, %v1494
        %v1964 = vmul.f32 %v576, %v1498
        %v1965 = vmul.f32 %v577, %v1502
        %v1966 = vmul.f32 %v578, %v1506
        %v1967 = vmul.f32 %v579, %v1510
        %v1968 = vmul.f32 %v580, %v1514
        %v1969 = vmul.f32 %v581, %v1518
        %v1970 = vmul.f32 %v582, %v1522
        %v1971 = vmul.f32 %v583, %v1526
        %v1972 = vmul.f32 %v584, %v1530
        %v1973 = vmul.f32 %v585, %v1534
        %v1974 = vmul.f32 %v586, %v1538
        %v1975 = vmul.f32 %v587, %v1542
        %v1976 = vmul.f32 %v588, %v1546
        %v1977 = vmul.f32 %v589, %v1550
        %v1978 = vmul.f32 %v590, %v1554
        %v1979 = vmul.f32 %v591, %v1558
        %v1980 = vmul.f32 %v592, %v1562
        %v1981 = vmul.f32 %v593, %v1566
        %v1982 = vmul.f32 %v594, %v1570
        %v1983 = vmul.f32 %v595, %v1574
        %v1984 = vmul.f32 %v596, %v1578
        %v1985 = vmul.f32 %v597, %v1582
        %v1986 = vmul.f32 %v598, %v1586
        %v1987 = vmul.f32 %v599, %v1590
        %v1988 = vmul.f32 %v600, %v1594
        %v1989 = vmul.f32 %v601, %v1598
        %v1990 = vmul.f32 %v602, %v1602
        %v1991 = vmul.f32 %v603, %v1606
        %v1992 = vmul.f32 %v604, %v1610
        %v1993 = vmul.f32 %v605, %v1614
        %v1994 = vmul.f32 %v606, %v1618
        %v1995 = vmul.f32 %v607, %v1622
        %v1996 = vmul.f32 %v608, %v1626
        %v1997 = vmul.f32 %v609, %v1630
        %v1998 = vmul.f32 %v610, %v1634
        %v1999 = vmul.f32 %v611, %v1638
        %v2000 = vmul.f32 %v612, %v1642
        %v2001 = vmul.f32 %v613, %v1646
        %v2002 = vmul.f32 %v614, %v1650
        %v2003 = vmul.f32 %v615, %v1654
        %v2004 = vmul.f32 %v616, %v1658
        %v2005 = vmul.f32 %v617, %v1662
        %v2006 = vmul.f32 %v618, %v1666
        %v2007 = vmul.f32 %v619, %v1670
        %v2008 = vmul.f32 %v620, %v1674
        %v2009 = vmul.f32 %v621, %v1678
        %v2010 = vmul.f32 %v622, %v1682
        %v2011 = vmul.f32 %v623, %v1686
        %v2012 = vmul.f32 %v624, %v1690
        %v2013 = vmul.f32 %v625, %v1694
        %v2014 = vmul.f32 %v626, %v1698
        %v2015 = vmul.f32 %v627, %v1702
        %v2016 = vmul.f32 %v628, %v1706
        %v2017 = vmul.f32 %v629, %v1710
        %v2018 = vmul.f32 %v630, %v1714
        %v2019 = vmul.f32 %v631, %v1718
        %v2020 = vmul.f32 %v632, %v1722
        %v2021 = vmul.f32 %v633, %v1726
        %v2022 = vmul.f32 %v634, %v1730
        %v2023 = vmul.f32 %v635, %v1734
        %v2024 = vmul.f32 %v636, %v1738
        %v2025 = vmul.f32 %v637, %v1742
        %v2026 = vmul.f32 %v638, %v1746
        %v2027 = vmul.f32 %v639, %v1750
        %v2028 = vmul.f32 %v640, %v1754
        %v2029 = vmul.f32 %v641, %v1758
        %v2030 = vmul.f32 %v642, %v1762
        %v2031 = vmul.f32 %v643, %v1766
        %v2032 = vmul.f32 %v644, %v1770
        %v2033 = vmul.f32 %v645, %v1774
        %v2034 = vmul.f32 %v646, %v1778
        %v2035 = vmul.f32 %v647, %v1782
        %v2036 = vmul.f32 %v648, %v1786
        %v2037 = vmul.f32 %v649, %v1790
        %v2038 = vmul.f32 %v650, %v1794
        %v2039 = vmul.f32 %v651, %v1798
        %v2040 = vmul.f32 %v652, %v1802
        %v2041 = vmul.f32 %v653, %v1806
        %v2042 = vmul.f32 %v654, %v1810
        %v2043 = vmul.f32 %v655, %v1814
        %v2044 = vmul.f32 %v656, %v1818
        %v2045 = vmul.f32 %v657, %v1822
        %v2046 = vmul.f32 %v658, %v1826
        %v2047 = vmul.f32 %v659, %v1830
        %v2048 = vmul.f32 %v660, %v1834
        %v2049 = vmul.f32 %v661, %v1838
        %v2050 = vmul.f32 %v662, %v1842
        %v2051 = vmul.f32 %v663, %v1846
        %v2052 = vmul.f32 %v664, %v1850
        %v2053 = vmul.f32 %v665, %v1854
        %v2054 = vmul.f32 %v666, %v1858
        %v2055 = vmul.f32 %v667, %v1862
        %v2056 = vmul.f32 %v668, %v1866
        %v2057 = vmul.f32 %v669, %v1870
        %v2058 = vmul.f32 %v670, %v1874
        %v2059 = vmul.f32 %v671, %v1878
        %v2060 = vmul.f32 %v672, %v1882
        %v2061 = vmul.f32 %v673, %v1886
        %v2062 = vmul.f32 %v674, %v1890
        %v2063 = vmul.f32 %v675, %v1894
        %v2064 = vmul.f32 %v676, %v1898
        %v2065 = vmul.f32 %v677, %v1902
        %v2066 = vmul.f32 %v678, %v1906
        %v2067 = vmul.f32 %v679, %v1910
        %v2068 = vmul.f32 %v680, %v1914
        %v2069 = vmul.f32 %v681, %v1918
        %v2070 = vmul.f32 %v682, %v1922
        %v2071 = vmul.f32 %v683, %v1926
        %v2072 = vmul.f32 %v684, %v1930
        %v2073 = vmul.f32 %v685, %v1934
        %v2074 = vmul.f32 %v686, %v1938
        %v2075 = vmul.f32 %v687, %v1942
        %v2076 = vmul.f32 %v688, %v1946
        %v2077 = vmul.f32 %v689, %v1950
        %2204 = vrot.lane.b32.xlu0 %v1952, 113
        %v2205 = vpop.permute.xlu0 %2204
        %2206 = vrot.lane.b32.xlu0 %v1953, 113
        %v2207 = vpop.permute.xlu0 %2206
        %2208 = vrot.lane.b32.xlu0 %v1954, 113
        %v2209 = vpop.permute.xlu0 %2208
        %2210 = vrot.lane.b32.xlu0 %v1955, 113
        %v2211 = vpop.permute.xlu0 %2210
        %2212 = vrot.lane.b32.xlu0 %v1956, 113
        %v2213 = vpop.permute.xlu0 %2212
        %2214 = vrot.lane.b32.xlu0 %v1957, 113
        %v2215 = vpop.permute.xlu0 %2214
        %2216 = vrot.lane.b32.xlu0 %v1958, 113
        %v2217 = vpop.permute.xlu0 %2216
        %2218 = vrot.lane.b32.xlu0 %v1959, 113
        %v2219 = vpop.permute.xlu0 %2218
        %2220 = vrot.lane.b32.xlu0 %v1960, 113
        %v2221 = vpop.permute.xlu0 %2220
        %2222 = vrot.lane.b32.xlu0 %v1961, 113
        %v2223 = vpop.permute.xlu0 %2222
        %2224 = vrot.lane.b32.xlu0 %v1962, 113
        %v2225 = vpop.permute.xlu0 %2224
        %2226 = vrot.lane.b32.xlu0 %v1963, 113
        %v2227 = vpop.permute.xlu0 %2226
        %2228 = vrot.lane.b32.xlu0 %v1964, 113
        %v2229 = vpop.permute.xlu0 %2228
        %2230 = vrot.lane.b32.xlu0 %v1965, 113
        %v2231 = vpop.permute.xlu0 %2230
        %2232 = vrot.lane.b32.xlu0 %v1966, 113
        %v2233 = vpop.permute.xlu0 %2232
        %2234 = vrot.lane.b32.xlu0 %v1967, 113
        %v2235 = vpop.permute.xlu0 %2234
        %2236 = vrot.lane.b32.xlu0 %v1968, 113
        %v2237 = vpop.permute.xlu0 %2236
        %2238 = vrot.lane.b32.xlu0 %v1969, 113
        %v2239 = vpop.permute.xlu0 %2238
        %2240 = vrot.lane.b32.xlu0 %v1970, 113
        %v2241 = vpop.permute.xlu0 %2240
        %2242 = vrot.lane.b32.xlu0 %v1971, 113
        %v2243 = vpop.permute.xlu0 %2242
        %2244 = vrot.lane.b32.xlu0 %v1972, 113
        %v2245 = vpop.permute.xlu0 %2244
        %2246 = vrot.lane.b32.xlu0 %v1973, 113
        %v2247 = vpop.permute.xlu0 %2246
        %2248 = vrot.lane.b32.xlu0 %v1974, 113
        %v2249 = vpop.permute.xlu0 %2248
        %2250 = vrot.lane.b32.xlu0 %v1975, 113
        %v2251 = vpop.permute.xlu0 %2250
        %2252 = vrot.lane.b32.xlu0 %v1976, 113
        %v2253 = vpop.permute.xlu0 %2252
        %2254 = vrot.lane.b32.xlu0 %v1977, 113
        %v2255 = vpop.permute.xlu0 %2254
        %2256 = vrot.lane.b32.xlu0 %v1978, 113
        %v2257 = vpop.permute.xlu0 %2256
        %2258 = vrot.lane.b32.xlu0 %v1979, 113
        %v2259 = vpop.permute.xlu0 %2258
        %2260 = vrot.lane.b32.xlu0 %v1980, 113
        %v2261 = vpop.permute.xlu0 %2260
        %2262 = vrot.lane.b32.xlu0 %v1981, 113
        %v2263 = vpop.permute.xlu0 %2262
        %2264 = vrot.lane.b32.xlu0 %v1982, 113
        %v2265 = vpop.permute.xlu0 %2264
        %2266 = vrot.lane.b32.xlu0 %v1983, 113
        %v2267 = vpop.permute.xlu0 %2266
        %2268 = vrot.lane.b32.xlu0 %v1984, 113
        %v2269 = vpop.permute.xlu0 %2268
        %2270 = vrot.lane.b32.xlu0 %v1985, 113
        %v2271 = vpop.permute.xlu0 %2270
        %2272 = vrot.lane.b32.xlu0 %v1986, 113
        %v2273 = vpop.permute.xlu0 %2272
        %2274 = vrot.lane.b32.xlu0 %v1987, 113
        %v2275 = vpop.permute.xlu0 %2274
        %2276 = vrot.lane.b32.xlu0 %v1988, 113
        %v2277 = vpop.permute.xlu0 %2276
        %2278 = vrot.lane.b32.xlu0 %v1989, 113
        %v2279 = vpop.permute.xlu0 %2278
        %2280 = vrot.lane.b32.xlu0 %v1990, 113
        %v2281 = vpop.permute.xlu0 %2280
        %2282 = vrot.lane.b32.xlu0 %v1991, 113
        %v2283 = vpop.permute.xlu0 %2282
        %2284 = vrot.lane.b32.xlu0 %v1992, 113
        %v2285 = vpop.permute.xlu0 %2284
        %2286 = vrot.lane.b32.xlu0 %v1993, 113
        %v2287 = vpop.permute.xlu0 %2286
        %2288 = vrot.lane.b32.xlu0 %v1994, 113
        %v2289 = vpop.permute.xlu0 %2288
        %2290 = vrot.lane.b32.xlu0 %v1995, 113
        %v2291 = vpop.permute.xlu0 %2290
        %2292 = vrot.lane.b32.xlu0 %v1996, 113
        %v2293 = vpop.permute.xlu0 %2292
        %2294 = vrot.lane.b32.xlu0 %v1997, 113
        %v2295 = vpop.permute.xlu0 %2294
        %2296 = vrot.lane.b32.xlu0 %v1998, 113
        %v2297 = vpop.permute.xlu0 %2296
        %2298 = vrot.lane.b32.xlu0 %v1999, 113
        %v2299 = vpop.permute.xlu0 %2298
        %2300 = vrot.lane.b32.xlu0 %v2000, 113
        %v2301 = vpop.permute.xlu0 %2300
        %2302 = vrot.lane.b32.xlu0 %v2001, 113
        %v2303 = vpop.permute.xlu0 %2302
        %2304 = vrot.lane.b32.xlu0 %v2002, 113
        %v2305 = vpop.permute.xlu0 %2304
        %2306 = vrot.lane.b32.xlu0 %v2003, 113
        %v2307 = vpop.permute.xlu0 %2306
        %2308 = vrot.lane.b32.xlu0 %v2004, 113
        %v2309 = vpop.permute.xlu0 %2308
        %2310 = vrot.lane.b32.xlu0 %v2005, 113
        %v2311 = vpop.permute.xlu0 %2310
        %2312 = vrot.lane.b32.xlu0 %v2006, 113
        %v2313 = vpop.permute.xlu0 %2312
        %2314 = vrot.lane.b32.xlu0 %v2007, 113
        %v2315 = vpop.permute.xlu0 %2314
        %2316 = vrot.lane.b32.xlu0 %v2008, 113
        %v2317 = vpop.permute.xlu0 %2316
        %2318 = vrot.lane.b32.xlu0 %v2009, 113
        %v2319 = vpop.permute.xlu0 %2318
        %2320 = vrot.lane.b32.xlu0 %v2010, 113
        %v2321 = vpop.permute.xlu0 %2320
        %2322 = vrot.lane.b32.xlu0 %v2011, 113
        %v2323 = vpop.permute.xlu0 %2322
        %2324 = vrot.lane.b32.xlu0 %v2012, 113
        %v2325 = vpop.permute.xlu0 %2324
        %2326 = vrot.lane.b32.xlu0 %v2013, 113
        %v2327 = vpop.permute.xlu0 %2326
        %2328 = vrot.lane.b32.xlu0 %v2014, 113
        %v2329 = vpop.permute.xlu0 %2328
        %2330 = vrot.lane.b32.xlu0 %v2015, 113
        %v2331 = vpop.permute.xlu0 %2330
        %2332 = vrot.lane.b32.xlu0 %v2016, 113
        %v2333 = vpop.permute.xlu0 %2332
        %2334 = vrot.lane.b32.xlu0 %v2017, 113
        %v2335 = vpop.permute.xlu0 %2334
        %2336 = vrot.lane.b32.xlu0 %v2018, 113
        %v2337 = vpop.permute.xlu0 %2336
        %2338 = vrot.lane.b32.xlu0 %v2019, 113
        %v2339 = vpop.permute.xlu0 %2338
        %2340 = vrot.lane.b32.xlu0 %v2020, 113
        %v2341 = vpop.permute.xlu0 %2340
        %2342 = vrot.lane.b32.xlu0 %v2021, 113
        %v2343 = vpop.permute.xlu0 %2342
        %2344 = vrot.lane.b32.xlu0 %v2022, 113
        %v2345 = vpop.permute.xlu0 %2344
        %2346 = vrot.lane.b32.xlu0 %v2023, 113
        %v2347 = vpop.permute.xlu0 %2346
        %2348 = vrot.lane.b32.xlu0 %v2024, 113
        %v2349 = vpop.permute.xlu0 %2348
        %2350 = vrot.lane.b32.xlu0 %v2025, 113
        %v2351 = vpop.permute.xlu0 %2350
        %2352 = vrot.lane.b32.xlu0 %v2026, 113
        %v2353 = vpop.permute.xlu0 %2352
        %2354 = vrot.lane.b32.xlu0 %v2027, 113
        %v2355 = vpop.permute.xlu0 %2354
        %2356 = vrot.lane.b32.xlu0 %v2028, 113
        %v2357 = vpop.permute.xlu0 %2356
        %2358 = vrot.lane.b32.xlu0 %v2029, 113
        %v2359 = vpop.permute.xlu0 %2358
        %2360 = vrot.lane.b32.xlu0 %v2030, 113
        %v2361 = vpop.permute.xlu0 %2360
        %2362 = vrot.lane.b32.xlu0 %v2031, 113
        %v2363 = vpop.permute.xlu0 %2362
        %2364 = vrot.lane.b32.xlu0 %v2032, 113
        %v2365 = vpop.permute.xlu0 %2364
        %2366 = vrot.lane.b32.xlu0 %v2033, 113
        %v2367 = vpop.permute.xlu0 %2366
        %2368 = vrot.lane.b32.xlu0 %v2034, 113
        %v2369 = vpop.permute.xlu0 %2368
        %2370 = vrot.lane.b32.xlu0 %v2035, 113
        %v2371 = vpop.permute.xlu0 %2370
        %2372 = vrot.lane.b32.xlu0 %v2036, 113
        %v2373 = vpop.permute.xlu0 %2372
        %2374 = vrot.lane.b32.xlu0 %v2037, 113
        %v2375 = vpop.permute.xlu0 %2374
        %2376 = vrot.lane.b32.xlu0 %v2038, 113
        %v2377 = vpop.permute.xlu0 %2376
        %2378 = vrot.lane.b32.xlu0 %v2039, 113
        %v2379 = vpop.permute.xlu0 %2378
        %2380 = vrot.lane.b32.xlu0 %v2040, 113
        %v2381 = vpop.permute.xlu0 %2380
        %2382 = vrot.lane.b32.xlu0 %v2041, 113
        %v2383 = vpop.permute.xlu0 %2382
        %2384 = vrot.lane.b32.xlu0 %v2042, 113
        %v2385 = vpop.permute.xlu0 %2384
        %2386 = vrot.lane.b32.xlu0 %v2043, 113
        %v2387 = vpop.permute.xlu0 %2386
        %2388 = vrot.lane.b32.xlu0 %v2044, 113
        %v2389 = vpop.permute.xlu0 %2388
        %2390 = vrot.lane.b32.xlu0 %v2045, 113
        %v2391 = vpop.permute.xlu0 %2390
        %2392 = vrot.lane.b32.xlu0 %v2046, 113
        %v2393 = vpop.permute.xlu0 %2392
        %2394 = vrot.lane.b32.xlu0 %v2047, 113
        %v2395 = vpop.permute.xlu0 %2394
        %2396 = vrot.lane.b32.xlu0 %v2048, 113
        %v2397 = vpop.permute.xlu0 %2396
        %2398 = vrot.lane.b32.xlu0 %v2049, 113
        %v2399 = vpop.permute.xlu0 %2398
        %2400 = vrot.lane.b32.xlu0 %v2050, 113
        %v2401 = vpop.permute.xlu0 %2400
        %2402 = vrot.lane.b32.xlu0 %v2051, 113
        %v2403 = vpop.permute.xlu0 %2402
        %2404 = vrot.lane.b32.xlu0 %v2052, 113
        %v2405 = vpop.permute.xlu0 %2404
        %2406 = vrot.lane.b32.xlu0 %v2053, 113
        %v2407 = vpop.permute.xlu0 %2406
        %2408 = vrot.lane.b32.xlu0 %v2054, 113
        %v2409 = vpop.permute.xlu0 %2408
        %2410 = vrot.lane.b32.xlu0 %v2055, 113
        %v2411 = vpop.permute.xlu0 %2410
        %2412 = vrot.lane.b32.xlu0 %v2056, 113
        %v2413 = vpop.permute.xlu0 %2412
        %2414 = vrot.lane.b32.xlu0 %v2057, 113
        %v2415 = vpop.permute.xlu0 %2414
        %2416 = vrot.lane.b32.xlu0 %v2058, 113
        %v2417 = vpop.permute.xlu0 %2416
        %2418 = vrot.lane.b32.xlu0 %v2059, 113
        %v2419 = vpop.permute.xlu0 %2418
        %2420 = vrot.lane.b32.xlu0 %v2060, 113
        %v2421 = vpop.permute.xlu0 %2420
        %2422 = vrot.lane.b32.xlu0 %v2061, 113
        %v2423 = vpop.permute.xlu0 %2422
        %2424 = vrot.lane.b32.xlu0 %v2062, 113
        %v2425 = vpop.permute.xlu0 %2424
        %2426 = vrot.lane.b32.xlu0 %v2063, 113
        %v2427 = vpop.permute.xlu0 %2426
        %2428 = vrot.lane.b32.xlu0 %v2064, 113
        %v2429 = vpop.permute.xlu0 %2428
        %2430 = vrot.lane.b32.xlu0 %v2065, 113
        %v2431 = vpop.permute.xlu0 %2430
        %2432 = vrot.lane.b32.xlu0 %v2066, 113
        %v2433 = vpop.permute.xlu0 %2432
        %2434 = vrot.lane.b32.xlu0 %v2067, 113
        %v2435 = vpop.permute.xlu0 %2434
        %2436 = vrot.lane.b32.xlu0 %v2068, 113
        %v2437 = vpop.permute.xlu0 %2436
        %2438 = vrot.lane.b32.xlu0 %v2069, 113
        %v2439 = vpop.permute.xlu0 %2438
        %2440 = vrot.lane.b32.xlu0 %v2070, 113
        %v2441 = vpop.permute.xlu0 %2440
        %2442 = vrot.lane.b32.xlu0 %v2071, 113
        %v2443 = vpop.permute.xlu0 %2442
        %2444 = vrot.lane.b32.xlu0 %v2072, 113
        %v2445 = vpop.permute.xlu0 %2444
        %2446 = vrot.lane.b32.xlu0 %v2073, 113
        %v2447 = vpop.permute.xlu0 %2446
        %2448 = vrot.lane.b32.xlu0 %v2074, 113
        %v2449 = vpop.permute.xlu0 %2448
        %2450 = vrot.lane.b32.xlu0 %v2075, 113
        %v2451 = vpop.permute.xlu0 %2450
        %2452 = vrot.lane.b32.xlu0 %v2076, 113
        %v2453 = vpop.permute.xlu0 %2452
        %2454 = vrot.lane.b32.xlu0 %v2077, 113
        %v2455 = vpop.permute.xlu0 %2454
        %vm2582 = vcmask 39936
        %2583 = vst.msk [vmem:[%s537] sm:$0xff] %vm2582, %v2205
        %2584 = vst.msk [vmem:[%s537 + $0x8] sm:$0xff] %vm2582, %v2207
        %2585 = vst.msk [vmem:[%s537 + $0x10] sm:$0xff] %vm2582, %v2209
        %2586 = vst.msk [vmem:[%s537 + $0x18] sm:$0xff] %vm2582, %v2211
        %2587 = vst.msk [vmem:[%s537 + $0x20] sm:$0xff] %vm2582, %v2213
        %2588 = vst.msk [vmem:[%s537 + $0x28] sm:$0xff] %vm2582, %v2215
        %2589 = vst.msk [vmem:[%s537 + $0x30] sm:$0xff] %vm2582, %v2217
        %2590 = vst.msk [vmem:[%s537 + $0x38] sm:$0xff] %vm2582, %v2219
        %2591 = vst.msk [vmem:[%s537 + $0x40] sm:$0xff] %vm2582, %v2221
        %2592 = vst.msk [vmem:[%s537 + $0x48] sm:$0xff] %vm2582, %v2223
        %2593 = vst.msk [vmem:[%s537 + $0x50] sm:$0xff] %vm2582, %v2225
        %2594 = vst.msk [vmem:[%s537 + $0x58] sm:$0xff] %vm2582, %v2227
        %2595 = vst.msk [vmem:[%s537 + $0x60] sm:$0xff] %vm2582, %v2229
        %2596 = vst.msk [vmem:[%s537 + $0x68] sm:$0xff] %vm2582, %v2231
        %2597 = vst.msk [vmem:[%s537 + $0x70] sm:$0xff] %vm2582, %v2233
        %2598 = vst.msk [vmem:[%s537 + $0x78] sm:$0xff] %vm2582, %v2235
        %2599 = vst.msk [vmem:[%s537 + $0x80] sm:$0xff] %vm2582, %v2237
        %2600 = vst.msk [vmem:[%s537 + $0x88] sm:$0xff] %vm2582, %v2239
        %2601 = vst.msk [vmem:[%s537 + $0x90] sm:$0xff] %vm2582, %v2241
        %2602 = vst.msk [vmem:[%s537 + $0x98] sm:$0xff] %vm2582, %v2243
        %2603 = vst.msk [vmem:[%s537 + $0xa0] sm:$0xff] %vm2582, %v2245
        %2604 = vst.msk [vmem:[%s537 + $0xa8] sm:$0xff] %vm2582, %v2247
        %2605 = vst.msk [vmem:[%s537 + $0xb0] sm:$0xff] %vm2582, %v2249
        %2606 = vst.msk [vmem:[%s537 + $0xb8] sm:$0xff] %vm2582, %v2251
        %2607 = vst.msk [vmem:[%s537 + $0xc0] sm:$0xff] %vm2582, %v2253
        %2608 = vst.msk [vmem:[%s537 + $0xc8] sm:$0xff] %vm2582, %v2255
        %2609 = vst.msk [vmem:[%s537 + $0xd0] sm:$0xff] %vm2582, %v2257
        %2610 = vst.msk [vmem:[%s537 + $0xd8] sm:$0xff] %vm2582, %v2259
        %2611 = vst.msk [vmem:[%s537 + $0xe0] sm:$0xff] %vm2582, %v2261
        %2612 = vst.msk [vmem:[%s537 + $0xe8] sm:$0xff] %vm2582, %v2263
        %2613 = vst.msk [vmem:[%s537 + $0xf0] sm:$0xff] %vm2582, %v2265
        %2614 = vst.msk [vmem:[%s537 + $0xf8] sm:$0xff] %vm2582, %v2267
        %2615 = vst.msk [vmem:[%s537 + $0x100] sm:$0xff] %vm2582, %v2269
        %2616 = vst.msk [vmem:[%s537 + $0x108] sm:$0xff] %vm2582, %v2271
        %2617 = vst.msk [vmem:[%s537 + $0x110] sm:$0xff] %vm2582, %v2273
        %2618 = vst.msk [vmem:[%s537 + $0x118] sm:$0xff] %vm2582, %v2275
        %2619 = vst.msk [vmem:[%s537 + $0x120] sm:$0xff] %vm2582, %v2277
        %2620 = vst.msk [vmem:[%s537 + $0x128] sm:$0xff] %vm2582, %v2279
        %2621 = vst.msk [vmem:[%s537 + $0x130] sm:$0xff] %vm2582, %v2281
        %2622 = vst.msk [vmem:[%s537 + $0x138] sm:$0xff] %vm2582, %v2283
        %2623 = vst.msk [vmem:[%s537 + $0x140] sm:$0xff] %vm2582, %v2285
        %2624 = vst.msk [vmem:[%s537 + $0x148] sm:$0xff] %vm2582, %v2287
        %2625 = vst.msk [vmem:[%s537 + $0x150] sm:$0xff] %vm2582, %v2289
        %2626 = vst.msk [vmem:[%s537 + $0x158] sm:$0xff] %vm2582, %v2291
        %2627 = vst.msk [vmem:[%s537 + $0x160] sm:$0xff] %vm2582, %v2293
        %2628 = vst.msk [vmem:[%s537 + $0x168] sm:$0xff] %vm2582, %v2295
        %2629 = vst.msk [vmem:[%s537 + $0x170] sm:$0xff] %vm2582, %v2297
        %2630 = vst.msk [vmem:[%s537 + $0x178] sm:$0xff] %vm2582, %v2299
        %2631 = vst.msk [vmem:[%s537 + $0x180] sm:$0xff] %vm2582, %v2301
        %2632 = vst.msk [vmem:[%s537 + $0x188] sm:$0xff] %vm2582, %v2303
        %2633 = vst.msk [vmem:[%s537 + $0x190] sm:$0xff] %vm2582, %v2305
        %2634 = vst.msk [vmem:[%s537 + $0x198] sm:$0xff] %vm2582, %v2307
        %2635 = vst.msk [vmem:[%s537 + $0x1a0] sm:$0xff] %vm2582, %v2309
        %2636 = vst.msk [vmem:[%s537 + $0x1a8] sm:$0xff] %vm2582, %v2311
        %2637 = vst.msk [vmem:[%s537 + $0x1b0] sm:$0xff] %vm2582, %v2313
        %2638 = vst.msk [vmem:[%s537 + $0x1b8] sm:$0xff] %vm2582, %v2315
        %2639 = vst.msk [vmem:[%s537 + $0x1c0] sm:$0xff] %vm2582, %v2317
        %2640 = vst.msk [vmem:[%s537 + $0x1c8] sm:$0xff] %vm2582, %v2319
        %2641 = vst.msk [vmem:[%s537 + $0x1d0] sm:$0xff] %vm2582, %v2321
        %2642 = vst.msk [vmem:[%s537 + $0x1d8] sm:$0xff] %vm2582, %v2323
        %2643 = vst.msk [vmem:[%s537 + $0x1e0] sm:$0xff] %vm2582, %v2325
        %2644 = vst.msk [vmem:[%s537 + $0x1e8] sm:$0xff] %vm2582, %v2327
        %2645 = vst.msk [vmem:[%s537 + $0x1f0] sm:$0xff] %vm2582, %v2329
        %2646 = vst.msk [vmem:[%s537 + $0x1f8] sm:$0xff] %vm2582, %v2331
        %2647 = vst.msk [vmem:[%s537 + $0x200] sm:$0xff] %vm2582, %v2333
        %2648 = vst.msk [vmem:[%s537 + $0x208] sm:$0xff] %vm2582, %v2335
        %2649 = vst.msk [vmem:[%s537 + $0x210] sm:$0xff] %vm2582, %v2337
        %2650 = vst.msk [vmem:[%s537 + $0x218] sm:$0xff] %vm2582, %v2339
        %2651 = vst.msk [vmem:[%s537 + $0x220] sm:$0xff] %vm2582, %v2341
        %2652 = vst.msk [vmem:[%s537 + $0x228] sm:$0xff] %vm2582, %v2343
        %2653 = vst.msk [vmem:[%s537 + $0x230] sm:$0xff] %vm2582, %v2345
        %2654 = vst.msk [vmem:[%s537 + $0x238] sm:$0xff] %vm2582, %v2347
        %2655 = vst.msk [vmem:[%s537 + $0x240] sm:$0xff] %vm2582, %v2349
        %2656 = vst.msk [vmem:[%s537 + $0x248] sm:$0xff] %vm2582, %v2351
        %2657 = vst.msk [vmem:[%s537 + $0x250] sm:$0xff] %vm2582, %v2353
        %2658 = vst.msk [vmem:[%s537 + $0x258] sm:$0xff] %vm2582, %v2355
        %2659 = vst.msk [vmem:[%s537 + $0x260] sm:$0xff] %vm2582, %v2357
        %2660 = vst.msk [vmem:[%s537 + $0x268] sm:$0xff] %vm2582, %v2359
        %2661 = vst.msk [vmem:[%s537 + $0x270] sm:$0xff] %vm2582, %v2361
        %2662 = vst.msk [vmem:[%s537 + $0x278] sm:$0xff] %vm2582, %v2363
        %2663 = vst.msk [vmem:[%s537 + $0x280] sm:$0xff] %vm2582, %v2365
        %2664 = vst.msk [vmem:[%s537 + $0x288] sm:$0xff] %vm2582, %v2367
        %2665 = vst.msk [vmem:[%s537 + $0x290] sm:$0xff] %vm2582, %v2369
        %2666 = vst.msk [vmem:[%s537 + $0x298] sm:$0xff] %vm2582, %v2371
        %2667 = vst.msk [vmem:[%s537 + $0x2a0] sm:$0xff] %vm2582, %v2373
        %2668 = vst.msk [vmem:[%s537 + $0x2a8] sm:$0xff] %vm2582, %v2375
        %2669 = vst.msk [vmem:[%s537 + $0x2b0] sm:$0xff] %vm2582, %v2377
        %2670 = vst.msk [vmem:[%s537 + $0x2b8] sm:$0xff] %vm2582, %v2379
        %2671 = vst.msk [vmem:[%s537 + $0x2c0] sm:$0xff] %vm2582, %v2381
        %2672 = vst.msk [vmem:[%s537 + $0x2c8] sm:$0xff] %vm2582, %v2383
        %2673 = vst.msk [vmem:[%s537 + $0x2d0] sm:$0xff] %vm2582, %v2385
        %2674 = vst.msk [vmem:[%s537 + $0x2d8] sm:$0xff] %vm2582, %v2387
        %2675 = vst.msk [vmem:[%s537 + $0x2e0] sm:$0xff] %vm2582, %v2389
        %2676 = vst.msk [vmem:[%s537 + $0x2e8] sm:$0xff] %vm2582, %v2391
        %2677 = vst.msk [vmem:[%s537 + $0x2f0] sm:$0xff] %vm2582, %v2393
        %2678 = vst.msk [vmem:[%s537 + $0x2f8] sm:$0xff] %vm2582, %v2395
        %2679 = vst.msk [vmem:[%s537 + $0x300] sm:$0xff] %vm2582, %v2397
        %2680 = vst.msk [vmem:[%s537 + $0x308] sm:$0xff] %vm2582, %v2399
        %2681 = vst.msk [vmem:[%s537 + $0x310] sm:$0xff] %vm2582, %v2401
        %2682 = vst.msk [vmem:[%s537 + $0x318] sm:$0xff] %vm2582, %v2403
        %2683 = vst.msk [vmem:[%s537 + $0x320] sm:$0xff] %vm2582, %v2405
        %2684 = vst.msk [vmem:[%s537 + $0x328] sm:$0xff] %vm2582, %v2407
        %2685 = vst.msk [vmem:[%s537 + $0x330] sm:$0xff] %vm2582, %v2409
        %2686 = vst.msk [vmem:[%s537 + $0x338] sm:$0xff] %vm2582, %v2411
        %2687 = vst.msk [vmem:[%s537 + $0x340] sm:$0xff] %vm2582, %v2413
        %2688 = vst.msk [vmem:[%s537 + $0x348] sm:$0xff] %vm2582, %v2415
        %2689 = vst.msk [vmem:[%s537 + $0x350] sm:$0xff] %vm2582, %v2417
        %2690 = vst.msk [vmem:[%s537 + $0x358] sm:$0xff] %vm2582, %v2419
        %2691 = vst.msk [vmem:[%s537 + $0x360] sm:$0xff] %vm2582, %v2421
        %2692 = vst.msk [vmem:[%s537 + $0x368] sm:$0xff] %vm2582, %v2423
        %2693 = vst.msk [vmem:[%s537 + $0x370] sm:$0xff] %vm2582, %v2425
        %2694 = vst.msk [vmem:[%s537 + $0x378] sm:$0xff] %vm2582, %v2427
        %2695 = vst.msk [vmem:[%s537 + $0x380] sm:$0xff] %vm2582, %v2429
        %2696 = vst.msk [vmem:[%s537 + $0x388] sm:$0xff] %vm2582, %v2431
        %2697 = vst.msk [vmem:[%s537 + $0x390] sm:$0xff] %vm2582, %v2433
        %2698 = vst.msk [vmem:[%s537 + $0x398] sm:$0xff] %vm2582, %v2435
        %2699 = vst.msk [vmem:[%s537 + $0x3a0] sm:$0xff] %vm2582, %v2437
        %2700 = vst.msk [vmem:[%s537 + $0x3a8] sm:$0xff] %vm2582, %v2439
        %2701 = vst.msk [vmem:[%s537 + $0x3b0] sm:$0xff] %vm2582, %v2441
        %2702 = vst.msk [vmem:[%s537 + $0x3b8] sm:$0xff] %vm2582, %v2443
        %2703 = vst.msk [vmem:[%s537 + $0x3c0] sm:$0xff] %vm2582, %v2445
        %2704 = vst.msk [vmem:[%s537 + $0x3c8] sm:$0xff] %vm2582, %v2447
        %2705 = vst.msk [vmem:[%s537 + $0x3d0] sm:$0xff] %vm2582, %v2449
        %2706 = vst.msk [vmem:[%s537 + $0x3d8] sm:$0xff] %vm2582, %v2451
        %2707 = vst.msk [vmem:[%s537 + $0x3e0] sm:$0xff] %vm2582, %v2453
        %2708 = vst.msk [vmem:[%s537 + $0x3e8] sm:$0xff] %vm2582, %v2455
        %s2709 = sand.u32 %s49, 1
        %s2710 = sand.u32 %s49, 1
        %s2711 = smul.addr %s2710, 1008
        %s2712 = scalar_lea.vmem [#allocation3], %s2711
        %s2713 = sand.u32 %s75, 1
        %s2714 = sand.u32 %s75, 1
        %s2715 = smul.addr %s2714, 1008
        %s2716 = scalar_lea.vmem [#allocation4], %s2715
        %s2717 = sand.u32 %s101, 1
        %s2718 = sand.u32 %s101, 1
        %s2719 = smul.addr %s2718, 1008
        %s2720 = scalar_lea.vmem [#allocation5], %s2719
        // Predicated region
        $region77: #{tpu_custom_call.1} parent=71 // pred_check
          %p2721 = pneg %p59
        $region78: #{tpu_custom_call.1} parent=71 // pred_check_branch
          %2723 = sbr.rel (%p2721) target = $region80
        $region79: #{tpu_custom_call.1} parent=71 // pred_region
          %s2724 = smul.u32 63, %s15
          %s2725 = ssub.s32 125, %s2724
          %p2726 = scmp.lt.s32.totalorder %s2725, 63
          %s2727 = scalar_select %p2726, %s2725, 63
          %s2728 = smul.u32 256, %s2727
          %p2729 = scmp.ne.s32.totalorder 0, %s2728
          %s2730 = smul.addr %s2724, 8
          %s2731 = scalar_lea.vmem %s1, %s2730
          // Predicated region
          $region81: #{tpu_custom_call.1} parent=79 // pred_check
            %p2732 = pneg %p2729
          $region82: #{tpu_custom_call.1} parent=79 // pred_check_branch
            %2734 = sbr.rel (%p2732) target = $region84
          $region83: #{tpu_custom_call.1} parent=79 // pred_region
            // Predicated region
            $region85: #{tpu_custom_call.1} parent=83 // pred_check
              _
            $region86: #{tpu_custom_call.1} parent=83 // pred_check_branch
              %2736 = sbr.rel (0) target = $region88
            $region87: #{tpu_custom_call.1} parent=83 // pred_region
              // Predicated region
              $region107: #{tpu_custom_call.1} parent=87 // pred_check
                _
              $region108: #{tpu_custom_call.1} parent=87 // pred_check_branch
                %2914 = sbr.rel (0) target = $region110
              $region109: #{tpu_custom_call.1} parent=87 // pred_region
                %s2915 = sshrl.u32 %s2727, 5
                // While loop
                $region111: #{tpu_custom_call.1} parent=109 // loop_pre_header
                  _
                $region112: #{tpu_custom_call.1} parent=109 // loop_header
                  %s2917 = sphi 0, %s2919
                  %p2918 = scmp.ge.s32.totalorder %s2917, %s2915
                  %s2922 = sphi 0, %s3055
                  %s2923 = sphi %s2712, %s3058
                  %s2924 = sphi %s2731, %s3059
                $region113: #{tpu_custom_call.1} parent=109 // loop_header_branch
                  %2921 = sbr.rel (%p2918) target = $region117
                $region114: #{tpu_custom_call.1} parent=109 // loop_body
                  %v2925 = vld [vmem:[%s2923] sm:$0xff]
                  %2926 = vst [vmem:[%s2924] sm:$0xff] %v2925
                  %v2927 = vld [vmem:[%s2923 + $0x8] sm:$0xff]
                  %2928 = vst [vmem:[%s2924 + $0x8] sm:$0xff] %v2927
                  %v2929 = vld [vmem:[%s2923 + $0x10] sm:$0xff]
                  %2930 = vst [vmem:[%s2924 + $0x10] sm:$0xff] %v2929
                  %v2931 = vld [vmem:[%s2923 + $0x18] sm:$0xff]
                  %2932 = vst [vmem:[%s2924 + $0x18] sm:$0xff] %v2931
                  %v2933 = vld [vmem:[%s2923 + $0x20] sm:$0xff]
                  %2934 = vst [vmem:[%s2924 + $0x20] sm:$0xff] %v2933
                  %v2935 = vld [vmem:[%s2923 + $0x28] sm:$0xff]
                  %2936 = vst [vmem:[%s2924 + $0x28] sm:$0xff] %v2935
                  %v2937 = vld [vmem:[%s2923 + $0x30] sm:$0xff]
                  %2938 = vst [vmem:[%s2924 + $0x30] sm:$0xff] %v2937
                  %v2939 = vld [vmem:[%s2923 + $0x38] sm:$0xff]
                  %2940 = vst [vmem:[%s2924 + $0x38] sm:$0xff] %v2939
                  %v2941 = vld [vmem:[%s2923 + $0x40] sm:$0xff]
                  %2942 = vst [vmem:[%s2924 + $0x40] sm:$0xff] %v2941
                  %v2943 = vld [vmem:[%s2923 + $0x48] sm:$0xff]
                  %2944 = vst [vmem:[%s2924 + $0x48] sm:$0xff] %v2943
                  %v2945 = vld [vmem:[%s2923 + $0x50] sm:$0xff]
                  %2946 = vst [vmem:[%s2924 + $0x50] sm:$0xff] %v2945
                  %v2947 = vld [vmem:[%s2923 + $0x58] sm:$0xff]
                  %2948 = vst [vmem:[%s2924 + $0x58] sm:$0xff] %v2947
                  %v2949 = vld [vmem:[%s2923 + $0x60] sm:$0xff]
                  %2950 = vst [vmem:[%s2924 + $0x60] sm:$0xff] %v2949
                  %v2951 = vld [vmem:[%s2923 + $0x68] sm:$0xff]
                  %2952 = vst [vmem:[%s2924 + $0x68] sm:$0xff] %v2951
                  %v2953 = vld [vmem:[%s2923 + $0x70] sm:$0xff]
                  %2954 = vst [vmem:[%s2924 + $0x70] sm:$0xff] %v2953
                  %v2955 = vld [vmem:[%s2923 + $0x78] sm:$0xff]
                  %2956 = vst [vmem:[%s2924 + $0x78] sm:$0xff] %v2955
                  %v2957 = vld [vmem:[%s2923 + $0x80] sm:$0xff]
                  %2958 = vst [vmem:[%s2924 + $0x80] sm:$0xff] %v2957
                  %v2959 = vld [vmem:[%s2923 + $0x88] sm:$0xff]
                  %2960 = vst [vmem:[%s2924 + $0x88] sm:$0xff] %v2959
                  %v2961 = vld [vmem:[%s2923 + $0x90] sm:$0xff]
                  %2962 = vst [vmem:[%s2924 + $0x90] sm:$0xff] %v2961
                  %v2963 = vld [vmem:[%s2923 + $0x98] sm:$0xff]
                  %2964 = vst [vmem:[%s2924 + $0x98] sm:$0xff] %v2963
                  %v2965 = vld [vmem:[%s2923 + $0xa0] sm:$0xff]
                  %2966 = vst [vmem:[%s2924 + $0xa0] sm:$0xff] %v2965
                  %v2967 = vld [vmem:[%s2923 + $0xa8] sm:$0xff]
                  %2968 = vst [vmem:[%s2924 + $0xa8] sm:$0xff] %v2967
                  %v2969 = vld [vmem:[%s2923 + $0xb0] sm:$0xff]
                  %2970 = vst [vmem:[%s2924 + $0xb0] sm:$0xff] %v2969
                  %v2971 = vld [vmem:[%s2923 + $0xb8] sm:$0xff]
                  %2972 = vst [vmem:[%s2924 + $0xb8] sm:$0xff] %v2971
                  %v2973 = vld [vmem:[%s2923 + $0xc0] sm:$0xff]
                  %2974 = vst [vmem:[%s2924 + $0xc0] sm:$0xff] %v2973
                  %v2975 = vld [vmem:[%s2923 + $0xc8] sm:$0xff]
                  %2976 = vst [vmem:[%s2924 + $0xc8] sm:$0xff] %v2975
                  %v2977 = vld [vmem:[%s2923 + $0xd0] sm:$0xff]
                  %2978 = vst [vmem:[%s2924 + $0xd0] sm:$0xff] %v2977
                  %v2979 = vld [vmem:[%s2923 + $0xd8] sm:$0xff]
                  %2980 = vst [vmem:[%s2924 + $0xd8] sm:$0xff] %v2979
                  %v2981 = vld [vmem:[%s2923 + $0xe0] sm:$0xff]
                  %2982 = vst [vmem:[%s2924 + $0xe0] sm:$0xff] %v2981
                  %v2983 = vld [vmem:[%s2923 + $0xe8] sm:$0xff]
                  %2984 = vst [vmem:[%s2924 + $0xe8] sm:$0xff] %v2983
                  %v2985 = vld [vmem:[%s2923 + $0xf0] sm:$0xff]
                  %2986 = vst [vmem:[%s2924 + $0xf0] sm:$0xff] %v2985
                  %v2987 = vld [vmem:[%s2923 + $0xf8] sm:$0xff]
                  %2988 = vst [vmem:[%s2924 + $0xf8] sm:$0xff] %v2987
                  %v2989 = vld [vmem:[%s2923 + $0x1f8] sm:$0xff]
                  %2990 = vst [vmem:[%s2924 + $0x3e8] sm:$0xff] %v2989
                  %v2991 = vld [vmem:[%s2923 + $0x200] sm:$0xff]
                  %2992 = vst [vmem:[%s2924 + $0x3f0] sm:$0xff] %v2991
                  %v2993 = vld [vmem:[%s2923 + $0x208] sm:$0xff]
                  %2994 = vst [vmem:[%s2924 + $0x3f8] sm:$0xff] %v2993
                  %v2995 = vld [vmem:[%s2923 + $0x210] sm:$0xff]
                  %2996 = vst [vmem:[%s2924 + $0x400] sm:$0xff] %v2995
                  %v2997 = vld [vmem:[%s2923 + $0x218] sm:$0xff]
                  %2998 = vst [vmem:[%s2924 + $0x408] sm:$0xff] %v2997
                  %v2999 = vld [vmem:[%s2923 + $0x220] sm:$0xff]
                  %3000 = vst [vmem:[%s2924 + $0x410] sm:$0xff] %v2999
                  %v3001 = vld [vmem:[%s2923 + $0x228] sm:$0xff]
                  %3002 = vst [vmem:[%s2924 + $0x418] sm:$0xff] %v3001
                  %v3003 = vld [vmem:[%s2923 + $0x230] sm:$0xff]
                  %3004 = vst [vmem:[%s2924 + $0x420] sm:$0xff] %v3003
                  %v3005 = vld [vmem:[%s2923 + $0x238] sm:$0xff]
                  %3006 = vst [vmem:[%s2924 + $0x428] sm:$0xff] %v3005
                  %v3007 = vld [vmem:[%s2923 + $0x240] sm:$0xff]
                  %3008 = vst [vmem:[%s2924 + $0x430] sm:$0xff] %v3007
                  %v3009 = vld [vmem:[%s2923 + $0x248] sm:$0xff]
                  %3010 = vst [vmem:[%s2924 + $0x438] sm:$0xff] %v3009
                  %v3011 = vld [vmem:[%s2923 + $0x250] sm:$0xff]
                  %3012 = vst [vmem:[%s2924 + $0x440] sm:$0xff] %v3011
                  %v3013 = vld [vmem:[%s2923 + $0x258] sm:$0xff]
                  %3014 = vst [vmem:[%s2924 + $0x448] sm:$0xff] %v3013
                  %v3015 = vld [vmem:[%s2923 + $0x260] sm:$0xff]
                  %3016 = vst [vmem:[%s2924 + $0x450] sm:$0xff] %v3015
                  %v3017 = vld [vmem:[%s2923 + $0x268] sm:$0xff]
                  %3018 = vst [vmem:[%s2924 + $0x458] sm:$0xff] %v3017
                  %v3019 = vld [vmem:[%s2923 + $0x270] sm:$0xff]
                  %3020 = vst [vmem:[%s2924 + $0x460] sm:$0xff] %v3019
                  %v3021 = vld [vmem:[%s2923 + $0x278] sm:$0xff]
                  %3022 = vst [vmem:[%s2924 + $0x468] sm:$0xff] %v3021
                  %v3023 = vld [vmem:[%s2923 + $0x280] sm:$0xff]
                  %3024 = vst [vmem:[%s2924 + $0x470] sm:$0xff] %v3023
                  %v3025 = vld [vmem:[%s2923 + $0x288] sm:$0xff]
                  %3026 = vst [vmem:[%s2924 + $0x478] sm:$0xff] %v3025
                  %v3027 = vld [vmem:[%s2923 + $0x290] sm:$0xff]
                  %3028 = vst [vmem:[%s2924 + $0x480] sm:$0xff] %v3027
                  %v3029 = vld [vmem:[%s2923 + $0x298] sm:$0xff]
                  %3030 = vst [vmem:[%s2924 + $0x488] sm:$0xff] %v3029
                  %v3031 = vld [vmem:[%s2923 + $0x2a0] sm:$0xff]
                  %3032 = vst [vmem:[%s2924 + $0x490] sm:$0xff] %v3031
                  %v3033 = vld [vmem:[%s2923 + $0x2a8] sm:$0xff]
                  %3034 = vst [vmem:[%s2924 + $0x498] sm:$0xff] %v3033
                  %v3035 = vld [vmem:[%s2923 + $0x2b0] sm:$0xff]
                  %3036 = vst [vmem:[%s2924 + $0x4a0] sm:$0xff] %v3035
                  %v3037 = vld [vmem:[%s2923 + $0x2b8] sm:$0xff]
                  %3038 = vst [vmem:[%s2924 + $0x4a8] sm:$0xff] %v3037
                  %v3039 = vld [vmem:[%s2923 + $0x2c0] sm:$0xff]
                  %3040 = vst [vmem:[%s2924 + $0x4b0] sm:$0xff] %v3039
                  %v3041 = vld [vmem:[%s2923 + $0x2c8] sm:$0xff]
                  %3042 = vst [vmem:[%s2924 + $0x4b8] sm:$0xff] %v3041
                  %v3043 = vld [vmem:[%s2923 + $0x2d0] sm:$0xff]
                  %3044 = vst [vmem:[%s2924 + $0x4c0] sm:$0xff] %v3043
                  %v3045 = vld [vmem:[%s2923 + $0x2d8] sm:$0xff]
                  %3046 = vst [vmem:[%s2924 + $0x4c8] sm:$0xff] %v3045
                  %v3047 = vld [vmem:[%s2923 + $0x2e0] sm:$0xff]
                  %3048 = vst [vmem:[%s2924 + $0x4d0] sm:$0xff] %v3047
                  %v3049 = vld [vmem:[%s2923 + $0x2e8] sm:$0xff]
                  %3050 = vst [vmem:[%s2924 + $0x4d8] sm:$0xff] %v3049
                  %v3051 = vld [vmem:[%s2923 + $0x2f0] sm:$0xff]
                  %3052 = vst [vmem:[%s2924 + $0x4e0] sm:$0xff] %v3051
                  %s3053 = sadd.s32 1, %s2922
                  %p3054 = scmp.ge.s32.totalorder %s3053, %s2915
                  %s3055 = scalar_select %p3054, 0, %s3053
                  %s3056 = smul.u32 %s3055, 256
                  %s3057 = smul.u32 %s3055, 256
                  %s3058 = scalar_lea.vmem %s2712, %s3056 [#allocation3]
                  %s3059 = scalar_lea.vmem %s2731, %s3057
                $region115: #{tpu_custom_call.1} parent=109 // loop_footer
                  %s2919 = sadd.s32 %s2917, 1
                $region116: #{tpu_custom_call.1} parent=109 // loop_footer_branch
                  %2916 = sbr.rel target = $region112
                $region117: #{tpu_custom_call.1} parent=109 // loop_exit
                  _
                %s3060 = sshrl.u32 %s2727, 5
                %s3061 = sand.u32 %s2727, 31
                %s3062 = smul.u32 %s3060, 32
                %s3063 = smul.u32 8, %s3062
                %s3064 = scalar_lea.vmem %s2712, %s3063 [#allocation3]
                %s3065 = smul.u32 8, %s3062
                %s3066 = scalar_lea.vmem %s2731, %s3065
                // While loop
                $region118: #{tpu_custom_call.1} parent=109 // loop_pre_header
                  _
                $region119: #{tpu_custom_call.1} parent=109 // loop_header
                  %s3068 = sphi 0, %s3070
                  %p3069 = scmp.ge.s32.totalorder %s3068, %s3061
                  %s3073 = sphi 0, %s3082
                  %s3074 = sphi %s3064, %s3085
                  %s3075 = sphi %s3066, %s3086
                $region120: #{tpu_custom_call.1} parent=109 // loop_header_branch
                  %3072 = sbr.rel (%p3069) target = $region124
                $region121: #{tpu_custom_call.1} parent=109 // loop_body
                  %v3076 = vld [vmem:[%s3074] sm:$0xff]
                  %3077 = vst [vmem:[%s3075] sm:$0xff] %v3076
                  %v3078 = vld [vmem:[%s3074 + $0x1f8] sm:$0xff]
                  %3079 = vst [vmem:[%s3075 + $0x3e8] sm:$0xff] %v3078
                  %s3080 = sadd.s32 1, %s3073
                  %p3081 = scmp.ge.s32.totalorder %s3080, %s3061
                  %s3082 = scalar_select %p3081, 0, %s3080
                  %s3083 = smul.u32 %s3082, 8
                  %s3084 = smul.u32 %s3082, 8
                  %s3085 = scalar_lea.vmem %s3064, %s3083 [#allocation3]
                  %s3086 = scalar_lea.vmem %s3066, %s3084
                $region122: #{tpu_custom_call.1} parent=109 // loop_footer
                  %s3070 = sadd.s32 %s3068, 1
                $region123: #{tpu_custom_call.1} parent=109 // loop_footer_branch
                  %3067 = sbr.rel target = $region119
                $region124: #{tpu_custom_call.1} parent=109 // loop_exit
                  _
              $region110: #{tpu_custom_call.1} parent=87 // pred_fallthru
                _
              // Predicated region
              $region125: #{tpu_custom_call.1} parent=87 // pred_check
                _
              $region126: #{tpu_custom_call.1} parent=87 // pred_check_branch
                %3088 = sbr.rel target = $region128
              $region127: #{tpu_custom_call.1} parent=87 // pred_region
                _
              $region128: #{tpu_custom_call.1} parent=87 // pred_fallthru
                _
            $region88: #{tpu_custom_call.1} parent=83 // pred_fallthru
              _
            // Predicated region
            $region89: #{tpu_custom_call.1} parent=83 // pred_check
              _
            $region90: #{tpu_custom_call.1} parent=83 // pred_check_branch
              %2738 = sbr.rel target = $region92
            $region91: #{tpu_custom_call.1} parent=83 // pred_region
              %s2740 = ssub.s32 256, 1
              %s2741 = sshrl.u32 %s2727, 5
              // While loop
              $region93: #{tpu_custom_call.1} parent=91 // loop_pre_header
                _
              $region94: #{tpu_custom_call.1} parent=91 // loop_header
                %s2743 = sphi 0, %s2745
                %p2744 = scmp.ge.s32.totalorder %s2743, %s2741
                %s2748 = sphi 0, %s2881
                %s2749 = sphi %s2712, %s2884
                %s2750 = sphi %s2731, %s2885
              $region95: #{tpu_custom_call.1} parent=91 // loop_header_branch
                %2747 = sbr.rel (%p2744) target = $region99
              $region96: #{tpu_custom_call.1} parent=91 // loop_body
                %v2751 = vld [vmem:[%s2749] sm:%s2740]
                %2752 = vst [vmem:[%s2750] sm:%s2740] %v2751
                %v2753 = vld [vmem:[%s2749 + $0x8] sm:%s2740]
                %2754 = vst [vmem:[%s2750 + $0x8] sm:%s2740] %v2753
                %v2755 = vld [vmem:[%s2749 + $0x10] sm:%s2740]
                %2756 = vst [vmem:[%s2750 + $0x10] sm:%s2740] %v2755
                %v2757 = vld [vmem:[%s2749 + $0x18] sm:%s2740]
                %2758 = vst [vmem:[%s2750 + $0x18] sm:%s2740] %v2757
                %v2759 = vld [vmem:[%s2749 + $0x20] sm:%s2740]
                %2760 = vst [vmem:[%s2750 + $0x20] sm:%s2740] %v2759
                %v2761 = vld [vmem:[%s2749 + $0x28] sm:%s2740]
                %2762 = vst [vmem:[%s2750 + $0x28] sm:%s2740] %v2761
                %v2763 = vld [vmem:[%s2749 + $0x30] sm:%s2740]
                %2764 = vst [vmem:[%s2750 + $0x30] sm:%s2740] %v2763
                %v2765 = vld [vmem:[%s2749 + $0x38] sm:%s2740]
                %2766 = vst [vmem:[%s2750 + $0x38] sm:%s2740] %v2765
                %v2767 = vld [vmem:[%s2749 + $0x40] sm:%s2740]
                %2768 = vst [vmem:[%s2750 + $0x40] sm:%s2740] %v2767
                %v2769 = vld [vmem:[%s2749 + $0x48] sm:%s2740]
                %2770 = vst [vmem:[%s2750 + $0x48] sm:%s2740] %v2769
                %v2771 = vld [vmem:[%s2749 + $0x50] sm:%s2740]
                %2772 = vst [vmem:[%s2750 + $0x50] sm:%s2740] %v2771
                %v2773 = vld [vmem:[%s2749 + $0x58] sm:%s2740]
                %2774 = vst [vmem:[%s2750 + $0x58] sm:%s2740] %v2773
                %v2775 = vld [vmem:[%s2749 + $0x60] sm:%s2740]
                %2776 = vst [vmem:[%s2750 + $0x60] sm:%s2740] %v2775
                %v2777 = vld [vmem:[%s2749 + $0x68] sm:%s2740]
                %2778 = vst [vmem:[%s2750 + $0x68] sm:%s2740] %v2777
                %v2779 = vld [vmem:[%s2749 + $0x70] sm:%s2740]
                %2780 = vst [vmem:[%s2750 + $0x70] sm:%s2740] %v2779
                %v2781 = vld [vmem:[%s2749 + $0x78] sm:%s2740]
                %2782 = vst [vmem:[%s2750 + $0x78] sm:%s2740] %v2781
                %v2783 = vld [vmem:[%s2749 + $0x80] sm:%s2740]
                %2784 = vst [vmem:[%s2750 + $0x80] sm:%s2740] %v2783
                %v2785 = vld [vmem:[%s2749 + $0x88] sm:%s2740]
                %2786 = vst [vmem:[%s2750 + $0x88] sm:%s2740] %v2785
                %v2787 = vld [vmem:[%s2749 + $0x90] sm:%s2740]
                %2788 = vst [vmem:[%s2750 + $0x90] sm:%s2740] %v2787
                %v2789 = vld [vmem:[%s2749 + $0x98] sm:%s2740]
                %2790 = vst [vmem:[%s2750 + $0x98] sm:%s2740] %v2789
                %v2791 = vld [vmem:[%s2749 + $0xa0] sm:%s2740]
                %2792 = vst [vmem:[%s2750 + $0xa0] sm:%s2740] %v2791
                %v2793 = vld [vmem:[%s2749 + $0xa8] sm:%s2740]
                %2794 = vst [vmem:[%s2750 + $0xa8] sm:%s2740] %v2793
                %v2795 = vld [vmem:[%s2749 + $0xb0] sm:%s2740]
                %2796 = vst [vmem:[%s2750 + $0xb0] sm:%s2740] %v2795
                %v2797 = vld [vmem:[%s2749 + $0xb8] sm:%s2740]
                %2798 = vst [vmem:[%s2750 + $0xb8] sm:%s2740] %v2797
                %v2799 = vld [vmem:[%s2749 + $0xc0] sm:%s2740]
                %2800 = vst [vmem:[%s2750 + $0xc0] sm:%s2740] %v2799
                %v2801 = vld [vmem:[%s2749 + $0xc8] sm:%s2740]
                %2802 = vst [vmem:[%s2750 + $0xc8] sm:%s2740] %v2801
                %v2803 = vld [vmem:[%s2749 + $0xd0] sm:%s2740]
                %2804 = vst [vmem:[%s2750 + $0xd0] sm:%s2740] %v2803
                %v2805 = vld [vmem:[%s2749 + $0xd8] sm:%s2740]
                %2806 = vst [vmem:[%s2750 + $0xd8] sm:%s2740] %v2805
                %v2807 = vld [vmem:[%s2749 + $0xe0] sm:%s2740]
                %2808 = vst [vmem:[%s2750 + $0xe0] sm:%s2740] %v2807
                %v2809 = vld [vmem:[%s2749 + $0xe8] sm:%s2740]
                %2810 = vst [vmem:[%s2750 + $0xe8] sm:%s2740] %v2809
                %v2811 = vld [vmem:[%s2749 + $0xf0] sm:%s2740]
                %2812 = vst [vmem:[%s2750 + $0xf0] sm:%s2740] %v2811
                %v2813 = vld [vmem:[%s2749 + $0xf8] sm:%s2740]
                %2814 = vst [vmem:[%s2750 + $0xf8] sm:%s2740] %v2813
                %v2815 = vld [vmem:[%s2749 + $0x1f8] sm:%s2740]
                %2816 = vst [vmem:[%s2750 + $0x3e8] sm:%s2740] %v2815
                %v2817 = vld [vmem:[%s2749 + $0x200] sm:%s2740]
                %2818 = vst [vmem:[%s2750 + $0x3f0] sm:%s2740] %v2817
                %v2819 = vld [vmem:[%s2749 + $0x208] sm:%s2740]
                %2820 = vst [vmem:[%s2750 + $0x3f8] sm:%s2740] %v2819
                %v2821 = vld [vmem:[%s2749 + $0x210] sm:%s2740]
                %2822 = vst [vmem:[%s2750 + $0x400] sm:%s2740] %v2821
                %v2823 = vld [vmem:[%s2749 + $0x218] sm:%s2740]
                %2824 = vst [vmem:[%s2750 + $0x408] sm:%s2740] %v2823
                %v2825 = vld [vmem:[%s2749 + $0x220] sm:%s2740]
                %2826 = vst [vmem:[%s2750 + $0x410] sm:%s2740] %v2825
                %v2827 = vld [vmem:[%s2749 + $0x228] sm:%s2740]
                %2828 = vst [vmem:[%s2750 + $0x418] sm:%s2740] %v2827
                %v2829 = vld [vmem:[%s2749 + $0x230] sm:%s2740]
                %2830 = vst [vmem:[%s2750 + $0x420] sm:%s2740] %v2829
                %v2831 = vld [vmem:[%s2749 + $0x238] sm:%s2740]
                %2832 = vst [vmem:[%s2750 + $0x428] sm:%s2740] %v2831
                %v2833 = vld [vmem:[%s2749 + $0x240] sm:%s2740]
                %2834 = vst [vmem:[%s2750 + $0x430] sm:%s2740] %v2833
                %v2835 = vld [vmem:[%s2749 + $0x248] sm:%s2740]
                %2836 = vst [vmem:[%s2750 + $0x438] sm:%s2740] %v2835
                %v2837 = vld [vmem:[%s2749 + $0x250] sm:%s2740]
                %2838 = vst [vmem:[%s2750 + $0x440] sm:%s2740] %v2837
                %v2839 = vld [vmem:[%s2749 + $0x258] sm:%s2740]
                %2840 = vst [vmem:[%s2750 + $0x448] sm:%s2740] %v2839
                %v2841 = vld [vmem:[%s2749 + $0x260] sm:%s2740]
                %2842 = vst [vmem:[%s2750 + $0x450] sm:%s2740] %v2841
                %v2843 = vld [vmem:[%s2749 + $0x268] sm:%s2740]
                %2844 = vst [vmem:[%s2750 + $0x458] sm:%s2740] %v2843
                %v2845 = vld [vmem:[%s2749 + $0x270] sm:%s2740]
                %2846 = vst [vmem:[%s2750 + $0x460] sm:%s2740] %v2845
                %v2847 = vld [vmem:[%s2749 + $0x278] sm:%s2740]
                %2848 = vst [vmem:[%s2750 + $0x468] sm:%s2740] %v2847
                %v2849 = vld [vmem:[%s2749 + $0x280] sm:%s2740]
                %2850 = vst [vmem:[%s2750 + $0x470] sm:%s2740] %v2849
                %v2851 = vld [vmem:[%s2749 + $0x288] sm:%s2740]
                %2852 = vst [vmem:[%s2750 + $0x478] sm:%s2740] %v2851
                %v2853 = vld [vmem:[%s2749 + $0x290] sm:%s2740]
                %2854 = vst [vmem:[%s2750 + $0x480] sm:%s2740] %v2853
                %v2855 = vld [vmem:[%s2749 + $0x298] sm:%s2740]
                %2856 = vst [vmem:[%s2750 + $0x488] sm:%s2740] %v2855
                %v2857 = vld [vmem:[%s2749 + $0x2a0] sm:%s2740]
                %2858 = vst [vmem:[%s2750 + $0x490] sm:%s2740] %v2857
                %v2859 = vld [vmem:[%s2749 + $0x2a8] sm:%s2740]
                %2860 = vst [vmem:[%s2750 + $0x498] sm:%s2740] %v2859
                %v2861 = vld [vmem:[%s2749 + $0x2b0] sm:%s2740]
                %2862 = vst [vmem:[%s2750 + $0x4a0] sm:%s2740] %v2861
                %v2863 = vld [vmem:[%s2749 + $0x2b8] sm:%s2740]
                %2864 = vst [vmem:[%s2750 + $0x4a8] sm:%s2740] %v2863
                %v2865 = vld [vmem:[%s2749 + $0x2c0] sm:%s2740]
                %2866 = vst [vmem:[%s2750 + $0x4b0] sm:%s2740] %v2865
                %v2867 = vld [vmem:[%s2749 + $0x2c8] sm:%s2740]
                %2868 = vst [vmem:[%s2750 + $0x4b8] sm:%s2740] %v2867
                %v2869 = vld [vmem:[%s2749 + $0x2d0] sm:%s2740]
                %2870 = vst [vmem:[%s2750 + $0x4c0] sm:%s2740] %v2869
                %v2871 = vld [vmem:[%s2749 + $0x2d8] sm:%s2740]
                %2872 = vst [vmem:[%s2750 + $0x4c8] sm:%s2740] %v2871
                %v2873 = vld [vmem:[%s2749 + $0x2e0] sm:%s2740]
                %2874 = vst [vmem:[%s2750 + $0x4d0] sm:%s2740] %v2873
                %v2875 = vld [vmem:[%s2749 + $0x2e8] sm:%s2740]
                %2876 = vst [vmem:[%s2750 + $0x4d8] sm:%s2740] %v2875
                %v2877 = vld [vmem:[%s2749 + $0x2f0] sm:%s2740]
                %2878 = vst [vmem:[%s2750 + $0x4e0] sm:%s2740] %v2877
                %s2879 = sadd.s32 1, %s2748
                %p2880 = scmp.ge.s32.totalorder %s2879, %s2741
                %s2881 = scalar_select %p2880, 0, %s2879
                %s2882 = smul.u32 %s2881, 256
                %s2883 = smul.u32 %s2881, 256
                %s2884 = scalar_lea.vmem %s2712, %s2882 [#allocation3]
                %s2885 = scalar_lea.vmem %s2731, %s2883
              $region97: #{tpu_custom_call.1} parent=91 // loop_footer
                %s2745 = sadd.s32 %s2743, 1
              $region98: #{tpu_custom_call.1} parent=91 // loop_footer_branch
                %2742 = sbr.rel target = $region94
              $region99: #{tpu_custom_call.1} parent=91 // loop_exit
                _
              %s2886 = sshrl.u32 %s2727, 5
              %s2887 = sand.u32 %s2727, 31
              %s2888 = smul.u32 %s2886, 32
              %s2889 = smul.u32 8, %s2888
              %s2890 = scalar_lea.vmem %s2712, %s2889 [#allocation3]
              %s2891 = smul.u32 8, %s2888
              %s2892 = scalar_lea.vmem %s2731, %s2891
              // While loop
              $region100: #{tpu_custom_call.1} parent=91 // loop_pre_header
                _
              $region101: #{tpu_custom_call.1} parent=91 // loop_header
                %s2894 = sphi 0, %s2896
                %p2895 = scmp.ge.s32.totalorder %s2894, %s2887
                %s2899 = sphi 0, %s2908
                %s2900 = sphi %s2890, %s2911
                %s2901 = sphi %s2892, %s2912
              $region102: #{tpu_custom_call.1} parent=91 // loop_header_branch
                %2898 = sbr.rel (%p2895) target = $region106
              $region103: #{tpu_custom_call.1} parent=91 // loop_body
                %v2902 = vld [vmem:[%s2900] sm:%s2740]
                %2903 = vst [vmem:[%s2901] sm:%s2740] %v2902
                %v2904 = vld [vmem:[%s2900 + $0x1f8] sm:%s2740]
                %2905 = vst [vmem:[%s2901 + $0x3e8] sm:%s2740] %v2904
                %s2906 = sadd.s32 1, %s2899
                %p2907 = scmp.ge.s32.totalorder %s2906, %s2887
                %s2908 = scalar_select %p2907, 0, %s2906
                %s2909 = smul.u32 %s2908, 8
                %s2910 = smul.u32 %s2908, 8
                %s2911 = scalar_lea.vmem %s2890, %s2909 [#allocation3]
                %s2912 = scalar_lea.vmem %s2892, %s2910
              $region104: #{tpu_custom_call.1} parent=91 // loop_footer
                %s2896 = sadd.s32 %s2894, 1
              $region105: #{tpu_custom_call.1} parent=91 // loop_footer_branch
                %2893 = sbr.rel target = $region101
              $region106: #{tpu_custom_call.1} parent=91 // loop_exit
                _
            $region92: #{tpu_custom_call.1} parent=83 // pred_fallthru
              _
          $region84: #{tpu_custom_call.1} parent=79 // pred_fallthru
            _
          %3089 = vnop
        $region80: #{tpu_custom_call.1} parent=71 // pred_fallthru
          _
        // Predicated region
        $region129: #{tpu_custom_call.1} parent=71 // pred_check
          %p3090 = pneg %p85
        $region130: #{tpu_custom_call.1} parent=71 // pred_check_branch
          %3092 = sbr.rel (%p3090) target = $region132
        $region131: #{tpu_custom_call.1} parent=71 // pred_region
          %s3093 = smul.u32 63, %s15
          %s3094 = ssub.s32 125, %s3093
          %p3095 = scmp.lt.s32.totalorder %s3094, 63
          %s3096 = scalar_select %p3095, %s3094, 63
          %s3097 = smul.u32 256, %s3096
          %p3098 = scmp.ne.s32.totalorder 0, %s3097
          %s3099 = smul.addr %s3093, 8
          %s3100 = scalar_lea.vmem %s2, %s3099
          // Predicated region
          $region133: #{tpu_custom_call.1} parent=131 // pred_check
            %p3101 = pneg %p3098
          $region134: #{tpu_custom_call.1} parent=131 // pred_check_branch
            %3103 = sbr.rel (%p3101) target = $region136
          $region135: #{tpu_custom_call.1} parent=131 // pred_region
            // Predicated region
            $region137: #{tpu_custom_call.1} parent=135 // pred_check
              _
            $region138: #{tpu_custom_call.1} parent=135 // pred_check_branch
              %3105 = sbr.rel (0) target = $region140
            $region139: #{tpu_custom_call.1} parent=135 // pred_region
              // Predicated region
              $region159: #{tpu_custom_call.1} parent=139 // pred_check
                _
              $region160: #{tpu_custom_call.1} parent=139 // pred_check_branch
                %3283 = sbr.rel (0) target = $region162
              $region161: #{tpu_custom_call.1} parent=139 // pred_region
                %s3284 = sshrl.u32 %s3096, 5
                // While loop
                $region163: #{tpu_custom_call.1} parent=161 // loop_pre_header
                  _
                $region164: #{tpu_custom_call.1} parent=161 // loop_header
                  %s3286 = sphi 0, %s3288
                  %p3287 = scmp.ge.s32.totalorder %s3286, %s3284
                  %s3291 = sphi 0, %s3424
                  %s3292 = sphi %s2716, %s3427
                  %s3293 = sphi %s3100, %s3428
                $region165: #{tpu_custom_call.1} parent=161 // loop_header_branch
                  %3290 = sbr.rel (%p3287) target = $region169
                $region166: #{tpu_custom_call.1} parent=161 // loop_body
                  %v3294 = vld [vmem:[%s3292] sm:$0xff]
                  %3295 = vst [vmem:[%s3293] sm:$0xff] %v3294
                  %v3296 = vld [vmem:[%s3292 + $0x8] sm:$0xff]
                  %3297 = vst [vmem:[%s3293 + $0x8] sm:$0xff] %v3296
                  %v3298 = vld [vmem:[%s3292 + $0x10] sm:$0xff]
                  %3299 = vst [vmem:[%s3293 + $0x10] sm:$0xff] %v3298
                  %v3300 = vld [vmem:[%s3292 + $0x18] sm:$0xff]
                  %3301 = vst [vmem:[%s3293 + $0x18] sm:$0xff] %v3300
                  %v3302 = vld [vmem:[%s3292 + $0x20] sm:$0xff]
                  %3303 = vst [vmem:[%s3293 + $0x20] sm:$0xff] %v3302
                  %v3304 = vld [vmem:[%s3292 + $0x28] sm:$0xff]
                  %3305 = vst [vmem:[%s3293 + $0x28] sm:$0xff] %v3304
                  %v3306 = vld [vmem:[%s3292 + $0x30] sm:$0xff]
                  %3307 = vst [vmem:[%s3293 + $0x30] sm:$0xff] %v3306
                  %v3308 = vld [vmem:[%s3292 + $0x38] sm:$0xff]
                  %3309 = vst [vmem:[%s3293 + $0x38] sm:$0xff] %v3308
                  %v3310 = vld [vmem:[%s3292 + $0x40] sm:$0xff]
                  %3311 = vst [vmem:[%s3293 + $0x40] sm:$0xff] %v3310
                  %v3312 = vld [vmem:[%s3292 + $0x48] sm:$0xff]
                  %3313 = vst [vmem:[%s3293 + $0x48] sm:$0xff] %v3312
                  %v3314 = vld [vmem:[%s3292 + $0x50] sm:$0xff]
                  %3315 = vst [vmem:[%s3293 + $0x50] sm:$0xff] %v3314
                  %v3316 = vld [vmem:[%s3292 + $0x58] sm:$0xff]
                  %3317 = vst [vmem:[%s3293 + $0x58] sm:$0xff] %v3316
                  %v3318 = vld [vmem:[%s3292 + $0x60] sm:$0xff]
                  %3319 = vst [vmem:[%s3293 + $0x60] sm:$0xff] %v3318
                  %v3320 = vld [vmem:[%s3292 + $0x68] sm:$0xff]
                  %3321 = vst [vmem:[%s3293 + $0x68] sm:$0xff] %v3320
                  %v3322 = vld [vmem:[%s3292 + $0x70] sm:$0xff]
                  %3323 = vst [vmem:[%s3293 + $0x70] sm:$0xff] %v3322
                  %v3324 = vld [vmem:[%s3292 + $0x78] sm:$0xff]
                  %3325 = vst [vmem:[%s3293 + $0x78] sm:$0xff] %v3324
                  %v3326 = vld [vmem:[%s3292 + $0x80] sm:$0xff]
                  %3327 = vst [vmem:[%s3293 + $0x80] sm:$0xff] %v3326
                  %v3328 = vld [vmem:[%s3292 + $0x88] sm:$0xff]
                  %3329 = vst [vmem:[%s3293 + $0x88] sm:$0xff] %v3328
                  %v3330 = vld [vmem:[%s3292 + $0x90] sm:$0xff]
                  %3331 = vst [vmem:[%s3293 + $0x90] sm:$0xff] %v3330
                  %v3332 = vld [vmem:[%s3292 + $0x98] sm:$0xff]
                  %3333 = vst [vmem:[%s3293 + $0x98] sm:$0xff] %v3332
                  %v3334 = vld [vmem:[%s3292 + $0xa0] sm:$0xff]
                  %3335 = vst [vmem:[%s3293 + $0xa0] sm:$0xff] %v3334
                  %v3336 = vld [vmem:[%s3292 + $0xa8] sm:$0xff]
                  %3337 = vst [vmem:[%s3293 + $0xa8] sm:$0xff] %v3336
                  %v3338 = vld [vmem:[%s3292 + $0xb0] sm:$0xff]
                  %3339 = vst [vmem:[%s3293 + $0xb0] sm:$0xff] %v3338
                  %v3340 = vld [vmem:[%s3292 + $0xb8] sm:$0xff]
                  %3341 = vst [vmem:[%s3293 + $0xb8] sm:$0xff] %v3340
                  %v3342 = vld [vmem:[%s3292 + $0xc0] sm:$0xff]
                  %3343 = vst [vmem:[%s3293 + $0xc0] sm:$0xff] %v3342
                  %v3344 = vld [vmem:[%s3292 + $0xc8] sm:$0xff]
                  %3345 = vst [vmem:[%s3293 + $0xc8] sm:$0xff] %v3344
                  %v3346 = vld [vmem:[%s3292 + $0xd0] sm:$0xff]
                  %3347 = vst [vmem:[%s3293 + $0xd0] sm:$0xff] %v3346
                  %v3348 = vld [vmem:[%s3292 + $0xd8] sm:$0xff]
                  %3349 = vst [vmem:[%s3293 + $0xd8] sm:$0xff] %v3348
                  %v3350 = vld [vmem:[%s3292 + $0xe0] sm:$0xff]
                  %3351 = vst [vmem:[%s3293 + $0xe0] sm:$0xff] %v3350
                  %v3352 = vld [vmem:[%s3292 + $0xe8] sm:$0xff]
                  %3353 = vst [vmem:[%s3293 + $0xe8] sm:$0xff] %v3352
                  %v3354 = vld [vmem:[%s3292 + $0xf0] sm:$0xff]
                  %3355 = vst [vmem:[%s3293 + $0xf0] sm:$0xff] %v3354
                  %v3356 = vld [vmem:[%s3292 + $0xf8] sm:$0xff]
                  %3357 = vst [vmem:[%s3293 + $0xf8] sm:$0xff] %v3356
                  %v3358 = vld [vmem:[%s3292 + $0x1f8] sm:$0xff]
                  %3359 = vst [vmem:[%s3293 + $0x3e8] sm:$0xff] %v3358
                  %v3360 = vld [vmem:[%s3292 + $0x200] sm:$0xff]
                  %3361 = vst [vmem:[%s3293 + $0x3f0] sm:$0xff] %v3360
                  %v3362 = vld [vmem:[%s3292 + $0x208] sm:$0xff]
                  %3363 = vst [vmem:[%s3293 + $0x3f8] sm:$0xff] %v3362
                  %v3364 = vld [vmem:[%s3292 + $0x210] sm:$0xff]
                  %3365 = vst [vmem:[%s3293 + $0x400] sm:$0xff] %v3364
                  %v3366 = vld [vmem:[%s3292 + $0x218] sm:$0xff]
                  %3367 = vst [vmem:[%s3293 + $0x408] sm:$0xff] %v3366
                  %v3368 = vld [vmem:[%s3292 + $0x220] sm:$0xff]
                  %3369 = vst [vmem:[%s3293 + $0x410] sm:$0xff] %v3368
                  %v3370 = vld [vmem:[%s3292 + $0x228] sm:$0xff]
                  %3371 = vst [vmem:[%s3293 + $0x418] sm:$0xff] %v3370
                  %v3372 = vld [vmem:[%s3292 + $0x230] sm:$0xff]
                  %3373 = vst [vmem:[%s3293 + $0x420] sm:$0xff] %v3372
                  %v3374 = vld [vmem:[%s3292 + $0x238] sm:$0xff]
                  %3375 = vst [vmem:[%s3293 + $0x428] sm:$0xff] %v3374
                  %v3376 = vld [vmem:[%s3292 + $0x240] sm:$0xff]
                  %3377 = vst [vmem:[%s3293 + $0x430] sm:$0xff] %v3376
                  %v3378 = vld [vmem:[%s3292 + $0x248] sm:$0xff]
                  %3379 = vst [vmem:[%s3293 + $0x438] sm:$0xff] %v3378
                  %v3380 = vld [vmem:[%s3292 + $0x250] sm:$0xff]
                  %3381 = vst [vmem:[%s3293 + $0x440] sm:$0xff] %v3380
                  %v3382 = vld [vmem:[%s3292 + $0x258] sm:$0xff]
                  %3383 = vst [vmem:[%s3293 + $0x448] sm:$0xff] %v3382
                  %v3384 = vld [vmem:[%s3292 + $0x260] sm:$0xff]
                  %3385 = vst [vmem:[%s3293 + $0x450] sm:$0xff] %v3384
                  %v3386 = vld [vmem:[%s3292 + $0x268] sm:$0xff]
                  %3387 = vst [vmem:[%s3293 + $0x458] sm:$0xff] %v3386
                  %v3388 = vld [vmem:[%s3292 + $0x270] sm:$0xff]
                  %3389 = vst [vmem:[%s3293 + $0x460] sm:$0xff] %v3388
                  %v3390 = vld [vmem:[%s3292 + $0x278] sm:$0xff]
                  %3391 = vst [vmem:[%s3293 + $0x468] sm:$0xff] %v3390
                  %v3392 = vld [vmem:[%s3292 + $0x280] sm:$0xff]
                  %3393 = vst [vmem:[%s3293 + $0x470] sm:$0xff] %v3392
                  %v3394 = vld [vmem:[%s3292 + $0x288] sm:$0xff]
                  %3395 = vst [vmem:[%s3293 + $0x478] sm:$0xff] %v3394
                  %v3396 = vld [vmem:[%s3292 + $0x290] sm:$0xff]
                  %3397 = vst [vmem:[%s3293 + $0x480] sm:$0xff] %v3396
                  %v3398 = vld [vmem:[%s3292 + $0x298] sm:$0xff]
                  %3399 = vst [vmem:[%s3293 + $0x488] sm:$0xff] %v3398
                  %v3400 = vld [vmem:[%s3292 + $0x2a0] sm:$0xff]
                  %3401 = vst [vmem:[%s3293 + $0x490] sm:$0xff] %v3400
                  %v3402 = vld [vmem:[%s3292 + $0x2a8] sm:$0xff]
                  %3403 = vst [vmem:[%s3293 + $0x498] sm:$0xff] %v3402
                  %v3404 = vld [vmem:[%s3292 + $0x2b0] sm:$0xff]
                  %3405 = vst [vmem:[%s3293 + $0x4a0] sm:$0xff] %v3404
                  %v3406 = vld [vmem:[%s3292 + $0x2b8] sm:$0xff]
                  %3407 = vst [vmem:[%s3293 + $0x4a8] sm:$0xff] %v3406
                  %v3408 = vld [vmem:[%s3292 + $0x2c0] sm:$0xff]
                  %3409 = vst [vmem:[%s3293 + $0x4b0] sm:$0xff] %v3408
                  %v3410 = vld [vmem:[%s3292 + $0x2c8] sm:$0xff]
                  %3411 = vst [vmem:[%s3293 + $0x4b8] sm:$0xff] %v3410
                  %v3412 = vld [vmem:[%s3292 + $0x2d0] sm:$0xff]
                  %3413 = vst [vmem:[%s3293 + $0x4c0] sm:$0xff] %v3412
                  %v3414 = vld [vmem:[%s3292 + $0x2d8] sm:$0xff]
                  %3415 = vst [vmem:[%s3293 + $0x4c8] sm:$0xff] %v3414
                  %v3416 = vld [vmem:[%s3292 + $0x2e0] sm:$0xff]
                  %3417 = vst [vmem:[%s3293 + $0x4d0] sm:$0xff] %v3416
                  %v3418 = vld [vmem:[%s3292 + $0x2e8] sm:$0xff]
                  %3419 = vst [vmem:[%s3293 + $0x4d8] sm:$0xff] %v3418
                  %v3420 = vld [vmem:[%s3292 + $0x2f0] sm:$0xff]
                  %3421 = vst [vmem:[%s3293 + $0x4e0] sm:$0xff] %v3420
                  %s3422 = sadd.s32 1, %s3291
                  %p3423 = scmp.ge.s32.totalorder %s3422, %s3284
                  %s3424 = scalar_select %p3423, 0, %s3422
                  %s3425 = smul.u32 %s3424, 256
                  %s3426 = smul.u32 %s3424, 256
                  %s3427 = scalar_lea.vmem %s2716, %s3425 [#allocation4]
                  %s3428 = scalar_lea.vmem %s3100, %s3426
                $region167: #{tpu_custom_call.1} parent=161 // loop_footer
                  %s3288 = sadd.s32 %s3286, 1
                $region168: #{tpu_custom_call.1} parent=161 // loop_footer_branch
                  %3285 = sbr.rel target = $region164
                $region169: #{tpu_custom_call.1} parent=161 // loop_exit
                  _
                %s3429 = sshrl.u32 %s3096, 5
                %s3430 = sand.u32 %s3096, 31
                %s3431 = smul.u32 %s3429, 32
                %s3432 = smul.u32 8, %s3431
                %s3433 = scalar_lea.vmem %s2716, %s3432 [#allocation4]
                %s3434 = smul.u32 8, %s3431
                %s3435 = scalar_lea.vmem %s3100, %s3434
                // While loop
                $region170: #{tpu_custom_call.1} parent=161 // loop_pre_header
                  _
                $region171: #{tpu_custom_call.1} parent=161 // loop_header
                  %s3437 = sphi 0, %s3439
                  %p3438 = scmp.ge.s32.totalorder %s3437, %s3430
                  %s3442 = sphi 0, %s3451
                  %s3443 = sphi %s3433, %s3454
                  %s3444 = sphi %s3435, %s3455
                $region172: #{tpu_custom_call.1} parent=161 // loop_header_branch
                  %3441 = sbr.rel (%p3438) target = $region176
                $region173: #{tpu_custom_call.1} parent=161 // loop_body
                  %v3445 = vld [vmem:[%s3443] sm:$0xff]
                  %3446 = vst [vmem:[%s3444] sm:$0xff] %v3445
                  %v3447 = vld [vmem:[%s3443 + $0x1f8] sm:$0xff]
                  %3448 = vst [vmem:[%s3444 + $0x3e8] sm:$0xff] %v3447
                  %s3449 = sadd.s32 1, %s3442
                  %p3450 = scmp.ge.s32.totalorder %s3449, %s3430
                  %s3451 = scalar_select %p3450, 0, %s3449
                  %s3452 = smul.u32 %s3451, 8
                  %s3453 = smul.u32 %s3451, 8
                  %s3454 = scalar_lea.vmem %s3433, %s3452 [#allocation4]
                  %s3455 = scalar_lea.vmem %s3435, %s3453
                $region174: #{tpu_custom_call.1} parent=161 // loop_footer
                  %s3439 = sadd.s32 %s3437, 1
                $region175: #{tpu_custom_call.1} parent=161 // loop_footer_branch
                  %3436 = sbr.rel target = $region171
                $region176: #{tpu_custom_call.1} parent=161 // loop_exit
                  _
              $region162: #{tpu_custom_call.1} parent=139 // pred_fallthru
                _
              // Predicated region
              $region177: #{tpu_custom_call.1} parent=139 // pred_check
                _
              $region178: #{tpu_custom_call.1} parent=139 // pred_check_branch
                %3457 = sbr.rel target = $region180
              $region179: #{tpu_custom_call.1} parent=139 // pred_region
                _
              $region180: #{tpu_custom_call.1} parent=139 // pred_fallthru
                _
            $region140: #{tpu_custom_call.1} parent=135 // pred_fallthru
              _
            // Predicated region
            $region141: #{tpu_custom_call.1} parent=135 // pred_check
              _
            $region142: #{tpu_custom_call.1} parent=135 // pred_check_branch
              %3107 = sbr.rel target = $region144
            $region143: #{tpu_custom_call.1} parent=135 // pred_region
              %s3109 = ssub.s32 256, 1
              %s3110 = sshrl.u32 %s3096, 5
              // While loop
              $region145: #{tpu_custom_call.1} parent=143 // loop_pre_header
                _
              $region146: #{tpu_custom_call.1} parent=143 // loop_header
                %s3112 = sphi 0, %s3114
                %p3113 = scmp.ge.s32.totalorder %s3112, %s3110
                %s3117 = sphi 0, %s3250
                %s3118 = sphi %s2716, %s3253
                %s3119 = sphi %s3100, %s3254
              $region147: #{tpu_custom_call.1} parent=143 // loop_header_branch
                %3116 = sbr.rel (%p3113) target = $region151
              $region148: #{tpu_custom_call.1} parent=143 // loop_body
                %v3120 = vld [vmem:[%s3118] sm:%s3109]
                %3121 = vst [vmem:[%s3119] sm:%s3109] %v3120
                %v3122 = vld [vmem:[%s3118 + $0x8] sm:%s3109]
                %3123 = vst [vmem:[%s3119 + $0x8] sm:%s3109] %v3122
                %v3124 = vld [vmem:[%s3118 + $0x10] sm:%s3109]
                %3125 = vst [vmem:[%s3119 + $0x10] sm:%s3109] %v3124
                %v3126 = vld [vmem:[%s3118 + $0x18] sm:%s3109]
                %3127 = vst [vmem:[%s3119 + $0x18] sm:%s3109] %v3126
                %v3128 = vld [vmem:[%s3118 + $0x20] sm:%s3109]
                %3129 = vst [vmem:[%s3119 + $0x20] sm:%s3109] %v3128
                %v3130 = vld [vmem:[%s3118 + $0x28] sm:%s3109]
                %3131 = vst [vmem:[%s3119 + $0x28] sm:%s3109] %v3130
                %v3132 = vld [vmem:[%s3118 + $0x30] sm:%s3109]
                %3133 = vst [vmem:[%s3119 + $0x30] sm:%s3109] %v3132
                %v3134 = vld [vmem:[%s3118 + $0x38] sm:%s3109]
                %3135 = vst [vmem:[%s3119 + $0x38] sm:%s3109] %v3134
                %v3136 = vld [vmem:[%s3118 + $0x40] sm:%s3109]
                %3137 = vst [vmem:[%s3119 + $0x40] sm:%s3109] %v3136
                %v3138 = vld [vmem:[%s3118 + $0x48] sm:%s3109]
                %3139 = vst [vmem:[%s3119 + $0x48] sm:%s3109] %v3138
                %v3140 = vld [vmem:[%s3118 + $0x50] sm:%s3109]
                %3141 = vst [vmem:[%s3119 + $0x50] sm:%s3109] %v3140
                %v3142 = vld [vmem:[%s3118 + $0x58] sm:%s3109]
                %3143 = vst [vmem:[%s3119 + $0x58] sm:%s3109] %v3142
                %v3144 = vld [vmem:[%s3118 + $0x60] sm:%s3109]
                %3145 = vst [vmem:[%s3119 + $0x60] sm:%s3109] %v3144
                %v3146 = vld [vmem:[%s3118 + $0x68] sm:%s3109]
                %3147 = vst [vmem:[%s3119 + $0x68] sm:%s3109] %v3146
                %v3148 = vld [vmem:[%s3118 + $0x70] sm:%s3109]
                %3149 = vst [vmem:[%s3119 + $0x70] sm:%s3109] %v3148
                %v3150 = vld [vmem:[%s3118 + $0x78] sm:%s3109]
                %3151 = vst [vmem:[%s3119 + $0x78] sm:%s3109] %v3150
                %v3152 = vld [vmem:[%s3118 + $0x80] sm:%s3109]
                %3153 = vst [vmem:[%s3119 + $0x80] sm:%s3109] %v3152
                %v3154 = vld [vmem:[%s3118 + $0x88] sm:%s3109]
                %3155 = vst [vmem:[%s3119 + $0x88] sm:%s3109] %v3154
                %v3156 = vld [vmem:[%s3118 + $0x90] sm:%s3109]
                %3157 = vst [vmem:[%s3119 + $0x90] sm:%s3109] %v3156
                %v3158 = vld [vmem:[%s3118 + $0x98] sm:%s3109]
                %3159 = vst [vmem:[%s3119 + $0x98] sm:%s3109] %v3158
                %v3160 = vld [vmem:[%s3118 + $0xa0] sm:%s3109]
                %3161 = vst [vmem:[%s3119 + $0xa0] sm:%s3109] %v3160
                %v3162 = vld [vmem:[%s3118 + $0xa8] sm:%s3109]
                %3163 = vst [vmem:[%s3119 + $0xa8] sm:%s3109] %v3162
                %v3164 = vld [vmem:[%s3118 + $0xb0] sm:%s3109]
                %3165 = vst [vmem:[%s3119 + $0xb0] sm:%s3109] %v3164
                %v3166 = vld [vmem:[%s3118 + $0xb8] sm:%s3109]
                %3167 = vst [vmem:[%s3119 + $0xb8] sm:%s3109] %v3166
                %v3168 = vld [vmem:[%s3118 + $0xc0] sm:%s3109]
                %3169 = vst [vmem:[%s3119 + $0xc0] sm:%s3109] %v3168
                %v3170 = vld [vmem:[%s3118 + $0xc8] sm:%s3109]
                %3171 = vst [vmem:[%s3119 + $0xc8] sm:%s3109] %v3170
                %v3172 = vld [vmem:[%s3118 + $0xd0] sm:%s3109]
                %3173 = vst [vmem:[%s3119 + $0xd0] sm:%s3109] %v3172
                %v3174 = vld [vmem:[%s3118 + $0xd8] sm:%s3109]
                %3175 = vst [vmem:[%s3119 + $0xd8] sm:%s3109] %v3174
                %v3176 = vld [vmem:[%s3118 + $0xe0] sm:%s3109]
                %3177 = vst [vmem:[%s3119 + $0xe0] sm:%s3109] %v3176
                %v3178 = vld [vmem:[%s3118 + $0xe8] sm:%s3109]
                %3179 = vst [vmem:[%s3119 + $0xe8] sm:%s3109] %v3178
                %v3180 = vld [vmem:[%s3118 + $0xf0] sm:%s3109]
                %3181 = vst [vmem:[%s3119 + $0xf0] sm:%s3109] %v3180
                %v3182 = vld [vmem:[%s3118 + $0xf8] sm:%s3109]
                %3183 = vst [vmem:[%s3119 + $0xf8] sm:%s3109] %v3182
                %v3184 = vld [vmem:[%s3118 + $0x1f8] sm:%s3109]
                %3185 = vst [vmem:[%s3119 + $0x3e8] sm:%s3109] %v3184
                %v3186 = vld [vmem:[%s3118 + $0x200] sm:%s3109]
                %3187 = vst [vmem:[%s3119 + $0x3f0] sm:%s3109] %v3186
                %v3188 = vld [vmem:[%s3118 + $0x208] sm:%s3109]
                %3189 = vst [vmem:[%s3119 + $0x3f8] sm:%s3109] %v3188
                %v3190 = vld [vmem:[%s3118 + $0x210] sm:%s3109]
                %3191 = vst [vmem:[%s3119 + $0x400] sm:%s3109] %v3190
                %v3192 = vld [vmem:[%s3118 + $0x218] sm:%s3109]
                %3193 = vst [vmem:[%s3119 + $0x408] sm:%s3109] %v3192
                %v3194 = vld [vmem:[%s3118 + $0x220] sm:%s3109]
                %3195 = vst [vmem:[%s3119 + $0x410] sm:%s3109] %v3194
                %v3196 = vld [vmem:[%s3118 + $0x228] sm:%s3109]
                %3197 = vst [vmem:[%s3119 + $0x418] sm:%s3109] %v3196
                %v3198 = vld [vmem:[%s3118 + $0x230] sm:%s3109]
                %3199 = vst [vmem:[%s3119 + $0x420] sm:%s3109] %v3198
                %v3200 = vld [vmem:[%s3118 + $0x238] sm:%s3109]
                %3201 = vst [vmem:[%s3119 + $0x428] sm:%s3109] %v3200
                %v3202 = vld [vmem:[%s3118 + $0x240] sm:%s3109]
                %3203 = vst [vmem:[%s3119 + $0x430] sm:%s3109] %v3202
                %v3204 = vld [vmem:[%s3118 + $0x248] sm:%s3109]
                %3205 = vst [vmem:[%s3119 + $0x438] sm:%s3109] %v3204
                %v3206 = vld [vmem:[%s3118 + $0x250] sm:%s3109]
                %3207 = vst [vmem:[%s3119 + $0x440] sm:%s3109] %v3206
                %v3208 = vld [vmem:[%s3118 + $0x258] sm:%s3109]
                %3209 = vst [vmem:[%s3119 + $0x448] sm:%s3109] %v3208
                %v3210 = vld [vmem:[%s3118 + $0x260] sm:%s3109]
                %3211 = vst [vmem:[%s3119 + $0x450] sm:%s3109] %v3210
                %v3212 = vld [vmem:[%s3118 + $0x268] sm:%s3109]
                %3213 = vst [vmem:[%s3119 + $0x458] sm:%s3109] %v3212
                %v3214 = vld [vmem:[%s3118 + $0x270] sm:%s3109]
                %3215 = vst [vmem:[%s3119 + $0x460] sm:%s3109] %v3214
                %v3216 = vld [vmem:[%s3118 + $0x278] sm:%s3109]
                %3217 = vst [vmem:[%s3119 + $0x468] sm:%s3109] %v3216
                %v3218 = vld [vmem:[%s3118 + $0x280] sm:%s3109]
                %3219 = vst [vmem:[%s3119 + $0x470] sm:%s3109] %v3218
                %v3220 = vld [vmem:[%s3118 + $0x288] sm:%s3109]
                %3221 = vst [vmem:[%s3119 + $0x478] sm:%s3109] %v3220
                %v3222 = vld [vmem:[%s3118 + $0x290] sm:%s3109]
                %3223 = vst [vmem:[%s3119 + $0x480] sm:%s3109] %v3222
                %v3224 = vld [vmem:[%s3118 + $0x298] sm:%s3109]
                %3225 = vst [vmem:[%s3119 + $0x488] sm:%s3109] %v3224
                %v3226 = vld [vmem:[%s3118 + $0x2a0] sm:%s3109]
                %3227 = vst [vmem:[%s3119 + $0x490] sm:%s3109] %v3226
                %v3228 = vld [vmem:[%s3118 + $0x2a8] sm:%s3109]
                %3229 = vst [vmem:[%s3119 + $0x498] sm:%s3109] %v3228
                %v3230 = vld [vmem:[%s3118 + $0x2b0] sm:%s3109]
                %3231 = vst [vmem:[%s3119 + $0x4a0] sm:%s3109] %v3230
                %v3232 = vld [vmem:[%s3118 + $0x2b8] sm:%s3109]
                %3233 = vst [vmem:[%s3119 + $0x4a8] sm:%s3109] %v3232
                %v3234 = vld [vmem:[%s3118 + $0x2c0] sm:%s3109]
                %3235 = vst [vmem:[%s3119 + $0x4b0] sm:%s3109] %v3234
                %v3236 = vld [vmem:[%s3118 + $0x2c8] sm:%s3109]
                %3237 = vst [vmem:[%s3119 + $0x4b8] sm:%s3109] %v3236
                %v3238 = vld [vmem:[%s3118 + $0x2d0] sm:%s3109]
                %3239 = vst [vmem:[%s3119 + $0x4c0] sm:%s3109] %v3238
                %v3240 = vld [vmem:[%s3118 + $0x2d8] sm:%s3109]
                %3241 = vst [vmem:[%s3119 + $0x4c8] sm:%s3109] %v3240
                %v3242 = vld [vmem:[%s3118 + $0x2e0] sm:%s3109]
                %3243 = vst [vmem:[%s3119 + $0x4d0] sm:%s3109] %v3242
                %v3244 = vld [vmem:[%s3118 + $0x2e8] sm:%s3109]
                %3245 = vst [vmem:[%s3119 + $0x4d8] sm:%s3109] %v3244
                %v3246 = vld [vmem:[%s3118 + $0x2f0] sm:%s3109]
                %3247 = vst [vmem:[%s3119 + $0x4e0] sm:%s3109] %v3246
                %s3248 = sadd.s32 1, %s3117
                %p3249 = scmp.ge.s32.totalorder %s3248, %s3110
                %s3250 = scalar_select %p3249, 0, %s3248
                %s3251 = smul.u32 %s3250, 256
                %s3252 = smul.u32 %s3250, 256
                %s3253 = scalar_lea.vmem %s2716, %s3251 [#allocation4]
                %s3254 = scalar_lea.vmem %s3100, %s3252
              $region149: #{tpu_custom_call.1} parent=143 // loop_footer
                %s3114 = sadd.s32 %s3112, 1
              $region150: #{tpu_custom_call.1} parent=143 // loop_footer_branch
                %3111 = sbr.rel target = $region146
              $region151: #{tpu_custom_call.1} parent=143 // loop_exit
                _
              %s3255 = sshrl.u32 %s3096, 5
              %s3256 = sand.u32 %s3096, 31
              %s3257 = smul.u32 %s3255, 32
              %s3258 = smul.u32 8, %s3257
              %s3259 = scalar_lea.vmem %s2716, %s3258 [#allocation4]
              %s3260 = smul.u32 8, %s3257
              %s3261 = scalar_lea.vmem %s3100, %s3260
              // While loop
              $region152: #{tpu_custom_call.1} parent=143 // loop_pre_header
                _
              $region153: #{tpu_custom_call.1} parent=143 // loop_header
                %s3263 = sphi 0, %s3265
                %p3264 = scmp.ge.s32.totalorder %s3263, %s3256
                %s3268 = sphi 0, %s3277
                %s3269 = sphi %s3259, %s3280
                %s3270 = sphi %s3261, %s3281
              $region154: #{tpu_custom_call.1} parent=143 // loop_header_branch
                %3267 = sbr.rel (%p3264) target = $region158
              $region155: #{tpu_custom_call.1} parent=143 // loop_body
                %v3271 = vld [vmem:[%s3269] sm:%s3109]
                %3272 = vst [vmem:[%s3270] sm:%s3109] %v3271
                %v3273 = vld [vmem:[%s3269 + $0x1f8] sm:%s3109]
                %3274 = vst [vmem:[%s3270 + $0x3e8] sm:%s3109] %v3273
                %s3275 = sadd.s32 1, %s3268
                %p3276 = scmp.ge.s32.totalorder %s3275, %s3256
                %s3277 = scalar_select %p3276, 0, %s3275
                %s3278 = smul.u32 %s3277, 8
                %s3279 = smul.u32 %s3277, 8
                %s3280 = scalar_lea.vmem %s3259, %s3278 [#allocation4]
                %s3281 = scalar_lea.vmem %s3261, %s3279
              $region156: #{tpu_custom_call.1} parent=143 // loop_footer
                %s3265 = sadd.s32 %s3263, 1
              $region157: #{tpu_custom_call.1} parent=143 // loop_footer_branch
                %3262 = sbr.rel target = $region153
              $region158: #{tpu_custom_call.1} parent=143 // loop_exit
                _
            $region144: #{tpu_custom_call.1} parent=135 // pred_fallthru
              _
          $region136: #{tpu_custom_call.1} parent=131 // pred_fallthru
            _
          %3458 = vnop
        $region132: #{tpu_custom_call.1} parent=71 // pred_fallthru
          _
        // Predicated region
        $region181: #{tpu_custom_call.1} parent=71 // pred_check
          %p3459 = pneg %p111
        $region182: #{tpu_custom_call.1} parent=71 // pred_check_branch
          %3461 = sbr.rel (%p3459) target = $region184
        $region183: #{tpu_custom_call.1} parent=71 // pred_region
          %s3462 = smul.u32 63, %s15
          %s3463 = ssub.s32 125, %s3462
          %p3464 = scmp.lt.s32.totalorder %s3463, 63
          %s3465 = scalar_select %p3464, %s3463, 63
          %s3466 = smul.u32 256, %s3465
          %p3467 = scmp.ne.s32.totalorder 0, %s3466
          %s3468 = smul.addr %s3462, 8
          %s3469 = scalar_lea.vmem %s3, %s3468
          // Predicated region
          $region185: #{tpu_custom_call.1} parent=183 // pred_check
            %p3470 = pneg %p3467
          $region186: #{tpu_custom_call.1} parent=183 // pred_check_branch
            %3472 = sbr.rel (%p3470) target = $region188
          $region187: #{tpu_custom_call.1} parent=183 // pred_region
            // Predicated region
            $region189: #{tpu_custom_call.1} parent=187 // pred_check
              _
            $region190: #{tpu_custom_call.1} parent=187 // pred_check_branch
              %3474 = sbr.rel (0) target = $region192
            $region191: #{tpu_custom_call.1} parent=187 // pred_region
              // Predicated region
              $region211: #{tpu_custom_call.1} parent=191 // pred_check
                _
              $region212: #{tpu_custom_call.1} parent=191 // pred_check_branch
                %3652 = sbr.rel (0) target = $region214
              $region213: #{tpu_custom_call.1} parent=191 // pred_region
                %s3653 = sshrl.u32 %s3465, 5
                // While loop
                $region215: #{tpu_custom_call.1} parent=213 // loop_pre_header
                  _
                $region216: #{tpu_custom_call.1} parent=213 // loop_header
                  %s3655 = sphi 0, %s3657
                  %p3656 = scmp.ge.s32.totalorder %s3655, %s3653
                  %s3660 = sphi 0, %s3793
                  %s3661 = sphi %s2720, %s3796
                  %s3662 = sphi %s3469, %s3797
                $region217: #{tpu_custom_call.1} parent=213 // loop_header_branch
                  %3659 = sbr.rel (%p3656) target = $region221
                $region218: #{tpu_custom_call.1} parent=213 // loop_body
                  %v3663 = vld [vmem:[%s3661] sm:$0xff]
                  %3664 = vst [vmem:[%s3662] sm:$0xff] %v3663
                  %v3665 = vld [vmem:[%s3661 + $0x8] sm:$0xff]
                  %3666 = vst [vmem:[%s3662 + $0x8] sm:$0xff] %v3665
                  %v3667 = vld [vmem:[%s3661 + $0x10] sm:$0xff]
                  %3668 = vst [vmem:[%s3662 + $0x10] sm:$0xff] %v3667
                  %v3669 = vld [vmem:[%s3661 + $0x18] sm:$0xff]
                  %3670 = vst [vmem:[%s3662 + $0x18] sm:$0xff] %v3669
                  %v3671 = vld [vmem:[%s3661 + $0x20] sm:$0xff]
                  %3672 = vst [vmem:[%s3662 + $0x20] sm:$0xff] %v3671
                  %v3673 = vld [vmem:[%s3661 + $0x28] sm:$0xff]
                  %3674 = vst [vmem:[%s3662 + $0x28] sm:$0xff] %v3673
                  %v3675 = vld [vmem:[%s3661 + $0x30] sm:$0xff]
                  %3676 = vst [vmem:[%s3662 + $0x30] sm:$0xff] %v3675
                  %v3677 = vld [vmem:[%s3661 + $0x38] sm:$0xff]
                  %3678 = vst [vmem:[%s3662 + $0x38] sm:$0xff] %v3677
                  %v3679 = vld [vmem:[%s3661 + $0x40] sm:$0xff]
                  %3680 = vst [vmem:[%s3662 + $0x40] sm:$0xff] %v3679
                  %v3681 = vld [vmem:[%s3661 + $0x48] sm:$0xff]
                  %3682 = vst [vmem:[%s3662 + $0x48] sm:$0xff] %v3681
                  %v3683 = vld [vmem:[%s3661 + $0x50] sm:$0xff]
                  %3684 = vst [vmem:[%s3662 + $0x50] sm:$0xff] %v3683
                  %v3685 = vld [vmem:[%s3661 + $0x58] sm:$0xff]
                  %3686 = vst [vmem:[%s3662 + $0x58] sm:$0xff] %v3685
                  %v3687 = vld [vmem:[%s3661 + $0x60] sm:$0xff]
                  %3688 = vst [vmem:[%s3662 + $0x60] sm:$0xff] %v3687
                  %v3689 = vld [vmem:[%s3661 + $0x68] sm:$0xff]
                  %3690 = vst [vmem:[%s3662 + $0x68] sm:$0xff] %v3689
                  %v3691 = vld [vmem:[%s3661 + $0x70] sm:$0xff]
                  %3692 = vst [vmem:[%s3662 + $0x70] sm:$0xff] %v3691
                  %v3693 = vld [vmem:[%s3661 + $0x78] sm:$0xff]
                  %3694 = vst [vmem:[%s3662 + $0x78] sm:$0xff] %v3693
                  %v3695 = vld [vmem:[%s3661 + $0x80] sm:$0xff]
                  %3696 = vst [vmem:[%s3662 + $0x80] sm:$0xff] %v3695
                  %v3697 = vld [vmem:[%s3661 + $0x88] sm:$0xff]
                  %3698 = vst [vmem:[%s3662 + $0x88] sm:$0xff] %v3697
                  %v3699 = vld [vmem:[%s3661 + $0x90] sm:$0xff]
                  %3700 = vst [vmem:[%s3662 + $0x90] sm:$0xff] %v3699
                  %v3701 = vld [vmem:[%s3661 + $0x98] sm:$0xff]
                  %3702 = vst [vmem:[%s3662 + $0x98] sm:$0xff] %v3701
                  %v3703 = vld [vmem:[%s3661 + $0xa0] sm:$0xff]
                  %3704 = vst [vmem:[%s3662 + $0xa0] sm:$0xff] %v3703
                  %v3705 = vld [vmem:[%s3661 + $0xa8] sm:$0xff]
                  %3706 = vst [vmem:[%s3662 + $0xa8] sm:$0xff] %v3705
                  %v3707 = vld [vmem:[%s3661 + $0xb0] sm:$0xff]
                  %3708 = vst [vmem:[%s3662 + $0xb0] sm:$0xff] %v3707
                  %v3709 = vld [vmem:[%s3661 + $0xb8] sm:$0xff]
                  %3710 = vst [vmem:[%s3662 + $0xb8] sm:$0xff] %v3709
                  %v3711 = vld [vmem:[%s3661 + $0xc0] sm:$0xff]
                  %3712 = vst [vmem:[%s3662 + $0xc0] sm:$0xff] %v3711
                  %v3713 = vld [vmem:[%s3661 + $0xc8] sm:$0xff]
                  %3714 = vst [vmem:[%s3662 + $0xc8] sm:$0xff] %v3713
                  %v3715 = vld [vmem:[%s3661 + $0xd0] sm:$0xff]
                  %3716 = vst [vmem:[%s3662 + $0xd0] sm:$0xff] %v3715
                  %v3717 = vld [vmem:[%s3661 + $0xd8] sm:$0xff]
                  %3718 = vst [vmem:[%s3662 + $0xd8] sm:$0xff] %v3717
                  %v3719 = vld [vmem:[%s3661 + $0xe0] sm:$0xff]
                  %3720 = vst [vmem:[%s3662 + $0xe0] sm:$0xff] %v3719
                  %v3721 = vld [vmem:[%s3661 + $0xe8] sm:$0xff]
                  %3722 = vst [vmem:[%s3662 + $0xe8] sm:$0xff] %v3721
                  %v3723 = vld [vmem:[%s3661 + $0xf0] sm:$0xff]
                  %3724 = vst [vmem:[%s3662 + $0xf0] sm:$0xff] %v3723
                  %v3725 = vld [vmem:[%s3661 + $0xf8] sm:$0xff]
                  %3726 = vst [vmem:[%s3662 + $0xf8] sm:$0xff] %v3725
                  %v3727 = vld [vmem:[%s3661 + $0x1f8] sm:$0xff]
                  %3728 = vst [vmem:[%s3662 + $0x3e8] sm:$0xff] %v3727
                  %v3729 = vld [vmem:[%s3661 + $0x200] sm:$0xff]
                  %3730 = vst [vmem:[%s3662 + $0x3f0] sm:$0xff] %v3729
                  %v3731 = vld [vmem:[%s3661 + $0x208] sm:$0xff]
                  %3732 = vst [vmem:[%s3662 + $0x3f8] sm:$0xff] %v3731
                  %v3733 = vld [vmem:[%s3661 + $0x210] sm:$0xff]
                  %3734 = vst [vmem:[%s3662 + $0x400] sm:$0xff] %v3733
                  %v3735 = vld [vmem:[%s3661 + $0x218] sm:$0xff]
                  %3736 = vst [vmem:[%s3662 + $0x408] sm:$0xff] %v3735
                  %v3737 = vld [vmem:[%s3661 + $0x220] sm:$0xff]
                  %3738 = vst [vmem:[%s3662 + $0x410] sm:$0xff] %v3737
                  %v3739 = vld [vmem:[%s3661 + $0x228] sm:$0xff]
                  %3740 = vst [vmem:[%s3662 + $0x418] sm:$0xff] %v3739
                  %v3741 = vld [vmem:[%s3661 + $0x230] sm:$0xff]
                  %3742 = vst [vmem:[%s3662 + $0x420] sm:$0xff] %v3741
                  %v3743 = vld [vmem:[%s3661 + $0x238] sm:$0xff]
                  %3744 = vst [vmem:[%s3662 + $0x428] sm:$0xff] %v3743
                  %v3745 = vld [vmem:[%s3661 + $0x240] sm:$0xff]
                  %3746 = vst [vmem:[%s3662 + $0x430] sm:$0xff] %v3745
                  %v3747 = vld [vmem:[%s3661 + $0x248] sm:$0xff]
                  %3748 = vst [vmem:[%s3662 + $0x438] sm:$0xff] %v3747
                  %v3749 = vld [vmem:[%s3661 + $0x250] sm:$0xff]
                  %3750 = vst [vmem:[%s3662 + $0x440] sm:$0xff] %v3749
                  %v3751 = vld [vmem:[%s3661 + $0x258] sm:$0xff]
                  %3752 = vst [vmem:[%s3662 + $0x448] sm:$0xff] %v3751
                  %v3753 = vld [vmem:[%s3661 + $0x260] sm:$0xff]
                  %3754 = vst [vmem:[%s3662 + $0x450] sm:$0xff] %v3753
                  %v3755 = vld [vmem:[%s3661 + $0x268] sm:$0xff]
                  %3756 = vst [vmem:[%s3662 + $0x458] sm:$0xff] %v3755
                  %v3757 = vld [vmem:[%s3661 + $0x270] sm:$0xff]
                  %3758 = vst [vmem:[%s3662 + $0x460] sm:$0xff] %v3757
                  %v3759 = vld [vmem:[%s3661 + $0x278] sm:$0xff]
                  %3760 = vst [vmem:[%s3662 + $0x468] sm:$0xff] %v3759
                  %v3761 = vld [vmem:[%s3661 + $0x280] sm:$0xff]
                  %3762 = vst [vmem:[%s3662 + $0x470] sm:$0xff] %v3761
                  %v3763 = vld [vmem:[%s3661 + $0x288] sm:$0xff]
                  %3764 = vst [vmem:[%s3662 + $0x478] sm:$0xff] %v3763
                  %v3765 = vld [vmem:[%s3661 + $0x290] sm:$0xff]
                  %3766 = vst [vmem:[%s3662 + $0x480] sm:$0xff] %v3765
                  %v3767 = vld [vmem:[%s3661 + $0x298] sm:$0xff]
                  %3768 = vst [vmem:[%s3662 + $0x488] sm:$0xff] %v3767
                  %v3769 = vld [vmem:[%s3661 + $0x2a0] sm:$0xff]
                  %3770 = vst [vmem:[%s3662 + $0x490] sm:$0xff] %v3769
                  %v3771 = vld [vmem:[%s3661 + $0x2a8] sm:$0xff]
                  %3772 = vst [vmem:[%s3662 + $0x498] sm:$0xff] %v3771
                  %v3773 = vld [vmem:[%s3661 + $0x2b0] sm:$0xff]
                  %3774 = vst [vmem:[%s3662 + $0x4a0] sm:$0xff] %v3773
                  %v3775 = vld [vmem:[%s3661 + $0x2b8] sm:$0xff]
                  %3776 = vst [vmem:[%s3662 + $0x4a8] sm:$0xff] %v3775
                  %v3777 = vld [vmem:[%s3661 + $0x2c0] sm:$0xff]
                  %3778 = vst [vmem:[%s3662 + $0x4b0] sm:$0xff] %v3777
                  %v3779 = vld [vmem:[%s3661 + $0x2c8] sm:$0xff]
                  %3780 = vst [vmem:[%s3662 + $0x4b8] sm:$0xff] %v3779
                  %v3781 = vld [vmem:[%s3661 + $0x2d0] sm:$0xff]
                  %3782 = vst [vmem:[%s3662 + $0x4c0] sm:$0xff] %v3781
                  %v3783 = vld [vmem:[%s3661 + $0x2d8] sm:$0xff]
                  %3784 = vst [vmem:[%s3662 + $0x4c8] sm:$0xff] %v3783
                  %v3785 = vld [vmem:[%s3661 + $0x2e0] sm:$0xff]
                  %3786 = vst [vmem:[%s3662 + $0x4d0] sm:$0xff] %v3785
                  %v3787 = vld [vmem:[%s3661 + $0x2e8] sm:$0xff]
                  %3788 = vst [vmem:[%s3662 + $0x4d8] sm:$0xff] %v3787
                  %v3789 = vld [vmem:[%s3661 + $0x2f0] sm:$0xff]
                  %3790 = vst [vmem:[%s3662 + $0x4e0] sm:$0xff] %v3789
                  %s3791 = sadd.s32 1, %s3660
                  %p3792 = scmp.ge.s32.totalorder %s3791, %s3653
                  %s3793 = scalar_select %p3792, 0, %s3791
                  %s3794 = smul.u32 %s3793, 256
                  %s3795 = smul.u32 %s3793, 256
                  %s3796 = scalar_lea.vmem %s2720, %s3794 [#allocation5]
                  %s3797 = scalar_lea.vmem %s3469, %s3795
                $region219: #{tpu_custom_call.1} parent=213 // loop_footer
                  %s3657 = sadd.s32 %s3655, 1
                $region220: #{tpu_custom_call.1} parent=213 // loop_footer_branch
                  %3654 = sbr.rel target = $region216
                $region221: #{tpu_custom_call.1} parent=213 // loop_exit
                  _
                %s3798 = sshrl.u32 %s3465, 5
                %s3799 = sand.u32 %s3465, 31
                %s3800 = smul.u32 %s3798, 32
                %s3801 = smul.u32 8, %s3800
                %s3802 = scalar_lea.vmem %s2720, %s3801 [#allocation5]
                %s3803 = smul.u32 8, %s3800
                %s3804 = scalar_lea.vmem %s3469, %s3803
                // While loop
                $region222: #{tpu_custom_call.1} parent=213 // loop_pre_header
                  _
                $region223: #{tpu_custom_call.1} parent=213 // loop_header
                  %s3806 = sphi 0, %s3808
                  %p3807 = scmp.ge.s32.totalorder %s3806, %s3799
                  %s3811 = sphi 0, %s3820
                  %s3812 = sphi %s3802, %s3823
                  %s3813 = sphi %s3804, %s3824
                $region224: #{tpu_custom_call.1} parent=213 // loop_header_branch
                  %3810 = sbr.rel (%p3807) target = $region228
                $region225: #{tpu_custom_call.1} parent=213 // loop_body
                  %v3814 = vld [vmem:[%s3812] sm:$0xff]
                  %3815 = vst [vmem:[%s3813] sm:$0xff] %v3814
                  %v3816 = vld [vmem:[%s3812 + $0x1f8] sm:$0xff]
                  %3817 = vst [vmem:[%s3813 + $0x3e8] sm:$0xff] %v3816
                  %s3818 = sadd.s32 1, %s3811
                  %p3819 = scmp.ge.s32.totalorder %s3818, %s3799
                  %s3820 = scalar_select %p3819, 0, %s3818
                  %s3821 = smul.u32 %s3820, 8
                  %s3822 = smul.u32 %s3820, 8
                  %s3823 = scalar_lea.vmem %s3802, %s3821 [#allocation5]
                  %s3824 = scalar_lea.vmem %s3804, %s3822
                $region226: #{tpu_custom_call.1} parent=213 // loop_footer
                  %s3808 = sadd.s32 %s3806, 1
                $region227: #{tpu_custom_call.1} parent=213 // loop_footer_branch
                  %3805 = sbr.rel target = $region223
                $region228: #{tpu_custom_call.1} parent=213 // loop_exit
                  _
              $region214: #{tpu_custom_call.1} parent=191 // pred_fallthru
                _
              // Predicated region
              $region229: #{tpu_custom_call.1} parent=191 // pred_check
                _
              $region230: #{tpu_custom_call.1} parent=191 // pred_check_branch
                %3826 = sbr.rel target = $region232
              $region231: #{tpu_custom_call.1} parent=191 // pred_region
                _
              $region232: #{tpu_custom_call.1} parent=191 // pred_fallthru
                _
            $region192: #{tpu_custom_call.1} parent=187 // pred_fallthru
              _
            // Predicated region
            $region193: #{tpu_custom_call.1} parent=187 // pred_check
              _
            $region194: #{tpu_custom_call.1} parent=187 // pred_check_branch
              %3476 = sbr.rel target = $region196
            $region195: #{tpu_custom_call.1} parent=187 // pred_region
              %s3478 = ssub.s32 256, 1
              %s3479 = sshrl.u32 %s3465, 5
              // While loop
              $region197: #{tpu_custom_call.1} parent=195 // loop_pre_header
                _
              $region198: #{tpu_custom_call.1} parent=195 // loop_header
                %s3481 = sphi 0, %s3483
                %p3482 = scmp.ge.s32.totalorder %s3481, %s3479
                %s3486 = sphi 0, %s3619
                %s3487 = sphi %s2720, %s3622
                %s3488 = sphi %s3469, %s3623
              $region199: #{tpu_custom_call.1} parent=195 // loop_header_branch
                %3485 = sbr.rel (%p3482) target = $region203
              $region200: #{tpu_custom_call.1} parent=195 // loop_body
                %v3489 = vld [vmem:[%s3487] sm:%s3478]
                %3490 = vst [vmem:[%s3488] sm:%s3478] %v3489
                %v3491 = vld [vmem:[%s3487 + $0x8] sm:%s3478]
                %3492 = vst [vmem:[%s3488 + $0x8] sm:%s3478] %v3491
                %v3493 = vld [vmem:[%s3487 + $0x10] sm:%s3478]
                %3494 = vst [vmem:[%s3488 + $0x10] sm:%s3478] %v3493
                %v3495 = vld [vmem:[%s3487 + $0x18] sm:%s3478]
                %3496 = vst [vmem:[%s3488 + $0x18] sm:%s3478] %v3495
                %v3497 = vld [vmem:[%s3487 + $0x20] sm:%s3478]
                %3498 = vst [vmem:[%s3488 + $0x20] sm:%s3478] %v3497
                %v3499 = vld [vmem:[%s3487 + $0x28] sm:%s3478]
                %3500 = vst [vmem:[%s3488 + $0x28] sm:%s3478] %v3499
                %v3501 = vld [vmem:[%s3487 + $0x30] sm:%s3478]
                %3502 = vst [vmem:[%s3488 + $0x30] sm:%s3478] %v3501
                %v3503 = vld [vmem:[%s3487 + $0x38] sm:%s3478]
                %3504 = vst [vmem:[%s3488 + $0x38] sm:%s3478] %v3503
                %v3505 = vld [vmem:[%s3487 + $0x40] sm:%s3478]
                %3506 = vst [vmem:[%s3488 + $0x40] sm:%s3478] %v3505
                %v3507 = vld [vmem:[%s3487 + $0x48] sm:%s3478]
                %3508 = vst [vmem:[%s3488 + $0x48] sm:%s3478] %v3507
                %v3509 = vld [vmem:[%s3487 + $0x50] sm:%s3478]
                %3510 = vst [vmem:[%s3488 + $0x50] sm:%s3478] %v3509
                %v3511 = vld [vmem:[%s3487 + $0x58] sm:%s3478]
                %3512 = vst [vmem:[%s3488 + $0x58] sm:%s3478] %v3511
                %v3513 = vld [vmem:[%s3487 + $0x60] sm:%s3478]
                %3514 = vst [vmem:[%s3488 + $0x60] sm:%s3478] %v3513
                %v3515 = vld [vmem:[%s3487 + $0x68] sm:%s3478]
                %3516 = vst [vmem:[%s3488 + $0x68] sm:%s3478] %v3515
                %v3517 = vld [vmem:[%s3487 + $0x70] sm:%s3478]
                %3518 = vst [vmem:[%s3488 + $0x70] sm:%s3478] %v3517
                %v3519 = vld [vmem:[%s3487 + $0x78] sm:%s3478]
                %3520 = vst [vmem:[%s3488 + $0x78] sm:%s3478] %v3519
                %v3521 = vld [vmem:[%s3487 + $0x80] sm:%s3478]
                %3522 = vst [vmem:[%s3488 + $0x80] sm:%s3478] %v3521
                %v3523 = vld [vmem:[%s3487 + $0x88] sm:%s3478]
                %3524 = vst [vmem:[%s3488 + $0x88] sm:%s3478] %v3523
                %v3525 = vld [vmem:[%s3487 + $0x90] sm:%s3478]
                %3526 = vst [vmem:[%s3488 + $0x90] sm:%s3478] %v3525
                %v3527 = vld [vmem:[%s3487 + $0x98] sm:%s3478]
                %3528 = vst [vmem:[%s3488 + $0x98] sm:%s3478] %v3527
                %v3529 = vld [vmem:[%s3487 + $0xa0] sm:%s3478]
                %3530 = vst [vmem:[%s3488 + $0xa0] sm:%s3478] %v3529
                %v3531 = vld [vmem:[%s3487 + $0xa8] sm:%s3478]
                %3532 = vst [vmem:[%s3488 + $0xa8] sm:%s3478] %v3531
                %v3533 = vld [vmem:[%s3487 + $0xb0] sm:%s3478]
                %3534 = vst [vmem:[%s3488 + $0xb0] sm:%s3478] %v3533
                %v3535 = vld [vmem:[%s3487 + $0xb8] sm:%s3478]
                %3536 = vst [vmem:[%s3488 + $0xb8] sm:%s3478] %v3535
                %v3537 = vld [vmem:[%s3487 + $0xc0] sm:%s3478]
                %3538 = vst [vmem:[%s3488 + $0xc0] sm:%s3478] %v3537
                %v3539 = vld [vmem:[%s3487 + $0xc8] sm:%s3478]
                %3540 = vst [vmem:[%s3488 + $0xc8] sm:%s3478] %v3539
                %v3541 = vld [vmem:[%s3487 + $0xd0] sm:%s3478]
                %3542 = vst [vmem:[%s3488 + $0xd0] sm:%s3478] %v3541
                %v3543 = vld [vmem:[%s3487 + $0xd8] sm:%s3478]
                %3544 = vst [vmem:[%s3488 + $0xd8] sm:%s3478] %v3543
                %v3545 = vld [vmem:[%s3487 + $0xe0] sm:%s3478]
                %3546 = vst [vmem:[%s3488 + $0xe0] sm:%s3478] %v3545
                %v3547 = vld [vmem:[%s3487 + $0xe8] sm:%s3478]
                %3548 = vst [vmem:[%s3488 + $0xe8] sm:%s3478] %v3547
                %v3549 = vld [vmem:[%s3487 + $0xf0] sm:%s3478]
                %3550 = vst [vmem:[%s3488 + $0xf0] sm:%s3478] %v3549
                %v3551 = vld [vmem:[%s3487 + $0xf8] sm:%s3478]
                %3552 = vst [vmem:[%s3488 + $0xf8] sm:%s3478] %v3551
                %v3553 = vld [vmem:[%s3487 + $0x1f8] sm:%s3478]
                %3554 = vst [vmem:[%s3488 + $0x3e8] sm:%s3478] %v3553
                %v3555 = vld [vmem:[%s3487 + $0x200] sm:%s3478]
                %3556 = vst [vmem:[%s3488 + $0x3f0] sm:%s3478] %v3555
                %v3557 = vld [vmem:[%s3487 + $0x208] sm:%s3478]
                %3558 = vst [vmem:[%s3488 + $0x3f8] sm:%s3478] %v3557
                %v3559 = vld [vmem:[%s3487 + $0x210] sm:%s3478]
                %3560 = vst [vmem:[%s3488 + $0x400] sm:%s3478] %v3559
                %v3561 = vld [vmem:[%s3487 + $0x218] sm:%s3478]
                %3562 = vst [vmem:[%s3488 + $0x408] sm:%s3478] %v3561
                %v3563 = vld [vmem:[%s3487 + $0x220] sm:%s3478]
                %3564 = vst [vmem:[%s3488 + $0x410] sm:%s3478] %v3563
                %v3565 = vld [vmem:[%s3487 + $0x228] sm:%s3478]
                %3566 = vst [vmem:[%s3488 + $0x418] sm:%s3478] %v3565
                %v3567 = vld [vmem:[%s3487 + $0x230] sm:%s3478]
                %3568 = vst [vmem:[%s3488 + $0x420] sm:%s3478] %v3567
                %v3569 = vld [vmem:[%s3487 + $0x238] sm:%s3478]
                %3570 = vst [vmem:[%s3488 + $0x428] sm:%s3478] %v3569
                %v3571 = vld [vmem:[%s3487 + $0x240] sm:%s3478]
                %3572 = vst [vmem:[%s3488 + $0x430] sm:%s3478] %v3571
                %v3573 = vld [vmem:[%s3487 + $0x248] sm:%s3478]
                %3574 = vst [vmem:[%s3488 + $0x438] sm:%s3478] %v3573
                %v3575 = vld [vmem:[%s3487 + $0x250] sm:%s3478]
                %3576 = vst [vmem:[%s3488 + $0x440] sm:%s3478] %v3575
                %v3577 = vld [vmem:[%s3487 + $0x258] sm:%s3478]
                %3578 = vst [vmem:[%s3488 + $0x448] sm:%s3478] %v3577
                %v3579 = vld [vmem:[%s3487 + $0x260] sm:%s3478]
                %3580 = vst [vmem:[%s3488 + $0x450] sm:%s3478] %v3579
                %v3581 = vld [vmem:[%s3487 + $0x268] sm:%s3478]
                %3582 = vst [vmem:[%s3488 + $0x458] sm:%s3478] %v3581
                %v3583 = vld [vmem:[%s3487 + $0x270] sm:%s3478]
                %3584 = vst [vmem:[%s3488 + $0x460] sm:%s3478] %v3583
                %v3585 = vld [vmem:[%s3487 + $0x278] sm:%s3478]
                %3586 = vst [vmem:[%s3488 + $0x468] sm:%s3478] %v3585
                %v3587 = vld [vmem:[%s3487 + $0x280] sm:%s3478]
                %3588 = vst [vmem:[%s3488 + $0x470] sm:%s3478] %v3587
                %v3589 = vld [vmem:[%s3487 + $0x288] sm:%s3478]
                %3590 = vst [vmem:[%s3488 + $0x478] sm:%s3478] %v3589
                %v3591 = vld [vmem:[%s3487 + $0x290] sm:%s3478]
                %3592 = vst [vmem:[%s3488 + $0x480] sm:%s3478] %v3591
                %v3593 = vld [vmem:[%s3487 + $0x298] sm:%s3478]
                %3594 = vst [vmem:[%s3488 + $0x488] sm:%s3478] %v3593
                %v3595 = vld [vmem:[%s3487 + $0x2a0] sm:%s3478]
                %3596 = vst [vmem:[%s3488 + $0x490] sm:%s3478] %v3595
                %v3597 = vld [vmem:[%s3487 + $0x2a8] sm:%s3478]
                %3598 = vst [vmem:[%s3488 + $0x498] sm:%s3478] %v3597
                %v3599 = vld [vmem:[%s3487 + $0x2b0] sm:%s3478]
                %3600 = vst [vmem:[%s3488 + $0x4a0] sm:%s3478] %v3599
                %v3601 = vld [vmem:[%s3487 + $0x2b8] sm:%s3478]
                %3602 = vst [vmem:[%s3488 + $0x4a8] sm:%s3478] %v3601
                %v3603 = vld [vmem:[%s3487 + $0x2c0] sm:%s3478]
                %3604 = vst [vmem:[%s3488 + $0x4b0] sm:%s3478] %v3603
                %v3605 = vld [vmem:[%s3487 + $0x2c8] sm:%s3478]
                %3606 = vst [vmem:[%s3488 + $0x4b8] sm:%s3478] %v3605
                %v3607 = vld [vmem:[%s3487 + $0x2d0] sm:%s3478]
                %3608 = vst [vmem:[%s3488 + $0x4c0] sm:%s3478] %v3607
                %v3609 = vld [vmem:[%s3487 + $0x2d8] sm:%s3478]
                %3610 = vst [vmem:[%s3488 + $0x4c8] sm:%s3478] %v3609
                %v3611 = vld [vmem:[%s3487 + $0x2e0] sm:%s3478]
                %3612 = vst [vmem:[%s3488 + $0x4d0] sm:%s3478] %v3611
                %v3613 = vld [vmem:[%s3487 + $0x2e8] sm:%s3478]
                %3614 = vst [vmem:[%s3488 + $0x4d8] sm:%s3478] %v3613
                %v3615 = vld [vmem:[%s3487 + $0x2f0] sm:%s3478]
                %3616 = vst [vmem:[%s3488 + $0x4e0] sm:%s3478] %v3615
                %s3617 = sadd.s32 1, %s3486
                %p3618 = scmp.ge.s32.totalorder %s3617, %s3479
                %s3619 = scalar_select %p3618, 0, %s3617
                %s3620 = smul.u32 %s3619, 256
                %s3621 = smul.u32 %s3619, 256
                %s3622 = scalar_lea.vmem %s2720, %s3620 [#allocation5]
                %s3623 = scalar_lea.vmem %s3469, %s3621
              $region201: #{tpu_custom_call.1} parent=195 // loop_footer
                %s3483 = sadd.s32 %s3481, 1
              $region202: #{tpu_custom_call.1} parent=195 // loop_footer_branch
                %3480 = sbr.rel target = $region198
              $region203: #{tpu_custom_call.1} parent=195 // loop_exit
                _
              %s3624 = sshrl.u32 %s3465, 5
              %s3625 = sand.u32 %s3465, 31
              %s3626 = smul.u32 %s3624, 32
              %s3627 = smul.u32 8, %s3626
              %s3628 = scalar_lea.vmem %s2720, %s3627 [#allocation5]
              %s3629 = smul.u32 8, %s3626
              %s3630 = scalar_lea.vmem %s3469, %s3629
              // While loop
              $region204: #{tpu_custom_call.1} parent=195 // loop_pre_header
                _
              $region205: #{tpu_custom_call.1} parent=195 // loop_header
                %s3632 = sphi 0, %s3634
                %p3633 = scmp.ge.s32.totalorder %s3632, %s3625
                %s3637 = sphi 0, %s3646
                %s3638 = sphi %s3628, %s3649
                %s3639 = sphi %s3630, %s3650
              $region206: #{tpu_custom_call.1} parent=195 // loop_header_branch
                %3636 = sbr.rel (%p3633) target = $region210
              $region207: #{tpu_custom_call.1} parent=195 // loop_body
                %v3640 = vld [vmem:[%s3638] sm:%s3478]
                %3641 = vst [vmem:[%s3639] sm:%s3478] %v3640
                %v3642 = vld [vmem:[%s3638 + $0x1f8] sm:%s3478]
                %3643 = vst [vmem:[%s3639 + $0x3e8] sm:%s3478] %v3642
                %s3644 = sadd.s32 1, %s3637
                %p3645 = scmp.ge.s32.totalorder %s3644, %s3625
                %s3646 = scalar_select %p3645, 0, %s3644
                %s3647 = smul.u32 %s3646, 8
                %s3648 = smul.u32 %s3646, 8
                %s3649 = scalar_lea.vmem %s3628, %s3647 [#allocation5]
                %s3650 = scalar_lea.vmem %s3630, %s3648
              $region208: #{tpu_custom_call.1} parent=195 // loop_footer
                %s3634 = sadd.s32 %s3632, 1
              $region209: #{tpu_custom_call.1} parent=195 // loop_footer_branch
                %3631 = sbr.rel target = $region205
              $region210: #{tpu_custom_call.1} parent=195 // loop_exit
                _
            $region196: #{tpu_custom_call.1} parent=187 // pred_fallthru
              _
          $region188: #{tpu_custom_call.1} parent=183 // pred_fallthru
            _
          %3827 = vnop
        $region184: #{tpu_custom_call.1} parent=71 // pred_fallthru
          _
      $region72: #{tpu_custom_call.1} parent=5 // pred_fallthru
        _
      %p3828 = scmp.le.s32.totalorder 2, %s10
      // Predicated region
      $region233: #{tpu_custom_call.1} parent=5 // pred_check
        %p3829 = pneg %p3828
      $region234: #{tpu_custom_call.1} parent=5 // pred_check_branch
        %3831 = sbr.rel (%p3829) target = $region236
      $region235: #{tpu_custom_call.1} parent=5 // pred_region
        %s3832 = ssub.s32 %s10, 2
        // Predicated region
        $region237: #{tpu_custom_call.1} parent=235 // pred_check
          %p3833 = pneg %p65
        $region238: #{tpu_custom_call.1} parent=235 // pred_check_branch
          %3835 = sbr.rel (%p3833) target = $region240
        $region239: #{tpu_custom_call.1} parent=235 // pred_region
          %s3836 = sand.u32 %s50, 1
          %s3837 = sand.u32 %s50, 1
          %s3838 = smul.addr %s3837, 1008
          %s3839 = scalar_lea.vmem [#allocation3], %s3838
        $region240: #{tpu_custom_call.1} parent=235 // pred_fallthru
          _
        // Predicated region
        $region241: #{tpu_custom_call.1} parent=235 // pred_check
          %p3840 = pneg %p91
        $region242: #{tpu_custom_call.1} parent=235 // pred_check_branch
          %3842 = sbr.rel (%p3840) target = $region244
        $region243: #{tpu_custom_call.1} parent=235 // pred_region
          %s3843 = sand.u32 %s76, 1
          %s3844 = sand.u32 %s76, 1
          %s3845 = smul.addr %s3844, 1008
          %s3846 = scalar_lea.vmem [#allocation4], %s3845
        $region244: #{tpu_custom_call.1} parent=235 // pred_fallthru
          _
        // Predicated region
        $region245: #{tpu_custom_call.1} parent=235 // pred_check
          %p3847 = pneg %p117
        $region246: #{tpu_custom_call.1} parent=235 // pred_check_branch
          %3849 = sbr.rel (%p3847) target = $region248
        $region247: #{tpu_custom_call.1} parent=235 // pred_region
          %s3850 = sand.u32 %s102, 1
          %s3851 = sand.u32 %s102, 1
          %s3852 = smul.addr %s3851, 1008
          %s3853 = scalar_lea.vmem [#allocation5], %s3852
        $region248: #{tpu_custom_call.1} parent=235 // pred_fallthru
          _
      $region236: #{tpu_custom_call.1} parent=5 // pred_fallthru
        _
    $region6: #{tpu_custom_call.1} parent=1 // loop_footer
      %s14 = sadd.s32 1, %s10
    $region7: #{tpu_custom_call.1} parent=1 // loop_footer_branch
      %9 = sbr.rel target = $region3
    $region8: #{tpu_custom_call.1} parent=1 // loop_exit
      _

</llo_original>
